<compile_context>
chip_gen: v7x
topology: tpu7x:2x2x1
jax: 0.10.0
libtpu: 0.0.40
codegen_flags: <defaults>
</compile_context>

<pallas_src>
import functools

import jax
import jax.numpy as jnp
import numpy as np
from jax.experimental import pallas as pl
from jax.experimental.pallas import tpu as pltpu


def _triplane_patch_kernel(x_ref, w_ref, b_ref, o_ref):
    """One batch element (= H*W tokens) per grid step.

    x_ref: (1, H+2, W+2, C)   bf16 halo-padded NHWC image
    w_ref: (9, C, 3*E)        bf16 block-diagonal, column-permuted tap weights
    b_ref: (1, 3*E)           f32 column-permuted bias
    o_ref: (1, 3, H*W, E)     output (plane-major, token, embed)
    """
    _, hp, wp, c = x_ref.shape
    h, w = hp - 2, wp - 2
    hw = h * w
    ge = w_ref.shape[-1]
    e = ge // 3

    # 3x3 im2col done in VMEM: 9 shifted views of the padded image, each one
    # an accumulating MXU dot against the fused (C, 3E) tap matrix.
    acc = jnp.zeros((hw, ge), jnp.float32)
    for kh in range(3):
        for kw in range(3):
            xs = x_ref[0, kh:kh + h, kw:kw + w, :].reshape(hw, c)
            acc = acc + jnp.dot(xs, w_ref[kh * 3 + kw],
                                preferred_element_type=jnp.float32)
    acc = acc + b_ref[...]               # (1, 3E) broadcasts over tokens

    # Columns are already permuted to o = plane*E + embed, so each output
    # plane is a contiguous E-wide column slice (lane-aligned when E % 128 == 0).
    for plane in range(3):
        o_ref[0, plane] = acc[:, plane * e:(plane + 1) * e].astype(o_ref.dtype)


def patch_embed_triplane_forward(x_nchw, weight, bias, *, embed_dim,
                                 out_dtype=jnp.float32):
    """Matches PatchEmbedTriplane.forward (norm_layer=None, flatten=True).

    x_nchw: (B, C, H, W) float32, C divisible by 3.
    weight: (3*embed_dim, C//3, 3, 3)  PyTorch OIHW grouped-conv layout.
    bias:   (3*embed_dim,)
    returns: (B, 3*H*W, embed_dim)
    """
    B, C, H, W = x_nchw.shape
    G = 3
    assert C % G == 0, "in_chans must be divisible by groups=3"
    Cg = C // G
    E = embed_dim
    GE = G * E
    HW = H * W

    # ---- static weight/bias prep (cheap, once per trace) -------------------
    # Output column o feeds conv channel c = (o % E) * 3 + (o // E); i.e. the
    # PyTorch reshape(B, E, 3, H, W) de-interleave is folded into the columns.
    o_idx = np.arange(GE)
    plane_of_o = o_idx // E
    embed_of_o = o_idx % E
    c_of_o = embed_of_o * 3 + plane_of_o       # conv output channel per column
    g_of_o = c_of_o // E                       # conv group of that channel

    w_cols = weight[c_of_o]                    # (GE, Cg, 3, 3) in column order
    # Block-diagonal expansion: scatter each column's Cg input channels into
    # the full C-wide channel axis of its group (fuses 3 groups -> one matmul).
    w_full = jnp.zeros((GE, C, 3, 3), weight.dtype)
    cin_idx = g_of_o[:, None] * Cg + np.arange(Cg)[None, :]     # (GE, Cg)
    w_full = w_full.at[o_idx[:, None], cin_idx].set(w_cols)
    # (kh, kw, cin, o) -> (9, C, GE): one (C, 3E) matrix per conv tap.
    w_tap = jnp.transpose(w_full, (2, 3, 1, 0)).reshape(9, C, GE)
    w_tap = w_tap.astype(jnp.bfloat16)
    bias_cols = bias[c_of_o].reshape(1, GE).astype(jnp.float32)

    # ---- input prep: NHWC, halo pad, bf16 (~1.1x copy; no 9x im2col in HBM)
    xp = jnp.pad(jnp.transpose(x_nchw, (0, 2, 3, 1)).astype(jnp.bfloat16),
                 ((0, 0), (1, 1), (1, 1), (0, 0)))

    # VMEM budget (double-buffered streamed blocks + resident weights/acc),
    # clipped so it is valid on v5e/v6e (128 MiB) and v7x (64 MiB).
    out_bytes_per_step = 3 * HW * E * jnp.dtype(out_dtype).itemsize
    in_bytes_per_step = (H + 2) * (W + 2) * C * 2
    resident = 9 * C * GE * 2 + GE * 4 + HW * GE * 4
    need = 2 * (in_bytes_per_step + out_bytes_per_step) + resident
    vmem_limit = int(min(max(2 * need, 32 * 1024 * 1024), 64 * 1024 * 1024))

    cost = pl.CostEstimate(
        flops=2 * B * HW * 9 * C * GE,
        transcendentals=0,
        bytes_accessed=int(xp.size * 2 + w_tap.size * 2 + bias_cols.size * 4
                           + B * 3 * HW * E * jnp.dtype(out_dtype).itemsize),
    )

    out = pl.pallas_call(
        _triplane_patch_kernel,
        out_shape=jax.ShapeDtypeStruct((B, 3, HW, E), out_dtype),
        grid_spec=pltpu.PrefetchScalarGridSpec(
            num_scalar_prefetch=0,
            grid=(B,),   # token-tile axis leads; weights/bias stay resident
            in_specs=[
                pl.BlockSpec((1, H + 2, W + 2, C), lambda b: (b, 0, 0, 0)),
                pl.BlockSpec((9, C, GE), lambda b: (0, 0, 0)),
                pl.BlockSpec((1, GE), lambda b: (0, 0)),
            ],
            out_specs=pl.BlockSpec((1, 3, HW, E), lambda b: (b, 0, 0, 0)),
        ),
        compiler_params=pltpu.CompilerParams(
            dimension_semantics=("parallel",),
            vmem_limit_bytes=vmem_limit,
        ),
        cost_estimate=cost,
    )(xp, w_tap, bias_cols)

    # Column permutation above makes this a free reshape (no transposes):
    #   out[b, j, h*W + w, i] == conv[b, i*3 + j, h, w]
    return out.reshape(B, 3 * HW, E)   # norm = Identity


if __name__ == "__main__":
    key = jax.random.PRNGKey(0)
    B, C, H, W = 2, 6, 16, 16     # in_chans=6 (divisible by groups=3), img_size=16
    E = 32                        # embed_dim

    k1, k2, k3 = jax.random.split(key, 3)
    x = jax.random.normal(k1, (B, C, H, W), dtype=jnp.float32)
    weight = jax.random.normal(k2, (3 * E, C // 3, 3, 3), dtype=jnp.float32) * 0.05
    bias = jax.random.normal(k3, (3 * E,), dtype=jnp.float32) * 0.1

    fwd = jax.jit(functools.partial(patch_embed_triplane_forward, embed_dim=E))
    y = fwd(x, weight, bias)
    jax.block_until_ready(y)

    # Reference: XLA grouped conv on the same bf16-rounded operands, followed
    # by the PyTorch-style reshape/flatten/transpose semantics.
    xb = x.astype(jnp.bfloat16).astype(jnp.float32)
    wb = weight.astype(jnp.bfloat16).astype(jnp.float32)
    ref_conv = jax.lax.conv_general_dilated(
        xb, wb, window_strides=(1, 1), padding=((1, 1), (1, 1)),
        dimension_numbers=("NCHW", "OIHW", "NCHW"), feature_group_count=3)
    ref_conv = ref_conv + bias[None, :, None, None]
    ref = ref_conv.reshape(B, E, 3, H, W).reshape(B, E, 3 * H * W).transpose(0, 2, 1)

    assert y.shape == (B, 3 * H * W, E), y.shape
    np.testing.assert_allclose(np.asarray(y), np.asarray(ref), atol=2e-3, rtol=2e-3)
    print("KERNEL_OK")
</pallas_src>

<mosaic_0001>
module attributes {stable_mosaic.version = 11 : i64} {
  func.func @_triplane_patch_kernel(%arg0: i32, %arg1: memref<1x18x18x6xbf16, #tpu.memory_space<vmem>>, %arg2: memref<9x6x96xbf16, #tpu.memory_space<vmem>>, %arg3: memref<1x96xf32, #tpu.memory_space<vmem>>, %arg4: memref<1x3x256x32xf32, #tpu.memory_space<vmem>>) attributes {dimension_semantics = [#tpu.dimension_semantics<parallel>], iteration_bounds = array<i64: 2>, scalar_prefetch = 0 : i64, scratch_operands = 0 : i64, tpu.core_type = #tpu.core_type<tc>, window_params = [{transform_indices = @transform_0, window_bounds = array<i64: 1, 18, 18, 6>}, {pipeline_mode = #tpu.pipeline_mode<synchronous>, transform_indices = @transform_1, window_bounds = array<i64: 9, 6, 96>}, {pipeline_mode = #tpu.pipeline_mode<synchronous>, transform_indices = @transform_2, window_bounds = array<i64: 1, 96>}, {transform_indices = @transform_3, window_bounds = array<i64: 1, 3, 256, 32>}]} {
    %cst = arith.constant 0.000000e+00 : f32
    %0 = vector.broadcast %cst : f32 to vector<256x96xf32>
    %c0 = arith.constant 0 : index
    %c0_0 = arith.constant 0 : index
    %c0_1 = arith.constant 0 : index
    %c0_2 = arith.constant 0 : index
    %1 = vector.load %arg1[%c0, %c0_0, %c0_1, %c0_2] : memref<1x18x18x6xbf16, #tpu.memory_space<vmem>>, vector<1x16x16x6xbf16>
    %2 = vector.shape_cast %1 : vector<1x16x16x6xbf16> to vector<16x16x6xbf16>
    %3 = vector.shape_cast %2 : vector<16x16x6xbf16> to vector<256x6xbf16>
    %c0_3 = arith.constant 0 : index
    %c0_4 = arith.constant 0 : index
    %c0_5 = arith.constant 0 : index
    %4 = vector.load %arg2[%c0_3, %c0_4, %c0_5] : memref<9x6x96xbf16, #tpu.memory_space<vmem>>, vector<1x6x96xbf16>
    %5 = vector.shape_cast %4 : vector<1x6x96xbf16> to vector<6x96xbf16>
    %cst_6 = arith.constant dense<0.000000e+00> : vector<256x96xf32>
    %6 = tpu.matmul %3, %5, %cst_6 {dimension_numbers = #tpu.dot_dimension_numbers<[1], [0], [0], [1], [0, 0, 1, 1], [], []>} : vector<256x6xbf16>, vector<6x96xbf16>, vector<256x96xf32> -> vector<256x96xf32>
    %7 = arith.addf %0, %6 : vector<256x96xf32>
    %c0_7 = arith.constant 0 : index
    %c0_8 = arith.constant 0 : index
    %c1 = arith.constant 1 : index
    %c0_9 = arith.constant 0 : index
    %8 = vector.load %arg1[%c0_7, %c0_8, %c1, %c0_9] : memref<1x18x18x6xbf16, #tpu.memory_space<vmem>>, vector<1x16x16x6xbf16>
    %9 = vector.shape_cast %8 : vector<1x16x16x6xbf16> to vector<16x16x6xbf16>
    %10 = vector.shape_cast %9 : vector<16x16x6xbf16> to vector<256x6xbf16>
    %c1_10 = arith.constant 1 : index
    %c0_11 = arith.constant 0 : index
    %c0_12 = arith.constant 0 : index
    %11 = vector.load %arg2[%c1_10, %c0_11, %c0_12] : memref<9x6x96xbf16, #tpu.memory_space<vmem>>, vector<1x6x96xbf16>
    %12 = vector.shape_cast %11 : vector<1x6x96xbf16> to vector<6x96xbf16>
    %cst_13 = arith.constant dense<0.000000e+00> : vector<256x96xf32>
    %13 = tpu.matmul %10, %12, %cst_13 {dimension_numbers = #tpu.dot_dimension_numbers<[1], [0], [0], [1], [0, 0, 1, 1], [], []>} : vector<256x6xbf16>, vector<6x96xbf16>, vector<256x96xf32> -> vector<256x96xf32>
    %14 = arith.addf %7, %13 : vector<256x96xf32>
    %c0_14 = arith.constant 0 : index
    %c0_15 = arith.constant 0 : index
    %c2 = arith.constant 2 : index
    %c0_16 = arith.constant 0 : index
    %15 = vector.load %arg1[%c0_14, %c0_15, %c2, %c0_16] : memref<1x18x18x6xbf16, #tpu.memory_space<vmem>>, vector<1x16x16x6xbf16>
    %16 = vector.shape_cast %15 : vector<1x16x16x6xbf16> to vector<16x16x6xbf16>
    %17 = vector.shape_cast %16 : vector<16x16x6xbf16> to vector<256x6xbf16>
    %c2_17 = arith.constant 2 : index
    %c0_18 = arith.constant 0 : index
    %c0_19 = arith.constant 0 : index
    %18 = vector.load %arg2[%c2_17, %c0_18, %c0_19] : memref<9x6x96xbf16, #tpu.memory_space<vmem>>, vector<1x6x96xbf16>
    %19 = vector.shape_cast %18 : vector<1x6x96xbf16> to vector<6x96xbf16>
    %cst_20 = arith.constant dense<0.000000e+00> : vector<256x96xf32>
    %20 = tpu.matmul %17, %19, %cst_20 {dimension_numbers = #tpu.dot_dimension_numbers<[1], [0], [0], [1], [0, 0, 1, 1], [], []>} : vector<256x6xbf16>, vector<6x96xbf16>, vector<256x96xf32> -> vector<256x96xf32>
    %21 = arith.addf %14, %20 : vector<256x96xf32>
    %c0_21 = arith.constant 0 : index
    %c1_22 = arith.constant 1 : index
    %c0_23 = arith.constant 0 : index
    %c0_24 = arith.constant 0 : index
    %22 = vector.load %arg1[%c0_21, %c1_22, %c0_23, %c0_24] : memref<1x18x18x6xbf16, #tpu.memory_space<vmem>>, vector<1x16x16x6xbf16>
    %23 = vector.shape_cast %22 : vector<1x16x16x6xbf16> to vector<16x16x6xbf16>
    %24 = vector.shape_cast %23 : vector<16x16x6xbf16> to vector<256x6xbf16>
    %c3 = arith.constant 3 : index
    %c0_25 = arith.constant 0 : index
    %c0_26 = arith.constant 0 : index
    %25 = vector.load %arg2[%c3, %c0_25, %c0_26] : memref<9x6x96xbf16, #tpu.memory_space<vmem>>, vector<1x6x96xbf16>
    %26 = vector.shape_cast %25 : vector<1x6x96xbf16> to vector<6x96xbf16>
    %cst_27 = arith.constant dense<0.000000e+00> : vector<256x96xf32>
    %27 = tpu.matmul %24, %26, %cst_27 {dimension_numbers = #tpu.dot_dimension_numbers<[1], [0], [0], [1], [0, 0, 1, 1], [], []>} : vector<256x6xbf16>, vector<6x96xbf16>, vector<256x96xf32> -> vector<256x96xf32>
    %28 = arith.addf %21, %27 : vector<256x96xf32>
    %c0_28 = arith.constant 0 : index
    %c1_29 = arith.constant 1 : index
    %c1_30 = arith.constant 1 : index
    %c0_31 = arith.constant 0 : index
    %29 = vector.load %arg1[%c0_28, %c1_29, %c1_30, %c0_31] : memref<1x18x18x6xbf16, #tpu.memory_space<vmem>>, vector<1x16x16x6xbf16>
    %30 = vector.shape_cast %29 : vector<1x16x16x6xbf16> to vector<16x16x6xbf16>
    %31 = vector.shape_cast %30 : vector<16x16x6xbf16> to vector<256x6xbf16>
    %c4 = arith.constant 4 : index
    %c0_32 = arith.constant 0 : index
    %c0_33 = arith.constant 0 : index
    %32 = vector.load %arg2[%c4, %c0_32, %c0_33] : memref<9x6x96xbf16, #tpu.memory_space<vmem>>, vector<1x6x96xbf16>
    %33 = vector.shape_cast %32 : vector<1x6x96xbf16> to vector<6x96xbf16>
    %cst_34 = arith.constant dense<0.000000e+00> : vector<256x96xf32>
    %34 = tpu.matmul %31, %33, %cst_34 {dimension_numbers = #tpu.dot_dimension_numbers<[1], [0], [0], [1], [0, 0, 1, 1], [], []>} : vector<256x6xbf16>, vector<6x96xbf16>, vector<256x96xf32> -> vector<256x96xf32>
    %35 = arith.addf %28, %34 : vector<256x96xf32>
    %c0_35 = arith.constant 0 : index
    %c1_36 = arith.constant 1 : index
    %c2_37 = arith.constant 2 : index
    %c0_38 = arith.constant 0 : index
    %36 = vector.load %arg1[%c0_35, %c1_36, %c2_37, %c0_38] : memref<1x18x18x6xbf16, #tpu.memory_space<vmem>>, vector<1x16x16x6xbf16>
    %37 = vector.shape_cast %36 : vector<1x16x16x6xbf16> to vector<16x16x6xbf16>
    %38 = vector.shape_cast %37 : vector<16x16x6xbf16> to vector<256x6xbf16>
    %c5 = arith.constant 5 : index
    %c0_39 = arith.constant 0 : index
    %c0_40 = arith.constant 0 : index
    %39 = vector.load %arg2[%c5, %c0_39, %c0_40] : memref<9x6x96xbf16, #tpu.memory_space<vmem>>, vector<1x6x96xbf16>
    %40 = vector.shape_cast %39 : vector<1x6x96xbf16> to vector<6x96xbf16>
    %cst_41 = arith.constant dense<0.000000e+00> : vector<256x96xf32>
    %41 = tpu.matmul %38, %40, %cst_41 {dimension_numbers = #tpu.dot_dimension_numbers<[1], [0], [0], [1], [0, 0, 1, 1], [], []>} : vector<256x6xbf16>, vector<6x96xbf16>, vector<256x96xf32> -> vector<256x96xf32>
    %42 = arith.addf %35, %41 : vector<256x96xf32>
    %c0_42 = arith.constant 0 : index
    %c2_43 = arith.constant 2 : index
    %c0_44 = arith.constant 0 : index
    %c0_45 = arith.constant 0 : index
    %43 = vector.load %arg1[%c0_42, %c2_43, %c0_44, %c0_45] : memref<1x18x18x6xbf16, #tpu.memory_space<vmem>>, vector<1x16x16x6xbf16>
    %44 = vector.shape_cast %43 : vector<1x16x16x6xbf16> to vector<16x16x6xbf16>
    %45 = vector.shape_cast %44 : vector<16x16x6xbf16> to vector<256x6xbf16>
    %c6 = arith.constant 6 : index
    %c0_46 = arith.constant 0 : index
    %c0_47 = arith.constant 0 : index
    %46 = vector.load %arg2[%c6, %c0_46, %c0_47] : memref<9x6x96xbf16, #tpu.memory_space<vmem>>, vector<1x6x96xbf16>
    %47 = vector.shape_cast %46 : vector<1x6x96xbf16> to vector<6x96xbf16>
    %cst_48 = arith.constant dense<0.000000e+00> : vector<256x96xf32>
    %48 = tpu.matmul %45, %47, %cst_48 {dimension_numbers = #tpu.dot_dimension_numbers<[1], [0], [0], [1], [0, 0, 1, 1], [], []>} : vector<256x6xbf16>, vector<6x96xbf16>, vector<256x96xf32> -> vector<256x96xf32>
    %49 = arith.addf %42, %48 : vector<256x96xf32>
    %c0_49 = arith.constant 0 : index
    %c2_50 = arith.constant 2 : index
    %c1_51 = arith.constant 1 : index
    %c0_52 = arith.constant 0 : index
    %50 = vector.load %arg1[%c0_49, %c2_50, %c1_51, %c0_52] : memref<1x18x18x6xbf16, #tpu.memory_space<vmem>>, vector<1x16x16x6xbf16>
    %51 = vector.shape_cast %50 : vector<1x16x16x6xbf16> to vector<16x16x6xbf16>
    %52 = vector.shape_cast %51 : vector<16x16x6xbf16> to vector<256x6xbf16>
    %c7 = arith.constant 7 : index
    %c0_53 = arith.constant 0 : index
    %c0_54 = arith.constant 0 : index
    %53 = vector.load %arg2[%c7, %c0_53, %c0_54] : memref<9x6x96xbf16, #tpu.memory_space<vmem>>, vector<1x6x96xbf16>
    %54 = vector.shape_cast %53 : vector<1x6x96xbf16> to vector<6x96xbf16>
    %cst_55 = arith.constant dense<0.000000e+00> : vector<256x96xf32>
    %55 = tpu.matmul %52, %54, %cst_55 {dimension_numbers = #tpu.dot_dimension_numbers<[1], [0], [0], [1], [0, 0, 1, 1], [], []>} : vector<256x6xbf16>, vector<6x96xbf16>, vector<256x96xf32> -> vector<256x96xf32>
    %56 = arith.addf %49, %55 : vector<256x96xf32>
    %c0_56 = arith.constant 0 : index
    %c2_57 = arith.constant 2 : index
    %c2_58 = arith.constant 2 : index
    %c0_59 = arith.constant 0 : index
    %57 = vector.load %arg1[%c0_56, %c2_57, %c2_58, %c0_59] : memref<1x18x18x6xbf16, #tpu.memory_space<vmem>>, vector<1x16x16x6xbf16>
    %58 = vector.shape_cast %57 : vector<1x16x16x6xbf16> to vector<16x16x6xbf16>
    %59 = vector.shape_cast %58 : vector<16x16x6xbf16> to vector<256x6xbf16>
    %c8 = arith.constant 8 : index
    %c0_60 = arith.constant 0 : index
    %c0_61 = arith.constant 0 : index
    %60 = vector.load %arg2[%c8, %c0_60, %c0_61] : memref<9x6x96xbf16, #tpu.memory_space<vmem>>, vector<1x6x96xbf16>
    %61 = vector.shape_cast %60 : vector<1x6x96xbf16> to vector<6x96xbf16>
    %cst_62 = arith.constant dense<0.000000e+00> : vector<256x96xf32>
    %62 = tpu.matmul %59, %61, %cst_62 {dimension_numbers = #tpu.dot_dimension_numbers<[1], [0], [0], [1], [0, 0, 1, 1], [], []>} : vector<256x6xbf16>, vector<6x96xbf16>, vector<256x96xf32> -> vector<256x96xf32>
    %63 = arith.addf %56, %62 : vector<256x96xf32>
    %c0_63 = arith.constant 0 : index
    %c0_64 = arith.constant 0 : index
    %64 = vector.load %arg3[%c0_63, %c0_64] : memref<1x96xf32, #tpu.memory_space<vmem>>, vector<1x96xf32>
    %65 = vector.broadcast %64 : vector<1x96xf32> to vector<256x96xf32>
    %66 = arith.addf %63, %65 : vector<256x96xf32>
    %67 = vector.extract_strided_slice %66 {offsets = [0, 0], sizes = [256, 32], strides = [1, 1]} : vector<256x96xf32> to vector<256x32xf32>
    %c0_65 = arith.constant 0 : index
    %c0_66 = arith.constant 0 : index
    %c0_67 = arith.constant 0 : index
    %c0_68 = arith.constant 0 : index
    %68 = vector.load %arg4[%c0_65, %c0_66, %c0_67, %c0_68] : memref<1x3x256x32xf32, #tpu.memory_space<vmem>>, vector<1x1x256x32xf32>
    %69 = vector.shape_cast %68 : vector<1x1x256x32xf32> to vector<256x32xf32>
    %70 = vector.shape_cast %67 : vector<256x32xf32> to vector<1x1x256x32xf32>
    tpu.vector_store %arg4[%c0_65, %c0_66, %c0_67, %c0_68], %70 {strides = array<i32>} : memref<1x3x256x32xf32, #tpu.memory_space<vmem>>, vector<1x1x256x32xf32>,
    %71 = vector.extract_strided_slice %66 {offsets = [0, 32], sizes = [256, 32], strides = [1, 1]} : vector<256x96xf32> to vector<256x32xf32>
    %c0_69 = arith.constant 0 : index
    %c1_70 = arith.constant 1 : index
    %c0_71 = arith.constant 0 : index
    %c0_72 = arith.constant 0 : index
    %72 = vector.load %arg4[%c0_69, %c1_70, %c0_71, %c0_72] : memref<1x3x256x32xf32, #tpu.memory_space<vmem>>, vector<1x1x256x32xf32>
    %73 = vector.shape_cast %72 : vector<1x1x256x32xf32> to vector<256x32xf32>
    %74 = vector.shape_cast %71 : vector<256x32xf32> to vector<1x1x256x32xf32>
    tpu.vector_store %arg4[%c0_69, %c1_70, %c0_71, %c0_72], %74 {strides = array<i32>} : memref<1x3x256x32xf32, #tpu.memory_space<vmem>>, vector<1x1x256x32xf32>,
    %75 = vector.extract_strided_slice %66 {offsets = [0, 64], sizes = [256, 32], strides = [1, 1]} : vector<256x96xf32> to vector<256x32xf32>
    %c0_73 = arith.constant 0 : index
    %c2_74 = arith.constant 2 : index
    %c0_75 = arith.constant 0 : index
    %c0_76 = arith.constant 0 : index
    %76 = vector.load %arg4[%c0_73, %c2_74, %c0_75, %c0_76] : memref<1x3x256x32xf32, #tpu.memory_space<vmem>>, vector<1x1x256x32xf32>
    %77 = vector.shape_cast %76 : vector<1x1x256x32xf32> to vector<256x32xf32>
    %78 = vector.shape_cast %75 : vector<256x32xf32> to vector<1x1x256x32xf32>
    tpu.vector_store %arg4[%c0_73, %c2_74, %c0_75, %c0_76], %78 {strides = array<i32>} : memref<1x3x256x32xf32, #tpu.memory_space<vmem>>, vector<1x1x256x32xf32>,
    return
  }
  func.func @transform_0(%arg0: i32) -> (i32, i32, i32, i32) {
    %c0_i32 = arith.constant 0 : i32
    %c0_i32_0 = arith.constant 0 : i32
    %c0_i32_1 = arith.constant 0 : i32
    %c0_i32_2 = arith.constant 0 : i32
    return %arg0, %c0_i32, %c0_i32_0, %c0_i32_1 : i32, i32, i32, i32
  }
  func.func @transform_1(%arg0: i32) -> (i32, i32, i32) {
    %c0_i32 = arith.constant 0 : i32
    %c0_i32_0 = arith.constant 0 : i32
    %c0_i32_1 = arith.constant 0 : i32
    %c0_i32_2 = arith.constant 0 : i32
    return %c0_i32, %c0_i32_0, %c0_i32_1 : i32, i32, i32
  }
  func.func @transform_2(%arg0: i32) -> (i32, i32) {
    %c0_i32 = arith.constant 0 : i32
    %c0_i32_0 = arith.constant 0 : i32
    %c0_i32_1 = arith.constant 0 : i32
    return %c0_i32, %c0_i32_0 : i32, i32
  }
  func.func @transform_3(%arg0: i32) -> (i32, i32, i32, i32) {
    %c0_i32 = arith.constant 0 : i32
    %c0_i32_0 = arith.constant 0 : i32
    %c0_i32_1 = arith.constant 0 : i32
    %c0_i32_2 = arith.constant 0 : i32
    return %arg0, %c0_i32, %c0_i32_0, %c0_i32_1 : i32, i32, i32, i32
  }
}

</mosaic_0001>

<llo_original>
// kernel: patch_embed_triplane_forward.1
$region0: #{patch_embed_triplane_forward.1}
  #allocation0 [shape = 'u32[]', space=smem, size = 0x4, offset = 0x4, fixed_abs, tag = 'smem constant byte address 0x4 - core index']
  #allocation1 [shape = 'u32[144,128]{1,0:T(1,128)}', space=vmem, size = 0x12000, scoped, tag = 'internal scratch']
  %s0 = inlined_call_operand.vmem [shape: bf16[2,18,18,6], index: 0, kind: input, shape index: {}]
  %s1 = inlined_call_operand.vmem [shape: bf16[9,6,96], index: 1, kind: input, shape index: {}]
  %s2 = inlined_call_operand.vmem [shape: f32[1,96], index: 2, kind: input, shape index: {}]
  %s3 = inlined_call_operand.vmem [shape: f32[2,3,256,32], index: 3, kind: output, shape index: {}]
  %s4 = sld [smem:[#allocation0]]
  $region45: #{patch_embed_triplane_forward.1} parent=0
    _
  %s6 = ssub.s32 1, %s4
  %s7 = scalar_select 0, %s6, %s4
  loop: start=0, step=1, limit=4
  $region2: #{patch_embed_triplane_forward.1} parent=0 // loop_pre_header
    _
  $region3: #{patch_embed_triplane_forward.1} parent=0 // loop_header
    %s9 = sphi 0, %s13
    %p10 = scmp.ge.s32.totalorder %s9, 4
    %s19 = sphi 0, %s21
    %s22 = sphi 0, %s19
    %s23 = sphi 0, %s22
    %s39 = sphi 0, %s23
    %s43 = sphi 0, %s43
    %s45 = sphi 0, %s43
    %s46 = sphi 0, %s45
    %s60 = sphi 0, %s46
    %s64 = sphi 0, %s64
    %s66 = sphi 0, %s64
    %s67 = sphi 0, %s66
    %s81 = sphi 0, %s67
    %s87 = sphi 0, %s89
    %s90 = sphi 0, %s87
    %s91 = sphi 0, %s90
    %s107 = sphi 0, %s91
  $region4: #{patch_embed_triplane_forward.1} parent=0 // loop_header_branch
    %12 = sbr.rel (%p10) target = $region8
  $region5: #{patch_embed_triplane_forward.1} parent=0 // loop_body
    %s14 = ssub.s32 %s9, 1
    %s15 = ssub.s32 %s9, 2
    %s16 = sadd.s32 %s9, 1
    %s17 = ssub.s32 %s9, %s16
    %p18 = scmp.eq.s32.totalorder %s17, 0
    %s20 = sadd.s32 %s19, 1
    %s21 = scalar_select %p18, %s19, %s20
    %p24 = pneg %p18
    %p25 = scmp.eq.s32.totalorder %s9, 1
    %p26 = por %p24, %p25
    %p27 = scmp.ne.s32.totalorder %s19, %s22
    %p28 = scmp.eq.s32.totalorder %s9, 0
    %p29 = por %p27, %p28
    %p30 = scmp.ne.s32.totalorder %s19, %s22
    %p31 = scmp.eq.s32.totalorder %s14, 1
    %p32 = por %p30, %p31
    %p33 = scmp.ne.s32.totalorder %s22, %s23
    %p34 = scmp.eq.s32.totalorder %s14, 0
    %p35 = por %p33, %p34
    %p36 = scmp.ne.s32.totalorder %s22, %s23
    %p37 = scmp.eq.s32.totalorder %s15, 1
    %p38 = por %p36, %p37
    %p40 = scmp.ne.s32.totalorder %s23, %s39
    %p41 = scmp.eq.s32.totalorder %s15, 0
    %p42 = por %p40, %p41
    %s44 = sadd.s32 %s43, 1
    %p47 = scmp.eq.s32.totalorder %s9, 1
    %p48 = scmp.ne.s32.totalorder %s43, %s45
    %p49 = scmp.eq.s32.totalorder %s9, 0
    %p50 = por %p48, %p49
    %p51 = scmp.ne.s32.totalorder %s43, %s45
    %p52 = scmp.eq.s32.totalorder %s14, 1
    %p53 = por %p51, %p52
    %p54 = scmp.ne.s32.totalorder %s45, %s46
    %p55 = scmp.eq.s32.totalorder %s14, 0
    %p56 = por %p54, %p55
    %p57 = scmp.ne.s32.totalorder %s45, %s46
    %p58 = scmp.eq.s32.totalorder %s15, 1
    %p59 = por %p57, %p58
    %p61 = scmp.ne.s32.totalorder %s46, %s60
    %p62 = scmp.eq.s32.totalorder %s15, 0
    %p63 = por %p61, %p62
    %s65 = sadd.s32 %s64, 1
    %p68 = scmp.eq.s32.totalorder %s9, 1
    %p69 = scmp.ne.s32.totalorder %s64, %s66
    %p70 = scmp.eq.s32.totalorder %s9, 0
    %p71 = por %p69, %p70
    %p72 = scmp.ne.s32.totalorder %s64, %s66
    %p73 = scmp.eq.s32.totalorder %s14, 1
    %p74 = por %p72, %p73
    %p75 = scmp.ne.s32.totalorder %s66, %s67
    %p76 = scmp.eq.s32.totalorder %s14, 0
    %p77 = por %p75, %p76
    %p78 = scmp.ne.s32.totalorder %s66, %s67
    %p79 = scmp.eq.s32.totalorder %s15, 1
    %p80 = por %p78, %p79
    %p82 = scmp.ne.s32.totalorder %s67, %s81
    %p83 = scmp.eq.s32.totalorder %s15, 0
    %p84 = por %p82, %p83
    %s85 = ssub.s32 %s9, %s16
    %p86 = scmp.eq.s32.totalorder %s85, 0
    %s88 = sadd.s32 %s87, 1
    %s89 = scalar_select %p86, %s87, %s88
    %p92 = pneg %p86
    %p93 = scmp.eq.s32.totalorder %s9, 1
    %p94 = por %p92, %p93
    %p95 = scmp.ne.s32.totalorder %s87, %s90
    %p96 = scmp.eq.s32.totalorder %s9, 0
    %p97 = por %p95, %p96
    %p98 = scmp.ne.s32.totalorder %s87, %s90
    %p99 = scmp.eq.s32.totalorder %s14, 1
    %p100 = por %p98, %p99
    %p101 = scmp.ne.s32.totalorder %s90, %s91
    %p102 = scmp.eq.s32.totalorder %s14, 0
    %p103 = por %p101, %p102
    %p104 = scmp.ne.s32.totalorder %s90, %s91
    %p105 = scmp.eq.s32.totalorder %s15, 1
    %p106 = por %p104, %p105
    %p108 = scmp.ne.s32.totalorder %s91, %s107
    %p109 = scmp.eq.s32.totalorder %s15, 0
    %p110 = por %p108, %p109
    %p111 = scmp.le.s32.totalorder 1, %s9
    %p112 = scmp.lt.s32.totalorder %s9, 3
    %p113 = pnand %p111, %p112
    %p114 = pneg %p113
    // Predicated region
    $region9: #{patch_embed_triplane_forward.1} parent=5 // pred_check
      _
    $region10: #{patch_embed_triplane_forward.1} parent=5 // pred_check_branch
      %116 = sbr.rel (%p113) target = $region12
    $region11: #{patch_embed_triplane_forward.1} parent=5 // pred_region
      %s117 = ssub.s32 %s9, 1
      // Predicated region
      $region13: #{patch_embed_triplane_forward.1} parent=11 // pred_check
        %p118 = pneg %p56
      $region14: #{patch_embed_triplane_forward.1} parent=11 // pred_check_branch
        %120 = sbr.rel (%p118) target = $region16
      $region15: #{patch_embed_triplane_forward.1} parent=11 // pred_region
        _
      $region16: #{patch_embed_triplane_forward.1} parent=11 // pred_fallthru
        _
      // Predicated region
      $region17: #{patch_embed_triplane_forward.1} parent=11 // pred_check
        %p121 = pneg %p77
      $region18: #{patch_embed_triplane_forward.1} parent=11 // pred_check_branch
        %123 = sbr.rel (%p121) target = $region20
      $region19: #{patch_embed_triplane_forward.1} parent=11 // pred_region
        _
      $region20: #{patch_embed_triplane_forward.1} parent=11 // pred_fallthru
        _
    $region12: #{patch_embed_triplane_forward.1} parent=5 // pred_fallthru
      _
    %p124 = scmp.lt.s32.totalorder %s9, 2
    // Predicated region
    $region21: #{patch_embed_triplane_forward.1} parent=5 // pred_check
      %p125 = pneg %p124
    $region22: #{patch_embed_triplane_forward.1} parent=5 // pred_check_branch
      %127 = sbr.rel (%p125) target = $region24
    $region23: #{patch_embed_triplane_forward.1} parent=5 // pred_region
      // Predicated region
      $region25: #{patch_embed_triplane_forward.1} parent=23 // pred_check
        %p128 = pneg %p29
      $region26: #{patch_embed_triplane_forward.1} parent=23 // pred_check_branch
        %130 = sbr.rel (%p128) target = $region28
      $region27: #{patch_embed_triplane_forward.1} parent=23 // pred_region
        %p131 = scmp.lt.s32.totalorder %s9, 1
        %s132 = scalar_select %p131, %s9, 1
        %s133 = smul.addr %s132, 54
        %s134 = smul.addr %s133, 4
        %s135 = scalar_lea.vmem %s0, %s134
      $region28: #{patch_embed_triplane_forward.1} parent=23 // pred_fallthru
        _
    $region24: #{patch_embed_triplane_forward.1} parent=5 // pred_fallthru
      _
    %p136 = scmp.le.s32.totalorder 1, %s9
    %p137 = scmp.lt.s32.totalorder %s9, 3
    %p138 = pnand %p136, %p137
    %p139 = pneg %p138
    // Predicated region
    $region29: #{patch_embed_triplane_forward.1} parent=5 // pred_check
      _
    $region30: #{patch_embed_triplane_forward.1} parent=5 // pred_check_branch
      %141 = sbr.rel (%p138) target = $region32
    $region31: #{patch_embed_triplane_forward.1} parent=5 // pred_region
      %s142 = ssub.s32 %s9, 1
      %p143 = scmp.lt.s32.totalorder %s14, 1
      %s144 = scalar_select %p143, %s14, 1
      %s145 = smul.addr %s144, 54
      %s146 = smul.addr %s145, 4
      %s147 = scalar_lea.vmem %s0, %s146
      %p148 = pneg %p35
      %p149 = pneg %p32
      %p150 = pneg %p56
      %p151 = pneg %p53
      %p152 = pneg %p77
      %p153 = pneg %p74
      %p154 = pneg %p103
      %p155 = pneg %p100
      %p156 = scmp.lt.s32.totalorder %s14, 1
      %s157 = scalar_select %p156, %s14, 1
      %s158 = smul.addr %s157, 96
      %s159 = smul.addr %s158, 8
      %s160 = scalar_lea.vmem %s3, %s159
      %p161 = scmp.lt.s32.totalorder %s14, 1
      %s162 = scalar_select %p161, %s14, 1
      %s163 = smul.addr %s162, 54
      %s164 = smul.addr %s163, 4
      %s165 = scalar_lea.vmem %s0, %s164
      %p166 = scmp.lt.s32.totalorder %s14, 1
      %s167 = scalar_select %p166, %s14, 1
      %s168 = smul.addr %s167, 96
      %s169 = smul.addr %s168, 8
      %s170 = scalar_lea.vmem %s3, %s169
      %v172 = vld [vmem:[%s165] sm:$0xf]
      %v173 = vld [vmem:[%s165 + $0x4] sm:$0xf]
      %v174 = vld [vmem:[%s165 + $0xc] sm:$0xf]
      %v175 = vld [vmem:[%s165 + $0x10] sm:$0xf]
      %v176 = vld [vmem:[%s165 + $0x18] sm:$0xf]
      %v177 = vld [vmem:[%s165 + $0x1c] sm:$0xf]
      %v178 = vld [vmem:[%s165 + $0x24] sm:$0xf]
      %v179 = vld [vmem:[%s165 + $0x28] sm:$0xf]
      %v180 = vld [vmem:[%s165 + $0x30] sm:$0xf]
      %v181 = vld [vmem:[%s165 + $0x34] sm:$0xf]
      %v182 = vld [vmem:[%s165 + $0x3c] sm:$0xf]
      %v183 = vld [vmem:[%s165 + $0x40] sm:$0xf]
      %v184 = vld [vmem:[%s165 + $0x48] sm:$0xf]
      %v185 = vld [vmem:[%s165 + $0x4c] sm:$0xf]
      %v186 = vld [vmem:[%s165 + $0x54] sm:$0xf]
      %v187 = vld [vmem:[%s165 + $0x58] sm:$0xf]
      %v188 = vld [vmem:[%s165 + $0x60] sm:$0xf]
      %v189 = vld [vmem:[%s165 + $0x64] sm:$0xf]
      %v190 = vld [vmem:[%s165 + $0x6c] sm:$0xf]
      %v191 = vld [vmem:[%s165 + $0x70] sm:$0xf]
      %v192 = vld [vmem:[%s165 + $0x78] sm:$0xf]
      %v193 = vld [vmem:[%s165 + $0x7c] sm:$0xf]
      %v194 = vld [vmem:[%s165 + $0x84] sm:$0xf]
      %v195 = vld [vmem:[%s165 + $0x88] sm:$0xf]
      %v196 = vld [vmem:[%s165 + $0x90] sm:$0xf]
      %v197 = vld [vmem:[%s165 + $0x94] sm:$0xf]
      %v198 = vld [vmem:[%s165 + $0x9c] sm:$0xf]
      %v199 = vld [vmem:[%s165 + $0xa0] sm:$0xf]
      %v200 = vld [vmem:[%s165 + $0xa8] sm:$0xf]
      %v201 = vld [vmem:[%s165 + $0xac] sm:$0xf]
      %v202 = vld [vmem:[%s165 + $0xb4] sm:$0xf]
      %v203 = vld [vmem:[%s165 + $0xb8] sm:$0xf]
      %v204 = vld [vmem:[%s1] sm:$0x7]
      %v205 = vld [vmem:[%s165 + $0x8] sm:$0x1]
      %v206 = vld [vmem:[%s165 + $0x14] sm:$0x1]
      %v207 = vld [vmem:[%s165 + $0x20] sm:$0x1]
      %v208 = vld [vmem:[%s165 + $0x2c] sm:$0x1]
      %v209 = vld [vmem:[%s165 + $0x38] sm:$0x1]
      %v210 = vld [vmem:[%s165 + $0x44] sm:$0x1]
      %v211 = vld [vmem:[%s165 + $0x50] sm:$0x1]
      %v212 = vld [vmem:[%s165 + $0x5c] sm:$0x1]
      %v213 = vld [vmem:[%s165 + $0x68] sm:$0x1]
      %v214 = vld [vmem:[%s165 + $0x74] sm:$0x1]
      %v215 = vld [vmem:[%s165 + $0x80] sm:$0x1]
      %v216 = vld [vmem:[%s165 + $0x8c] sm:$0x1]
      %v217 = vld [vmem:[%s165 + $0x98] sm:$0x1]
      %v218 = vld [vmem:[%s165 + $0xa4] sm:$0x1]
      %v219 = vld [vmem:[%s165 + $0xb0] sm:$0x1]
      %v220 = vld [vmem:[%s165 + $0xbc] sm:$0x1]
      %vm221 = vsmask.f32 3328
      %vm222 = vsmask.f32 7440
      %vm223 = vmor %vm221, %vm222
      %v225 = vshrl.u32 %v172, 16
      %v227 = vrot.slane %v225, 4
      %v228 = vshll.u32 %v172, 16
      %v230 = vrot.slane %v228, 5
      %v231 = vor.u32 %v227, %v230
      %v232 = vrot.slane %v231, 4
      %v234 = vshll.u32 %v173, 16
      %v236 = vrot.slane %v234, 5
      %v237 = vsel %vm223, %v232, %v236
      %v238 = vshrl.u32 %v173, 16
      %v240 = vrot.slane %v238, 4
      %v241 = vor.u32 %v240, %v236
      %v242 = vrot.slane %v241, 4
      %v244 = vshll.u32 %v205, 16
      %v246 = vrot.slane %v244, 5
      %v247 = vsel %vm223, %v242, %v246
      %v249 = vshrl.u32 %v174, 16
      %v251 = vrot.slane %v249, 4
      %v252 = vshll.u32 %v174, 16
      %v254 = vrot.slane %v252, 5
      %v255 = vor.u32 %v251, %v254
      %v256 = vrot.slane %v255, 4
      %v258 = vshll.u32 %v175, 16
      %v260 = vrot.slane %v258, 5
      %v261 = vsel %vm223, %v256, %v260
      %v262 = vshrl.u32 %v175, 16
      %v264 = vrot.slane %v262, 4
      %v265 = vor.u32 %v264, %v260
      %v266 = vrot.slane %v265, 4
      %v268 = vshll.u32 %v206, 16
      %v270 = vrot.slane %v268, 5
      %v271 = vsel %vm223, %v266, %v270
      %v273 = vshrl.u32 %v176, 16
      %v275 = vrot.slane %v273, 4
      %v276 = vshll.u32 %v176, 16
      %v278 = vrot.slane %v276, 5
      %v279 = vor.u32 %v275, %v278
      %v280 = vrot.slane %v279, 4
      %v282 = vshll.u32 %v177, 16
      %v284 = vrot.slane %v282, 5
      %v285 = vsel %vm223, %v280, %v284
      %v286 = vshrl.u32 %v177, 16
      %v288 = vrot.slane %v286, 4
      %v289 = vor.u32 %v288, %v284
      %v290 = vrot.slane %v289, 4
      %v292 = vshll.u32 %v207, 16
      %v294 = vrot.slane %v292, 5
      %v295 = vsel %vm223, %v290, %v294
      %v297 = vshrl.u32 %v178, 16
      %v299 = vrot.slane %v297, 4
      %v300 = vshll.u32 %v178, 16
      %v302 = vrot.slane %v300, 5
      %v303 = vor.u32 %v299, %v302
      %v304 = vrot.slane %v303, 4
      %v306 = vshll.u32 %v179, 16
      %v308 = vrot.slane %v306, 5
      %v309 = vsel %vm223, %v304, %v308
      %v310 = vshrl.u32 %v179, 16
      %v312 = vrot.slane %v310, 4
      %v313 = vor.u32 %v312, %v308
      %v314 = vrot.slane %v313, 4
      %v316 = vshll.u32 %v208, 16
      %v318 = vrot.slane %v316, 5
      %v319 = vsel %vm223, %v314, %v318
      %v321 = vshrl.u32 %v180, 16
      %v323 = vrot.slane %v321, 4
      %v324 = vshll.u32 %v180, 16
      %v326 = vrot.slane %v324, 5
      %v327 = vor.u32 %v323, %v326
      %v328 = vrot.slane %v327, 4
      %v330 = vshll.u32 %v181, 16
      %v332 = vrot.slane %v330, 5
      %v333 = vsel %vm223, %v328, %v332
      %v334 = vshrl.u32 %v181, 16
      %v336 = vrot.slane %v334, 4
      %v337 = vor.u32 %v336, %v332
      %v338 = vrot.slane %v337, 4
      %v340 = vshll.u32 %v209, 16
      %v342 = vrot.slane %v340, 5
      %v343 = vsel %vm223, %v338, %v342
      %v345 = vshrl.u32 %v182, 16
      %v347 = vrot.slane %v345, 4
      %v348 = vshll.u32 %v182, 16
      %v350 = vrot.slane %v348, 5
      %v351 = vor.u32 %v347, %v350
      %v352 = vrot.slane %v351, 4
      %v354 = vshll.u32 %v183, 16
      %v356 = vrot.slane %v354, 5
      %v357 = vsel %vm223, %v352, %v356
      %v358 = vshrl.u32 %v183, 16
      %v360 = vrot.slane %v358, 4
      %v361 = vor.u32 %v360, %v356
      %v362 = vrot.slane %v361, 4
      %v364 = vshll.u32 %v210, 16
      %v366 = vrot.slane %v364, 5
      %v367 = vsel %vm223, %v362, %v366
      %v369 = vshrl.u32 %v184, 16
      %v371 = vrot.slane %v369, 4
      %v372 = vshll.u32 %v184, 16
      %v374 = vrot.slane %v372, 5
      %v375 = vor.u32 %v371, %v374
      %v376 = vrot.slane %v375, 4
      %v378 = vshll.u32 %v185, 16
      %v380 = vrot.slane %v378, 5
      %v381 = vsel %vm223, %v376, %v380
      %v382 = vshrl.u32 %v185, 16
      %v384 = vrot.slane %v382, 4
      %v385 = vor.u32 %v384, %v380
      %v386 = vrot.slane %v385, 4
      %v388 = vshll.u32 %v211, 16
      %v390 = vrot.slane %v388, 5
      %v391 = vsel %vm223, %v386, %v390
      %v393 = vshrl.u32 %v186, 16
      %v395 = vrot.slane %v393, 4
      %v396 = vshll.u32 %v186, 16
      %v398 = vrot.slane %v396, 5
      %v399 = vor.u32 %v395, %v398
      %v400 = vrot.slane %v399, 4
      %v402 = vshll.u32 %v187, 16
      %v404 = vrot.slane %v402, 5
      %v405 = vsel %vm223, %v400, %v404
      %v406 = vshrl.u32 %v187, 16
      %v408 = vrot.slane %v406, 4
      %v409 = vor.u32 %v408, %v404
      %v410 = vrot.slane %v409, 4
      %v412 = vshll.u32 %v212, 16
      %v414 = vrot.slane %v412, 5
      %v415 = vsel %vm223, %v410, %v414
      %v417 = vshrl.u32 %v188, 16
      %v419 = vrot.slane %v417, 4
      %v420 = vshll.u32 %v188, 16
      %v422 = vrot.slane %v420, 5
      %v423 = vor.u32 %v419, %v422
      %v424 = vrot.slane %v423, 4
      %v426 = vshll.u32 %v189, 16
      %v428 = vrot.slane %v426, 5
      %v429 = vsel %vm223, %v424, %v428
      %v430 = vshrl.u32 %v189, 16
      %v432 = vrot.slane %v430, 4
      %v433 = vor.u32 %v432, %v428
      %v434 = vrot.slane %v433, 4
      %v436 = vshll.u32 %v213, 16
      %v438 = vrot.slane %v436, 5
      %v439 = vsel %vm223, %v434, %v438
      %v441 = vshrl.u32 %v190, 16
      %v443 = vrot.slane %v441, 4
      %v444 = vshll.u32 %v190, 16
      %v446 = vrot.slane %v444, 5
      %v447 = vor.u32 %v443, %v446
      %v448 = vrot.slane %v447, 4
      %v450 = vshll.u32 %v191, 16
      %v452 = vrot.slane %v450, 5
      %v453 = vsel %vm223, %v448, %v452
      %v454 = vshrl.u32 %v191, 16
      %v456 = vrot.slane %v454, 4
      %v457 = vor.u32 %v456, %v452
      %v458 = vrot.slane %v457, 4
      %v460 = vshll.u32 %v214, 16
      %v462 = vrot.slane %v460, 5
      %v463 = vsel %vm223, %v458, %v462
      %v465 = vshrl.u32 %v192, 16
      %v467 = vrot.slane %v465, 4
      %v468 = vshll.u32 %v192, 16
      %v470 = vrot.slane %v468, 5
      %v471 = vor.u32 %v467, %v470
      %v472 = vrot.slane %v471, 4
      %v474 = vshll.u32 %v193, 16
      %v476 = vrot.slane %v474, 5
      %v477 = vsel %vm223, %v472, %v476
      %v478 = vshrl.u32 %v193, 16
      %v480 = vrot.slane %v478, 4
      %v481 = vor.u32 %v480, %v476
      %v482 = vrot.slane %v481, 4
      %v484 = vshll.u32 %v215, 16
      %v486 = vrot.slane %v484, 5
      %v487 = vsel %vm223, %v482, %v486
      %v489 = vshrl.u32 %v194, 16
      %v491 = vrot.slane %v489, 4
      %v492 = vshll.u32 %v194, 16
      %v494 = vrot.slane %v492, 5
      %v495 = vor.u32 %v491, %v494
      %v496 = vrot.slane %v495, 4
      %v498 = vshll.u32 %v195, 16
      %v500 = vrot.slane %v498, 5
      %v501 = vsel %vm223, %v496, %v500
      %v502 = vshrl.u32 %v195, 16
      %v504 = vrot.slane %v502, 4
      %v505 = vor.u32 %v504, %v500
      %v506 = vrot.slane %v505, 4
      %v508 = vshll.u32 %v216, 16
      %v510 = vrot.slane %v508, 5
      %v511 = vsel %vm223, %v506, %v510
      %v513 = vshrl.u32 %v196, 16
      %v515 = vrot.slane %v513, 4
      %v516 = vshll.u32 %v196, 16
      %v518 = vrot.slane %v516, 5
      %v519 = vor.u32 %v515, %v518
      %v520 = vrot.slane %v519, 4
      %v522 = vshll.u32 %v197, 16
      %v524 = vrot.slane %v522, 5
      %v525 = vsel %vm223, %v520, %v524
      %v526 = vshrl.u32 %v197, 16
      %v528 = vrot.slane %v526, 4
      %v529 = vor.u32 %v528, %v524
      %v530 = vrot.slane %v529, 4
      %v532 = vshll.u32 %v217, 16
      %v534 = vrot.slane %v532, 5
      %v535 = vsel %vm223, %v530, %v534
      %v537 = vshrl.u32 %v198, 16
      %v539 = vrot.slane %v537, 4
      %v540 = vshll.u32 %v198, 16
      %v542 = vrot.slane %v540, 5
      %v543 = vor.u32 %v539, %v542
      %v544 = vrot.slane %v543, 4
      %v546 = vshll.u32 %v199, 16
      %v548 = vrot.slane %v546, 5
      %v549 = vsel %vm223, %v544, %v548
      %v550 = vshrl.u32 %v199, 16
      %v552 = vrot.slane %v550, 4
      %v553 = vor.u32 %v552, %v548
      %v554 = vrot.slane %v553, 4
      %v556 = vshll.u32 %v218, 16
      %v558 = vrot.slane %v556, 5
      %v559 = vsel %vm223, %v554, %v558
      %v561 = vshrl.u32 %v200, 16
      %v563 = vrot.slane %v561, 4
      %v564 = vshll.u32 %v200, 16
      %v566 = vrot.slane %v564, 5
      %v567 = vor.u32 %v563, %v566
      %v568 = vrot.slane %v567, 4
      %v570 = vshll.u32 %v201, 16
      %v572 = vrot.slane %v570, 5
      %v573 = vsel %vm223, %v568, %v572
      %v574 = vshrl.u32 %v201, 16
      %v576 = vrot.slane %v574, 4
      %v577 = vor.u32 %v576, %v572
      %v578 = vrot.slane %v577, 4
      %v580 = vshll.u32 %v219, 16
      %v582 = vrot.slane %v580, 5
      %v583 = vsel %vm223, %v578, %v582
      %v585 = vshrl.u32 %v202, 16
      %v587 = vrot.slane %v585, 4
      %v588 = vshll.u32 %v202, 16
      %v590 = vrot.slane %v588, 5
      %v591 = vor.u32 %v587, %v590
      %v592 = vrot.slane %v591, 4
      %v594 = vshll.u32 %v203, 16
      %v596 = vrot.slane %v594, 5
      %v597 = vsel %vm223, %v592, %v596
      %v598 = vshrl.u32 %v203, 16
      %v600 = vrot.slane %v598, 4
      %v601 = vor.u32 %v600, %v596
      %v602 = vrot.slane %v601, 4
      %v604 = vshll.u32 %v220, 16
      %v606 = vrot.slane %v604, 5
      %v607 = vsel %vm223, %v602, %v606
      %s608 = scalar_lea.vmem %s1, 4
      %v609 = vld [vmem:[%s608] sm:$0x7]
      %v610 = vunpack.c.l.b16 %v237
      %v611 = vunpack.c.l.b16 %v247
      %v612 = vunpack.c.l.b16 %v261
      %v613 = vunpack.c.l.b16 %v271
      %v614 = vunpack.c.l.b16 %v285
      %v615 = vunpack.c.l.b16 %v295
      %v616 = vunpack.c.l.b16 %v309
      %v617 = vunpack.c.l.b16 %v319
      %v618 = vunpack.c.l.b16 %v333
      %v619 = vunpack.c.l.b16 %v343
      %v620 = vunpack.c.l.b16 %v357
      %v621 = vunpack.c.l.b16 %v367
      %v622 = vunpack.c.l.b16 %v381
      %v623 = vunpack.c.l.b16 %v391
      %v624 = vunpack.c.l.b16 %v405
      %v625 = vunpack.c.l.b16 %v415
      %v626 = vunpack.c.l.b16 %v429
      %v627 = vunpack.c.l.b16 %v439
      %v628 = vunpack.c.l.b16 %v453
      %v629 = vunpack.c.l.b16 %v463
      %v630 = vunpack.c.l.b16 %v477
      %v631 = vunpack.c.l.b16 %v487
      %v632 = vunpack.c.l.b16 %v501
      %v633 = vunpack.c.l.b16 %v511
      %v634 = vunpack.c.l.b16 %v525
      %v635 = vunpack.c.l.b16 %v535
      %v636 = vunpack.c.l.b16 %v549
      %v637 = vunpack.c.l.b16 %v559
      %v638 = vunpack.c.l.b16 %v573
      %v639 = vunpack.c.l.b16 %v583
      %v640 = vunpack.c.l.b16 %v597
      %v641 = vunpack.c.l.b16 %v607
      %v642 = vpack.c.b16 %v611, %v610
      %v643 = vpack.c.b16 %v613, %v612
      %v644 = vpack.c.b16 %v615, %v614
      %v645 = vpack.c.b16 %v617, %v616
      %v646 = vpack.c.b16 %v619, %v618
      %v647 = vpack.c.b16 %v621, %v620
      %v648 = vpack.c.b16 %v623, %v622
      %v649 = vpack.c.b16 %v625, %v624
      %v650 = vpack.c.b16 %v627, %v626
      %v651 = vpack.c.b16 %v629, %v628
      %v652 = vpack.c.b16 %v631, %v630
      %v653 = vpack.c.b16 %v633, %v632
      %v654 = vpack.c.b16 %v635, %v634
      %v655 = vpack.c.b16 %v637, %v636
      %v656 = vpack.c.b16 %v639, %v638
      %v657 = vpack.c.b16 %v641, %v640
      %vm658 = vcmask 48128
      %v660 = vsel %vm658, %v642, 0
      %v663 = vsel %vm658, %v643, 0
      %v666 = vsel %vm658, %v644, 0
      %v669 = vsel %vm658, %v645, 0
      %v672 = vsel %vm658, %v646, 0
      %v675 = vsel %vm658, %v647, 0
      %v678 = vsel %vm658, %v648, 0
      %v681 = vsel %vm658, %v649, 0
      %v684 = vsel %vm658, %v650, 0
      %v687 = vsel %vm658, %v651, 0
      %v690 = vsel %vm658, %v652, 0
      %v693 = vsel %vm658, %v653, 0
      %v696 = vsel %vm658, %v654, 0
      %v699 = vsel %vm658, %v655, 0
      %v702 = vsel %vm658, %v656, 0
      %v705 = vsel %vm658, %v657, 0
      %vm707 = vcmask 1042432
      %v709 = vsel %vm707, %v609, 0
      %711 = vmatprep.subr.bf16.mxu0 0
      %712 = vmatpush1.bf16.msra.mxu0 %v709
      %713 = vmatprep.subr.bf16.mxu0 0
      %714 = vmatpush1.bf16.msra.mxu0 0
      %715 = vmatprep.subr.bf16.mxu0 0
      %716 = vmatpush1.bf16.msra.mxu0 0
      %717 = vmatprep.subr.bf16.mxu0 0
      %718 = vmatpush1.bf16.msra.mxu0 0
      %719 = vmatprep.subr.bf16.mxu0 0
      %720 = vmatpush1.bf16.msra.mxu0 0
      %721 = vmatprep.subr.bf16.mxu0 0
      %722 = vmatpush1.bf16.msra.mxu0 0
      %723 = vmatprep.subr.bf16.mxu0 0
      %724 = vmatpush1.bf16.msra.mxu0 0
      %725 = vmatprep.subr.bf16.mxu0 0
      %726 = vmatpush1.bf16.msra.mxu0 0
      %727 = vmatprep.subr.bf16.mxu0 0
      %728 = vmatpush1.bf16.msra.mxu0 0
      %729 = vmatprep.subr.bf16.mxu0 0
      %730 = vmatpush1.bf16.msra.mxu0 0
      %731 = vmatprep.subr.bf16.mxu0 0
      %732 = vmatpush1.bf16.msra.mxu0 0
      %733 = vmatprep.subr.bf16.mxu0 0
      %734 = vmatpush1.bf16.msra.mxu0 0
      %735 = vmatprep.subr.bf16.mxu0 0
      %736 = vmatpush1.bf16.msra.mxu0 0
      %737 = vmatprep.subr.bf16.mxu0 0
      %738 = vmatpush1.bf16.msra.mxu0 0
      %739 = vmatprep.subr.bf16.mxu0 0
      %740 = vmatpush1.bf16.msra.mxu0 0
      %741 = vmatprep.subr.bf16.mxu0 0
      %742 = vmatpush1.bf16.msra.mxu0 0
      %743 = vmatprep.mubr.bf16.mxu0 0
      %744 = vmatmul.mubr.bf16.gmra.mrb[0].mxu0 %v660
      %v745 = vpop.f32.mrb[0].mxu0
      %v746 = vadd.f32 0.0, %v745
      %v747 = vpop.f32.mrb[0].mxu0
      %v748 = vpop.f32.mrb[0].mxu0
      %v749 = vadd.f32 0.0, %v748
      %v750 = vpop.f32.mrb[0].mxu0
      %751 = vmatprep.mubr.bf16.mxu0 0
      %752 = vmatmul.mubr.bf16.gmra.mrb[0].mxu0 %v663
      %v753 = vpop.f32.mrb[0].mxu0
      %v754 = vadd.f32 0.0, %v753
      %v755 = vpop.f32.mrb[0].mxu0
      %v756 = vpop.f32.mrb[0].mxu0
      %v757 = vadd.f32 0.0, %v756
      %v758 = vpop.f32.mrb[0].mxu0
      %759 = vmatprep.mubr.bf16.mxu0 0
      %760 = vmatmul.mubr.bf16.gmra.mrb[0].mxu0 %v666
      %v761 = vpop.f32.mrb[0].mxu0
      %v762 = vadd.f32 0.0, %v761
      %v763 = vpop.f32.mrb[0].mxu0
      %v764 = vpop.f32.mrb[0].mxu0
      %v765 = vadd.f32 0.0, %v764
      %v766 = vpop.f32.mrb[0].mxu0
      %767 = vmatprep.mubr.bf16.mxu0 0
      %768 = vmatmul.mubr.bf16.gmra.mrb[0].mxu0 %v669
      %v769 = vpop.f32.mrb[0].mxu0
      %v770 = vadd.f32 0.0, %v769
      %v771 = vpop.f32.mrb[0].mxu0
      %v772 = vpop.f32.mrb[0].mxu0
      %v773 = vadd.f32 0.0, %v772
      %v774 = vpop.f32.mrb[0].mxu0
      %775 = vmatprep.mubr.bf16.mxu0 0
      %776 = vmatmul.mubr.bf16.gmra.mrb[0].mxu0 %v672
      %v777 = vpop.f32.mrb[0].mxu0
      %v778 = vadd.f32 0.0, %v777
      %v779 = vpop.f32.mrb[0].mxu0
      %v780 = vpop.f32.mrb[0].mxu0
      %v781 = vadd.f32 0.0, %v780
      %v782 = vpop.f32.mrb[0].mxu0
      %783 = vmatprep.mubr.bf16.mxu0 0
      %784 = vmatmul.mubr.bf16.gmra.mrb[0].mxu0 %v675
      %v785 = vpop.f32.mrb[0].mxu0
      %v786 = vadd.f32 0.0, %v785
      %v787 = vpop.f32.mrb[0].mxu0
      %v788 = vpop.f32.mrb[0].mxu0
      %v789 = vadd.f32 0.0, %v788
      %v790 = vpop.f32.mrb[0].mxu0
      %791 = vmatprep.mubr.bf16.mxu0 0
      %792 = vmatmul.mubr.bf16.gmra.mrb[0].mxu0 %v678
      %v793 = vpop.f32.mrb[0].mxu0
      %v794 = vadd.f32 0.0, %v793
      %v795 = vpop.f32.mrb[0].mxu0
      %v796 = vpop.f32.mrb[0].mxu0
      %v797 = vadd.f32 0.0, %v796
      %v798 = vpop.f32.mrb[0].mxu0
      %799 = vmatprep.mubr.bf16.mxu0 0
      %800 = vmatmul.mubr.bf16.gmra.mrb[0].mxu0 %v681
      %v801 = vpop.f32.mrb[0].mxu0
      %v802 = vadd.f32 0.0, %v801
      %v803 = vpop.f32.mrb[0].mxu0
      %v804 = vpop.f32.mrb[0].mxu0
      %v805 = vadd.f32 0.0, %v804
      %v806 = vpop.f32.mrb[0].mxu0
      %807 = vmatprep.mubr.bf16.mxu0 0
      %808 = vmatmul.mubr.bf16.gmra.mrb[0].mxu0 %v684
      %v809 = vpop.f32.mrb[0].mxu0
      %v810 = vadd.f32 0.0, %v809
      %v811 = vpop.f32.mrb[0].mxu0
      %v812 = vpop.f32.mrb[0].mxu0
      %v813 = vadd.f32 0.0, %v812
      %v814 = vpop.f32.mrb[0].mxu0
      %815 = vmatprep.mubr.bf16.mxu0 0
      %816 = vmatmul.mubr.bf16.gmra.mrb[0].mxu0 %v687
      %v817 = vpop.f32.mrb[0].mxu0
      %v818 = vadd.f32 0.0, %v817
      %v819 = vpop.f32.mrb[0].mxu0
      %v820 = vpop.f32.mrb[0].mxu0
      %v821 = vadd.f32 0.0, %v820
      %v822 = vpop.f32.mrb[0].mxu0
      %823 = vmatprep.mubr.bf16.mxu0 0
      %824 = vmatmul.mubr.bf16.gmra.mrb[0].mxu0 %v690
      %v825 = vpop.f32.mrb[0].mxu0
      %v826 = vadd.f32 0.0, %v825
      %v827 = vpop.f32.mrb[0].mxu0
      %v828 = vpop.f32.mrb[0].mxu0
      %v829 = vadd.f32 0.0, %v828
      %v830 = vpop.f32.mrb[0].mxu0
      %831 = vmatprep.mubr.bf16.mxu0 0
      %832 = vmatmul.mubr.bf16.gmra.mrb[0].mxu0 %v693
      %v833 = vpop.f32.mrb[0].mxu0
      %v834 = vadd.f32 0.0, %v833
      %v835 = vpop.f32.mrb[0].mxu0
      %v836 = vpop.f32.mrb[0].mxu0
      %v837 = vadd.f32 0.0, %v836
      %v838 = vpop.f32.mrb[0].mxu0
      %839 = vmatprep.mubr.bf16.mxu0 0
      %840 = vmatmul.mubr.bf16.gmra.mrb[0].mxu0 %v696
      %v841 = vpop.f32.mrb[0].mxu0
      %v842 = vadd.f32 0.0, %v841
      %v843 = vpop.f32.mrb[0].mxu0
      %v844 = vpop.f32.mrb[0].mxu0
      %v845 = vadd.f32 0.0, %v844
      %v846 = vpop.f32.mrb[0].mxu0
      %847 = vmatprep.mubr.bf16.mxu0 0
      %848 = vmatmul.mubr.bf16.gmra.mrb[0].mxu0 %v699
      %v849 = vpop.f32.mrb[0].mxu0
      %v850 = vadd.f32 0.0, %v849
      %v851 = vpop.f32.mrb[0].mxu0
      %v852 = vpop.f32.mrb[0].mxu0
      %v853 = vadd.f32 0.0, %v852
      %v854 = vpop.f32.mrb[0].mxu0
      %855 = vmatprep.mubr.bf16.mxu0 0
      %856 = vmatmul.mubr.bf16.gmra.mrb[0].mxu0 %v702
      %v857 = vpop.f32.mrb[0].mxu0
      %v858 = vadd.f32 0.0, %v857
      %v859 = vpop.f32.mrb[0].mxu0
      %v860 = vpop.f32.mrb[0].mxu0
      %v861 = vadd.f32 0.0, %v860
      %v862 = vpop.f32.mrb[0].mxu0
      %863 = vmatprep.mubr.bf16.mxu0 0
      %864 = vmatmul.mubr.bf16.gmra.mrb[0].mxu0 %v705
      %v865 = vpop.f32.mrb[0].mxu0
      %v866 = vadd.f32 0.0, %v865
      %v867 = vpop.f32.mrb[0].mxu0
      %v868 = vpop.f32.mrb[0].mxu0
      %v869 = vadd.f32 0.0, %v868
      %v870 = vpop.f32.mrb[0].mxu0
      %871 = vdwg.mxu0
      %v904 = vunpack.c.l.b16 %v172
      %v905 = vunpack.c.l.b16 %v173
      %v906 = vunpack.c.l.b16 %v174
      %v907 = vunpack.c.l.b16 %v175
      %v908 = vunpack.c.l.b16 %v176
      %v909 = vunpack.c.l.b16 %v177
      %v910 = vunpack.c.l.b16 %v178
      %v911 = vunpack.c.l.b16 %v179
      %v912 = vunpack.c.l.b16 %v180
      %v913 = vunpack.c.l.b16 %v181
      %v914 = vunpack.c.l.b16 %v182
      %v915 = vunpack.c.l.b16 %v183
      %v916 = vunpack.c.l.b16 %v184
      %v917 = vunpack.c.l.b16 %v185
      %v918 = vunpack.c.l.b16 %v186
      %v919 = vunpack.c.l.b16 %v187
      %v920 = vunpack.c.l.b16 %v188
      %v921 = vunpack.c.l.b16 %v189
      %v922 = vunpack.c.l.b16 %v190
      %v923 = vunpack.c.l.b16 %v191
      %v924 = vunpack.c.l.b16 %v192
      %v925 = vunpack.c.l.b16 %v193
      %v926 = vunpack.c.l.b16 %v194
      %v927 = vunpack.c.l.b16 %v195
      %v928 = vunpack.c.l.b16 %v196
      %v929 = vunpack.c.l.b16 %v197
      %v930 = vunpack.c.l.b16 %v198
      %v931 = vunpack.c.l.b16 %v199
      %v932 = vunpack.c.l.b16 %v200
      %v933 = vunpack.c.l.b16 %v201
      %v934 = vunpack.c.l.b16 %v202
      %v935 = vunpack.c.l.b16 %v203
      %v936 = vpack.c.b16 %v905, %v904
      %v937 = vpack.c.b16 %v907, %v906
      %v938 = vpack.c.b16 %v909, %v908
      %v939 = vpack.c.b16 %v911, %v910
      %v940 = vpack.c.b16 %v913, %v912
      %v941 = vpack.c.b16 %v915, %v914
      %v942 = vpack.c.b16 %v917, %v916
      %v943 = vpack.c.b16 %v919, %v918
      %v944 = vpack.c.b16 %v921, %v920
      %v945 = vpack.c.b16 %v923, %v922
      %v946 = vpack.c.b16 %v925, %v924
      %v947 = vpack.c.b16 %v927, %v926
      %v948 = vpack.c.b16 %v929, %v928
      %v949 = vpack.c.b16 %v931, %v930
      %v950 = vpack.c.b16 %v933, %v932
      %v951 = vpack.c.b16 %v935, %v934
      %v953 = vsel %vm658, %v936, 0
      %v956 = vsel %vm658, %v937, 0
      %v959 = vsel %vm658, %v938, 0
      %v962 = vsel %vm658, %v939, 0
      %v965 = vsel %vm658, %v940, 0
      %v968 = vsel %vm658, %v941, 0
      %v971 = vsel %vm658, %v942, 0
      %v974 = vsel %vm658, %v943, 0
      %v977 = vsel %vm658, %v944, 0
      %v980 = vsel %vm658, %v945, 0
      %v983 = vsel %vm658, %v946, 0
      %v986 = vsel %vm658, %v947, 0
      %v989 = vsel %vm658, %v948, 0
      %v992 = vsel %vm658, %v949, 0
      %v995 = vsel %vm658, %v950, 0
      %v998 = vsel %vm658, %v951, 0
      %v1001 = vsel %vm707, %v204, 0
      %1003 = vmatprep.subr.bf16.mxu0 0
      %1004 = vmatpush1.bf16.msra.mxu0 %v1001
      %1005 = vmatprep.subr.bf16.mxu0 0
      %1006 = vmatpush1.bf16.msra.mxu0 0
      %1007 = vmatprep.subr.bf16.mxu0 0
      %1008 = vmatpush1.bf16.msra.mxu0 0
      %1009 = vmatprep.subr.bf16.mxu0 0
      %1010 = vmatpush1.bf16.msra.mxu0 0
      %1011 = vmatprep.subr.bf16.mxu0 0
      %1012 = vmatpush1.bf16.msra.mxu0 0
      %1013 = vmatprep.subr.bf16.mxu0 0
      %1014 = vmatpush1.bf16.msra.mxu0 0
      %1015 = vmatprep.subr.bf16.mxu0 0
      %1016 = vmatpush1.bf16.msra.mxu0 0
      %1017 = vmatprep.subr.bf16.mxu0 0
      %1018 = vmatpush1.bf16.msra.mxu0 0
      %1019 = vmatprep.subr.bf16.mxu0 0
      %1020 = vmatpush1.bf16.msra.mxu0 0
      %1021 = vmatprep.subr.bf16.mxu0 0
      %1022 = vmatpush1.bf16.msra.mxu0 0
      %1023 = vmatprep.subr.bf16.mxu0 0
      %1024 = vmatpush1.bf16.msra.mxu0 0
      %1025 = vmatprep.subr.bf16.mxu0 0
      %1026 = vmatpush1.bf16.msra.mxu0 0
      %1027 = vmatprep.subr.bf16.mxu0 0
      %1028 = vmatpush1.bf16.msra.mxu0 0
      %1029 = vmatprep.subr.bf16.mxu0 0
      %1030 = vmatpush1.bf16.msra.mxu0 0
      %1031 = vmatprep.subr.bf16.mxu0 0
      %1032 = vmatpush1.bf16.msra.mxu0 0
      %1033 = vmatprep.subr.bf16.mxu0 0
      %1034 = vmatpush1.bf16.msra.mxu0 0
      %1035 = vmatprep.mubr.bf16.mxu0 0
      %1036 = vmatmul.mubr.bf16.gmra.mrb[0].mxu0 %v953
      %v1037 = vpop.f32.mrb[0].mxu0
      %v1038 = vadd.f32 %v746, %v1037
      %v1039 = vpop.f32.mrb[0].mxu0
      %v1040 = vpop.f32.mrb[0].mxu0
      %v1041 = vadd.f32 %v749, %v1040
      %v1042 = vpop.f32.mrb[0].mxu0
      %1043 = vmatprep.mubr.bf16.mxu0 0
      %1044 = vmatmul.mubr.bf16.gmra.mrb[0].mxu0 %v956
      %v1045 = vpop.f32.mrb[0].mxu0
      %v1046 = vadd.f32 %v754, %v1045
      %v1047 = vpop.f32.mrb[0].mxu0
      %v1048 = vpop.f32.mrb[0].mxu0
      %v1049 = vadd.f32 %v757, %v1048
      %v1050 = vpop.f32.mrb[0].mxu0
      %1051 = vmatprep.mubr.bf16.mxu0 0
      %1052 = vmatmul.mubr.bf16.gmra.mrb[0].mxu0 %v959
      %v1053 = vpop.f32.mrb[0].mxu0
      %v1054 = vadd.f32 %v762, %v1053
      %v1055 = vpop.f32.mrb[0].mxu0
      %v1056 = vpop.f32.mrb[0].mxu0
      %v1057 = vadd.f32 %v765, %v1056
      %v1058 = vpop.f32.mrb[0].mxu0
      %1059 = vmatprep.mubr.bf16.mxu0 0
      %1060 = vmatmul.mubr.bf16.gmra.mrb[0].mxu0 %v962
      %v1061 = vpop.f32.mrb[0].mxu0
      %v1062 = vadd.f32 %v770, %v1061
      %v1063 = vpop.f32.mrb[0].mxu0
      %v1064 = vpop.f32.mrb[0].mxu0
      %v1065 = vadd.f32 %v773, %v1064
      %v1066 = vpop.f32.mrb[0].mxu0
      %1067 = vmatprep.mubr.bf16.mxu0 0
      %1068 = vmatmul.mubr.bf16.gmra.mrb[0].mxu0 %v965
      %v1069 = vpop.f32.mrb[0].mxu0
      %v1070 = vadd.f32 %v778, %v1069
      %v1071 = vpop.f32.mrb[0].mxu0
      %v1072 = vpop.f32.mrb[0].mxu0
      %v1073 = vadd.f32 %v781, %v1072
      %v1074 = vpop.f32.mrb[0].mxu0
      %1075 = vmatprep.mubr.bf16.mxu0 0
      %1076 = vmatmul.mubr.bf16.gmra.mrb[0].mxu0 %v968
      %v1077 = vpop.f32.mrb[0].mxu0
      %v1078 = vadd.f32 %v786, %v1077
      %v1079 = vpop.f32.mrb[0].mxu0
      %v1080 = vpop.f32.mrb[0].mxu0
      %v1081 = vadd.f32 %v789, %v1080
      %v1082 = vpop.f32.mrb[0].mxu0
      %1083 = vmatprep.mubr.bf16.mxu0 0
      %1084 = vmatmul.mubr.bf16.gmra.mrb[0].mxu0 %v971
      %v1085 = vpop.f32.mrb[0].mxu0
      %v1086 = vadd.f32 %v794, %v1085
      %v1087 = vpop.f32.mrb[0].mxu0
      %v1088 = vpop.f32.mrb[0].mxu0
      %v1089 = vadd.f32 %v797, %v1088
      %v1090 = vpop.f32.mrb[0].mxu0
      %1091 = vmatprep.mubr.bf16.mxu0 0
      %1092 = vmatmul.mubr.bf16.gmra.mrb[0].mxu0 %v974
      %v1093 = vpop.f32.mrb[0].mxu0
      %v1094 = vadd.f32 %v802, %v1093
      %v1095 = vpop.f32.mrb[0].mxu0
      %v1096 = vpop.f32.mrb[0].mxu0
      %v1097 = vadd.f32 %v805, %v1096
      %v1098 = vpop.f32.mrb[0].mxu0
      %1099 = vmatprep.mubr.bf16.mxu0 0
      %1100 = vmatmul.mubr.bf16.gmra.mrb[0].mxu0 %v977
      %v1101 = vpop.f32.mrb[0].mxu0
      %v1102 = vadd.f32 %v810, %v1101
      %v1103 = vpop.f32.mrb[0].mxu0
      %v1104 = vpop.f32.mrb[0].mxu0
      %v1105 = vadd.f32 %v813, %v1104
      %v1106 = vpop.f32.mrb[0].mxu0
      %1107 = vmatprep.mubr.bf16.mxu0 0
      %1108 = vmatmul.mubr.bf16.gmra.mrb[0].mxu0 %v980
      %v1109 = vpop.f32.mrb[0].mxu0
      %v1110 = vadd.f32 %v818, %v1109
      %v1111 = vpop.f32.mrb[0].mxu0
      %v1112 = vpop.f32.mrb[0].mxu0
      %v1113 = vadd.f32 %v821, %v1112
      %v1114 = vpop.f32.mrb[0].mxu0
      %1115 = vmatprep.mubr.bf16.mxu0 0
      %1116 = vmatmul.mubr.bf16.gmra.mrb[0].mxu0 %v983
      %v1117 = vpop.f32.mrb[0].mxu0
      %v1118 = vadd.f32 %v826, %v1117
      %v1119 = vpop.f32.mrb[0].mxu0
      %v1120 = vpop.f32.mrb[0].mxu0
      %v1121 = vadd.f32 %v829, %v1120
      %v1122 = vpop.f32.mrb[0].mxu0
      %1123 = vmatprep.mubr.bf16.mxu0 0
      %1124 = vmatmul.mubr.bf16.gmra.mrb[0].mxu0 %v986
      %v1125 = vpop.f32.mrb[0].mxu0
      %v1126 = vadd.f32 %v834, %v1125
      %v1127 = vpop.f32.mrb[0].mxu0
      %v1128 = vpop.f32.mrb[0].mxu0
      %v1129 = vadd.f32 %v837, %v1128
      %v1130 = vpop.f32.mrb[0].mxu0
      %1131 = vmatprep.mubr.bf16.mxu0 0
      %1132 = vmatmul.mubr.bf16.gmra.mrb[0].mxu0 %v989
      %v1133 = vpop.f32.mrb[0].mxu0
      %v1134 = vadd.f32 %v842, %v1133
      %v1135 = vpop.f32.mrb[0].mxu0
      %v1136 = vpop.f32.mrb[0].mxu0
      %v1137 = vadd.f32 %v845, %v1136
      %v1138 = vpop.f32.mrb[0].mxu0
      %1139 = vmatprep.mubr.bf16.mxu0 0
      %1140 = vmatmul.mubr.bf16.gmra.mrb[0].mxu0 %v992
      %v1141 = vpop.f32.mrb[0].mxu0
      %v1142 = vadd.f32 %v850, %v1141
      %v1143 = vpop.f32.mrb[0].mxu0
      %v1144 = vpop.f32.mrb[0].mxu0
      %v1145 = vadd.f32 %v853, %v1144
      %v1146 = vpop.f32.mrb[0].mxu0
      %1147 = vmatprep.mubr.bf16.mxu0 0
      %1148 = vmatmul.mubr.bf16.gmra.mrb[0].mxu0 %v995
      %v1149 = vpop.f32.mrb[0].mxu0
      %v1150 = vadd.f32 %v858, %v1149
      %v1151 = vpop.f32.mrb[0].mxu0
      %v1152 = vpop.f32.mrb[0].mxu0
      %v1153 = vadd.f32 %v861, %v1152
      %v1154 = vpop.f32.mrb[0].mxu0
      %1155 = vmatprep.mubr.bf16.mxu0 0
      %1156 = vmatmul.mubr.bf16.gmra.mrb[0].mxu0 %v998
      %v1157 = vpop.f32.mrb[0].mxu0
      %v1158 = vadd.f32 %v866, %v1157
      %v1159 = vpop.f32.mrb[0].mxu0
      %v1160 = vpop.f32.mrb[0].mxu0
      %v1161 = vadd.f32 %v869, %v1160
      %v1162 = vpop.f32.mrb[0].mxu0
      %1163 = vdwg.mxu0
      %v1164 = vld [vmem:[%s165] sm:$0xe]
      %v1165 = vld [vmem:[%s165 + $0xc] sm:$0xe]
      %v1166 = vld [vmem:[%s165 + $0x18] sm:$0xe]
      %v1167 = vld [vmem:[%s165 + $0x24] sm:$0xe]
      %v1168 = vld [vmem:[%s165 + $0x30] sm:$0xe]
      %v1169 = vld [vmem:[%s165 + $0x3c] sm:$0xe]
      %v1170 = vld [vmem:[%s165 + $0x48] sm:$0xe]
      %v1171 = vld [vmem:[%s165 + $0x54] sm:$0xe]
      %v1172 = vld [vmem:[%s165 + $0x60] sm:$0xe]
      %v1173 = vld [vmem:[%s165 + $0x6c] sm:$0xe]
      %v1174 = vld [vmem:[%s165 + $0x78] sm:$0xe]
      %v1175 = vld [vmem:[%s165 + $0x84] sm:$0xe]
      %v1176 = vld [vmem:[%s165 + $0x90] sm:$0xe]
      %v1177 = vld [vmem:[%s165 + $0x9c] sm:$0xe]
      %v1178 = vld [vmem:[%s165 + $0xa8] sm:$0xe]
      %v1179 = vld [vmem:[%s165 + $0xb4] sm:$0xe]
      %vm1212 = vcmask 1042432
      %vm1213 = vcmask 1046532
      %vm1214 = vmor %vm1212, %vm1213
      %v1215 = vrot.slane %v1164, 5
      %v1216 = vrot.slane %v1215, 4
      %v1217 = vrot.slane %v173, 5
      %v1218 = vsel %vm1214, %v1216, %v1217
      %v1219 = vrot.slane %v1217, 4
      %v1220 = vrot.slane %v205, 5
      %v1221 = vsel %vm1214, %v1219, %v1220
      %v1222 = vrot.slane %v1165, 5
      %v1223 = vrot.slane %v1222, 4
      %v1224 = vrot.slane %v175, 5
      %v1225 = vsel %vm1214, %v1223, %v1224
      %v1226 = vrot.slane %v1224, 4
      %v1227 = vrot.slane %v206, 5
      %v1228 = vsel %vm1214, %v1226, %v1227
      %v1229 = vrot.slane %v1166, 5
      %v1230 = vrot.slane %v1229, 4
      %v1231 = vrot.slane %v177, 5
      %v1232 = vsel %vm1214, %v1230, %v1231
      %v1233 = vrot.slane %v1231, 4
      %v1234 = vrot.slane %v207, 5
      %v1235 = vsel %vm1214, %v1233, %v1234
      %v1236 = vrot.slane %v1167, 5
      %v1237 = vrot.slane %v1236, 4
      %v1238 = vrot.slane %v179, 5
      %v1239 = vsel %vm1214, %v1237, %v1238
      %v1240 = vrot.slane %v1238, 4
      %v1241 = vrot.slane %v208, 5
      %v1242 = vsel %vm1214, %v1240, %v1241
      %v1243 = vrot.slane %v1168, 5
      %v1244 = vrot.slane %v1243, 4
      %v1245 = vrot.slane %v181, 5
      %v1246 = vsel %vm1214, %v1244, %v1245
      %v1247 = vrot.slane %v1245, 4
      %v1248 = vrot.slane %v209, 5
      %v1249 = vsel %vm1214, %v1247, %v1248
      %v1250 = vrot.slane %v1169, 5
      %v1251 = vrot.slane %v1250, 4
      %v1252 = vrot.slane %v183, 5
      %v1253 = vsel %vm1214, %v1251, %v1252
      %v1254 = vrot.slane %v1252, 4
      %v1255 = vrot.slane %v210, 5
      %v1256 = vsel %vm1214, %v1254, %v1255
      %v1257 = vrot.slane %v1170, 5
      %v1258 = vrot.slane %v1257, 4
      %v1259 = vrot.slane %v185, 5
      %v1260 = vsel %vm1214, %v1258, %v1259
      %v1261 = vrot.slane %v1259, 4
      %v1262 = vrot.slane %v211, 5
      %v1263 = vsel %vm1214, %v1261, %v1262
      %v1264 = vrot.slane %v1171, 5
      %v1265 = vrot.slane %v1264, 4
      %v1266 = vrot.slane %v187, 5
      %v1267 = vsel %vm1214, %v1265, %v1266
      %v1268 = vrot.slane %v1266, 4
      %v1269 = vrot.slane %v212, 5
      %v1270 = vsel %vm1214, %v1268, %v1269
      %v1271 = vrot.slane %v1172, 5
      %v1272 = vrot.slane %v1271, 4
      %v1273 = vrot.slane %v189, 5
      %v1274 = vsel %vm1214, %v1272, %v1273
      %v1275 = vrot.slane %v1273, 4
      %v1276 = vrot.slane %v213, 5
      %v1277 = vsel %vm1214, %v1275, %v1276
      %v1278 = vrot.slane %v1173, 5
      %v1279 = vrot.slane %v1278, 4
      %v1280 = vrot.slane %v191, 5
      %v1281 = vsel %vm1214, %v1279, %v1280
      %v1282 = vrot.slane %v1280, 4
      %v1283 = vrot.slane %v214, 5
      %v1284 = vsel %vm1214, %v1282, %v1283
      %v1285 = vrot.slane %v1174, 5
      %v1286 = vrot.slane %v1285, 4
      %v1287 = vrot.slane %v193, 5
      %v1288 = vsel %vm1214, %v1286, %v1287
      %v1289 = vrot.slane %v1287, 4
      %v1290 = vrot.slane %v215, 5
      %v1291 = vsel %vm1214, %v1289, %v1290
      %v1292 = vrot.slane %v1175, 5
      %v1293 = vrot.slane %v1292, 4
      %v1294 = vrot.slane %v195, 5
      %v1295 = vsel %vm1214, %v1293, %v1294
      %v1296 = vrot.slane %v1294, 4
      %v1297 = vrot.slane %v216, 5
      %v1298 = vsel %vm1214, %v1296, %v1297
      %v1299 = vrot.slane %v1176, 5
      %v1300 = vrot.slane %v1299, 4
      %v1301 = vrot.slane %v197, 5
      %v1302 = vsel %vm1214, %v1300, %v1301
      %v1303 = vrot.slane %v1301, 4
      %v1304 = vrot.slane %v217, 5
      %v1305 = vsel %vm1214, %v1303, %v1304
      %v1306 = vrot.slane %v1177, 5
      %v1307 = vrot.slane %v1306, 4
      %v1308 = vrot.slane %v199, 5
      %v1309 = vsel %vm1214, %v1307, %v1308
      %v1310 = vrot.slane %v1308, 4
      %v1311 = vrot.slane %v218, 5
      %v1312 = vsel %vm1214, %v1310, %v1311
      %v1313 = vrot.slane %v1178, 5
      %v1314 = vrot.slane %v1313, 4
      %v1315 = vrot.slane %v201, 5
      %v1316 = vsel %vm1214, %v1314, %v1315
      %v1317 = vrot.slane %v1315, 4
      %v1318 = vrot.slane %v219, 5
      %v1319 = vsel %vm1214, %v1317, %v1318
      %v1320 = vrot.slane %v1179, 5
      %v1321 = vrot.slane %v1320, 4
      %v1322 = vrot.slane %v203, 5
      %v1323 = vsel %vm1214, %v1321, %v1322
      %v1324 = vrot.slane %v1322, 4
      %v1325 = vrot.slane %v220, 5
      %v1326 = vsel %vm1214, %v1324, %v1325
      %s1327 = scalar_lea.vmem %s1, 8
      %v1328 = vld [vmem:[%s1327] sm:$0x7]
      %v1329 = vunpack.c.l.b16 %v1218
      %v1330 = vunpack.c.l.b16 %v1221
      %v1331 = vunpack.c.l.b16 %v1225
      %v1332 = vunpack.c.l.b16 %v1228
      %v1333 = vunpack.c.l.b16 %v1232
      %v1334 = vunpack.c.l.b16 %v1235
      %v1335 = vunpack.c.l.b16 %v1239
      %v1336 = vunpack.c.l.b16 %v1242
      %v1337 = vunpack.c.l.b16 %v1246
      %v1338 = vunpack.c.l.b16 %v1249
      %v1339 = vunpack.c.l.b16 %v1253
      %v1340 = vunpack.c.l.b16 %v1256
      %v1341 = vunpack.c.l.b16 %v1260
      %v1342 = vunpack.c.l.b16 %v1263
      %v1343 = vunpack.c.l.b16 %v1267
      %v1344 = vunpack.c.l.b16 %v1270
      %v1345 = vunpack.c.l.b16 %v1274
      %v1346 = vunpack.c.l.b16 %v1277
      %v1347 = vunpack.c.l.b16 %v1281
      %v1348 = vunpack.c.l.b16 %v1284
      %v1349 = vunpack.c.l.b16 %v1288
      %v1350 = vunpack.c.l.b16 %v1291
      %v1351 = vunpack.c.l.b16 %v1295
      %v1352 = vunpack.c.l.b16 %v1298
      %v1353 = vunpack.c.l.b16 %v1302
      %v1354 = vunpack.c.l.b16 %v1305
      %v1355 = vunpack.c.l.b16 %v1309
      %v1356 = vunpack.c.l.b16 %v1312
      %v1357 = vunpack.c.l.b16 %v1316
      %v1358 = vunpack.c.l.b16 %v1319
      %v1359 = vunpack.c.l.b16 %v1323
      %v1360 = vunpack.c.l.b16 %v1326
      %v1361 = vpack.c.b16 %v1330, %v1329
      %v1362 = vpack.c.b16 %v1332, %v1331
      %v1363 = vpack.c.b16 %v1334, %v1333
      %v1364 = vpack.c.b16 %v1336, %v1335
      %v1365 = vpack.c.b16 %v1338, %v1337
      %v1366 = vpack.c.b16 %v1340, %v1339
      %v1367 = vpack.c.b16 %v1342, %v1341
      %v1368 = vpack.c.b16 %v1344, %v1343
      %v1369 = vpack.c.b16 %v1346, %v1345
      %v1370 = vpack.c.b16 %v1348, %v1347
      %v1371 = vpack.c.b16 %v1350, %v1349
      %v1372 = vpack.c.b16 %v1352, %v1351
      %v1373 = vpack.c.b16 %v1354, %v1353
      %v1374 = vpack.c.b16 %v1356, %v1355
      %v1375 = vpack.c.b16 %v1358, %v1357
      %v1376 = vpack.c.b16 %v1360, %v1359
      %v1378 = vsel %vm658, %v1361, 0
      %v1381 = vsel %vm658, %v1362, 0
      %v1384 = vsel %vm658, %v1363, 0
      %v1387 = vsel %vm658, %v1364, 0
      %v1390 = vsel %vm658, %v1365, 0
      %v1393 = vsel %vm658, %v1366, 0
      %v1396 = vsel %vm658, %v1367, 0
      %v1399 = vsel %vm658, %v1368, 0
      %v1402 = vsel %vm658, %v1369, 0
      %v1405 = vsel %vm658, %v1370, 0
      %v1408 = vsel %vm658, %v1371, 0
      %v1411 = vsel %vm658, %v1372, 0
      %v1414 = vsel %vm658, %v1373, 0
      %v1417 = vsel %vm658, %v1374, 0
      %v1420 = vsel %vm658, %v1375, 0
      %v1423 = vsel %vm658, %v1376, 0
      %v1426 = vsel %vm707, %v1328, 0
      %1428 = vmatprep.subr.bf16.mxu0 0
      %1429 = vmatpush1.bf16.msra.mxu0 %v1426
      %1430 = vmatprep.subr.bf16.mxu0 0
      %1431 = vmatpush1.bf16.msra.mxu0 0
      %1432 = vmatprep.subr.bf16.mxu0 0
      %1433 = vmatpush1.bf16.msra.mxu0 0
      %1434 = vmatprep.subr.bf16.mxu0 0
      %1435 = vmatpush1.bf16.msra.mxu0 0
      %1436 = vmatprep.subr.bf16.mxu0 0
      %1437 = vmatpush1.bf16.msra.mxu0 0
      %1438 = vmatprep.subr.bf16.mxu0 0
      %1439 = vmatpush1.bf16.msra.mxu0 0
      %1440 = vmatprep.subr.bf16.mxu0 0
      %1441 = vmatpush1.bf16.msra.mxu0 0
      %1442 = vmatprep.subr.bf16.mxu0 0
      %1443 = vmatpush1.bf16.msra.mxu0 0
      %1444 = vmatprep.subr.bf16.mxu0 0
      %1445 = vmatpush1.bf16.msra.mxu0 0
      %1446 = vmatprep.subr.bf16.mxu0 0
      %1447 = vmatpush1.bf16.msra.mxu0 0
      %1448 = vmatprep.subr.bf16.mxu0 0
      %1449 = vmatpush1.bf16.msra.mxu0 0
      %1450 = vmatprep.subr.bf16.mxu0 0
      %1451 = vmatpush1.bf16.msra.mxu0 0
      %1452 = vmatprep.subr.bf16.mxu0 0
      %1453 = vmatpush1.bf16.msra.mxu0 0
      %1454 = vmatprep.subr.bf16.mxu0 0
      %1455 = vmatpush1.bf16.msra.mxu0 0
      %1456 = vmatprep.subr.bf16.mxu0 0
      %1457 = vmatpush1.bf16.msra.mxu0 0
      %1458 = vmatprep.subr.bf16.mxu0 0
      %1459 = vmatpush1.bf16.msra.mxu0 0
      %1460 = vmatprep.mubr.bf16.mxu0 0
      %1461 = vmatmul.mubr.bf16.gmra.mrb[0].mxu0 %v1378
      %v1462 = vpop.f32.mrb[0].mxu0
      %v1463 = vadd.f32 0.0, %v1462
      %v1464 = vpop.f32.mrb[0].mxu0
      %v1465 = vpop.f32.mrb[0].mxu0
      %v1466 = vadd.f32 0.0, %v1465
      %v1467 = vpop.f32.mrb[0].mxu0
      %1468 = vmatprep.mubr.bf16.mxu0 0
      %1469 = vmatmul.mubr.bf16.gmra.mrb[0].mxu0 %v1381
      %v1470 = vpop.f32.mrb[0].mxu0
      %v1471 = vadd.f32 0.0, %v1470
      %v1472 = vpop.f32.mrb[0].mxu0
      %v1473 = vpop.f32.mrb[0].mxu0
      %v1474 = vadd.f32 0.0, %v1473
      %v1475 = vpop.f32.mrb[0].mxu0
      %1476 = vmatprep.mubr.bf16.mxu0 0
      %1477 = vmatmul.mubr.bf16.gmra.mrb[0].mxu0 %v1384
      %v1478 = vpop.f32.mrb[0].mxu0
      %v1479 = vadd.f32 0.0, %v1478
      %v1480 = vpop.f32.mrb[0].mxu0
      %v1481 = vpop.f32.mrb[0].mxu0
      %v1482 = vadd.f32 0.0, %v1481
      %v1483 = vpop.f32.mrb[0].mxu0
      %1484 = vmatprep.mubr.bf16.mxu0 0
      %1485 = vmatmul.mubr.bf16.gmra.mrb[0].mxu0 %v1387
      %v1486 = vpop.f32.mrb[0].mxu0
      %v1487 = vadd.f32 0.0, %v1486
      %v1488 = vpop.f32.mrb[0].mxu0
      %v1489 = vpop.f32.mrb[0].mxu0
      %v1490 = vadd.f32 0.0, %v1489
      %v1491 = vpop.f32.mrb[0].mxu0
      %1492 = vmatprep.mubr.bf16.mxu0 0
      %1493 = vmatmul.mubr.bf16.gmra.mrb[0].mxu0 %v1390
      %v1494 = vpop.f32.mrb[0].mxu0
      %v1495 = vadd.f32 0.0, %v1494
      %v1496 = vpop.f32.mrb[0].mxu0
      %v1497 = vpop.f32.mrb[0].mxu0
      %v1498 = vadd.f32 0.0, %v1497
      %v1499 = vpop.f32.mrb[0].mxu0
      %1500 = vmatprep.mubr.bf16.mxu0 0
      %1501 = vmatmul.mubr.bf16.gmra.mrb[0].mxu0 %v1393
      %v1502 = vpop.f32.mrb[0].mxu0
      %v1503 = vadd.f32 0.0, %v1502
      %v1504 = vpop.f32.mrb[0].mxu0
      %v1505 = vpop.f32.mrb[0].mxu0
      %v1506 = vadd.f32 0.0, %v1505
      %v1507 = vpop.f32.mrb[0].mxu0
      %1508 = vmatprep.mubr.bf16.mxu0 0
      %1509 = vmatmul.mubr.bf16.gmra.mrb[0].mxu0 %v1396
      %v1510 = vpop.f32.mrb[0].mxu0
      %v1511 = vadd.f32 0.0, %v1510
      %v1512 = vpop.f32.mrb[0].mxu0
      %v1513 = vpop.f32.mrb[0].mxu0
      %v1514 = vadd.f32 0.0, %v1513
      %v1515 = vpop.f32.mrb[0].mxu0
      %1516 = vmatprep.mubr.bf16.mxu0 0
      %1517 = vmatmul.mubr.bf16.gmra.mrb[0].mxu0 %v1399
      %v1518 = vpop.f32.mrb[0].mxu0
      %v1519 = vadd.f32 0.0, %v1518
      %v1520 = vpop.f32.mrb[0].mxu0
      %v1521 = vpop.f32.mrb[0].mxu0
      %v1522 = vadd.f32 0.0, %v1521
      %v1523 = vpop.f32.mrb[0].mxu0
      %1524 = vmatprep.mubr.bf16.mxu0 0
      %1525 = vmatmul.mubr.bf16.gmra.mrb[0].mxu0 %v1402
      %v1526 = vpop.f32.mrb[0].mxu0
      %v1527 = vadd.f32 0.0, %v1526
      %v1528 = vpop.f32.mrb[0].mxu0
      %v1529 = vpop.f32.mrb[0].mxu0
      %v1530 = vadd.f32 0.0, %v1529
      %v1531 = vpop.f32.mrb[0].mxu0
      %1532 = vmatprep.mubr.bf16.mxu0 0
      %1533 = vmatmul.mubr.bf16.gmra.mrb[0].mxu0 %v1405
      %v1534 = vpop.f32.mrb[0].mxu0
      %v1535 = vadd.f32 0.0, %v1534
      %v1536 = vpop.f32.mrb[0].mxu0
      %v1537 = vpop.f32.mrb[0].mxu0
      %v1538 = vadd.f32 0.0, %v1537
      %v1539 = vpop.f32.mrb[0].mxu0
      %1540 = vmatprep.mubr.bf16.mxu0 0
      %1541 = vmatmul.mubr.bf16.gmra.mrb[0].mxu0 %v1408
      %v1542 = vpop.f32.mrb[0].mxu0
      %v1543 = vadd.f32 0.0, %v1542
      %v1544 = vpop.f32.mrb[0].mxu0
      %v1545 = vpop.f32.mrb[0].mxu0
      %v1546 = vadd.f32 0.0, %v1545
      %v1547 = vpop.f32.mrb[0].mxu0
      %1548 = vmatprep.mubr.bf16.mxu0 0
      %1549 = vmatmul.mubr.bf16.gmra.mrb[0].mxu0 %v1411
      %v1550 = vpop.f32.mrb[0].mxu0
      %v1551 = vadd.f32 0.0, %v1550
      %v1552 = vpop.f32.mrb[0].mxu0
      %v1553 = vpop.f32.mrb[0].mxu0
      %v1554 = vadd.f32 0.0, %v1553
      %v1555 = vpop.f32.mrb[0].mxu0
      %1556 = vmatprep.mubr.bf16.mxu0 0
      %1557 = vmatmul.mubr.bf16.gmra.mrb[0].mxu0 %v1414
      %v1558 = vpop.f32.mrb[0].mxu0
      %v1559 = vadd.f32 0.0, %v1558
      %v1560 = vpop.f32.mrb[0].mxu0
      %v1561 = vpop.f32.mrb[0].mxu0
      %v1562 = vadd.f32 0.0, %v1561
      %v1563 = vpop.f32.mrb[0].mxu0
      %1564 = vmatprep.mubr.bf16.mxu0 0
      %1565 = vmatmul.mubr.bf16.gmra.mrb[0].mxu0 %v1417
      %v1566 = vpop.f32.mrb[0].mxu0
      %v1567 = vadd.f32 0.0, %v1566
      %v1568 = vpop.f32.mrb[0].mxu0
      %v1569 = vpop.f32.mrb[0].mxu0
      %v1570 = vadd.f32 0.0, %v1569
      %v1571 = vpop.f32.mrb[0].mxu0
      %1572 = vmatprep.mubr.bf16.mxu0 0
      %1573 = vmatmul.mubr.bf16.gmra.mrb[0].mxu0 %v1420
      %v1574 = vpop.f32.mrb[0].mxu0
      %v1575 = vadd.f32 0.0, %v1574
      %v1576 = vpop.f32.mrb[0].mxu0
      %v1577 = vpop.f32.mrb[0].mxu0
      %v1578 = vadd.f32 0.0, %v1577
      %v1579 = vpop.f32.mrb[0].mxu0
      %1580 = vmatprep.mubr.bf16.mxu0 0
      %1581 = vmatmul.mubr.bf16.gmra.mrb[0].mxu0 %v1423
      %v1582 = vpop.f32.mrb[0].mxu0
      %v1583 = vadd.f32 0.0, %v1582
      %v1584 = vpop.f32.mrb[0].mxu0
      %v1585 = vpop.f32.mrb[0].mxu0
      %v1586 = vadd.f32 0.0, %v1585
      %v1587 = vpop.f32.mrb[0].mxu0
      %1588 = vdwg.mxu0
      %v1589 = vadd.f32 %v1038, %v1463
      %v1590 = vadd.f32 %v1041, %v1466
      %v1591 = vadd.f32 %v1046, %v1471
      %v1592 = vadd.f32 %v1049, %v1474
      %v1593 = vadd.f32 %v1054, %v1479
      %v1594 = vadd.f32 %v1057, %v1482
      %v1595 = vadd.f32 %v1062, %v1487
      %v1596 = vadd.f32 %v1065, %v1490
      %v1597 = vadd.f32 %v1070, %v1495
      %v1598 = vadd.f32 %v1073, %v1498
      %v1599 = vadd.f32 %v1078, %v1503
      %v1600 = vadd.f32 %v1081, %v1506
      %v1601 = vadd.f32 %v1086, %v1511
      %v1602 = vadd.f32 %v1089, %v1514
      %v1603 = vadd.f32 %v1094, %v1519
      %v1604 = vadd.f32 %v1097, %v1522
      %v1605 = vadd.f32 %v1102, %v1527
      %v1606 = vadd.f32 %v1105, %v1530
      %v1607 = vadd.f32 %v1110, %v1535
      %v1608 = vadd.f32 %v1113, %v1538
      %v1609 = vadd.f32 %v1118, %v1543
      %v1610 = vadd.f32 %v1121, %v1546
      %v1611 = vadd.f32 %v1126, %v1551
      %v1612 = vadd.f32 %v1129, %v1554
      %v1613 = vadd.f32 %v1134, %v1559
      %v1614 = vadd.f32 %v1137, %v1562
      %v1615 = vadd.f32 %v1142, %v1567
      %v1616 = vadd.f32 %v1145, %v1570
      %v1617 = vadd.f32 %v1150, %v1575
      %v1618 = vadd.f32 %v1153, %v1578
      %v1619 = vadd.f32 %v1158, %v1583
      %v1620 = vadd.f32 %v1161, %v1586
      %s1621 = scalar_lea.vmem %s165, 12
      %v1622 = vld [vmem:[%s1621] sm:$0xf]
      %v1623 = vld [vmem:[%s1621 + $0x4] sm:$0xf]
      %v1624 = vld [vmem:[%s1621 + $0xc] sm:$0xf]
      %v1625 = vld [vmem:[%s1621 + $0x10] sm:$0xf]
      %v1626 = vld [vmem:[%s1621 + $0x18] sm:$0xf]
      %v1627 = vld [vmem:[%s1621 + $0x1c] sm:$0xf]
      %v1628 = vld [vmem:[%s1621 + $0x24] sm:$0xf]
      %v1629 = vld [vmem:[%s1621 + $0x28] sm:$0xf]
      %v1630 = vld [vmem:[%s1621 + $0x30] sm:$0xf]
      %v1631 = vld [vmem:[%s1621 + $0x34] sm:$0xf]
      %v1632 = vld [vmem:[%s1621 + $0x3c] sm:$0xf]
      %v1633 = vld [vmem:[%s1621 + $0x40] sm:$0xf]
      %v1634 = vld [vmem:[%s1621 + $0x48] sm:$0xf]
      %v1635 = vld [vmem:[%s1621 + $0x4c] sm:$0xf]
      %v1636 = vld [vmem:[%s1621 + $0x54] sm:$0xf]
      %v1637 = vld [vmem:[%s1621 + $0x58] sm:$0xf]
      %v1638 = vld [vmem:[%s1621 + $0x60] sm:$0xf]
      %v1639 = vld [vmem:[%s1621 + $0x64] sm:$0xf]
      %v1640 = vld [vmem:[%s1621 + $0x6c] sm:$0xf]
      %v1641 = vld [vmem:[%s1621 + $0x70] sm:$0xf]
      %v1642 = vld [vmem:[%s1621 + $0x78] sm:$0xf]
      %v1643 = vld [vmem:[%s1621 + $0x7c] sm:$0xf]
      %v1644 = vld [vmem:[%s1621 + $0x84] sm:$0xf]
      %v1645 = vld [vmem:[%s1621 + $0x88] sm:$0xf]
      %v1646 = vld [vmem:[%s1621 + $0x90] sm:$0xf]
      %v1647 = vld [vmem:[%s1621 + $0x94] sm:$0xf]
      %v1648 = vld [vmem:[%s1621 + $0x9c] sm:$0xf]
      %v1649 = vld [vmem:[%s1621 + $0xa0] sm:$0xf]
      %v1650 = vld [vmem:[%s1621 + $0xa8] sm:$0xf]
      %v1651 = vld [vmem:[%s1621 + $0xac] sm:$0xf]
      %v1652 = vld [vmem:[%s1621 + $0xb4] sm:$0xf]
      %v1653 = vld [vmem:[%s1621 + $0xb8] sm:$0xf]
      %s1654 = scalar_lea.vmem %s1, 12
      %v1655 = vld [vmem:[%s1654] sm:$0x7]
      %v1688 = vunpack.c.l.b16 %v1622
      %v1689 = vunpack.c.l.b16 %v1623
      %v1690 = vunpack.c.l.b16 %v1624
      %v1691 = vunpack.c.l.b16 %v1625
      %v1692 = vunpack.c.l.b16 %v1626
      %v1693 = vunpack.c.l.b16 %v1627
      %v1694 = vunpack.c.l.b16 %v1628
      %v1695 = vunpack.c.l.b16 %v1629
      %v1696 = vunpack.c.l.b16 %v1630
      %v1697 = vunpack.c.l.b16 %v1631
      %v1698 = vunpack.c.l.b16 %v1632
      %v1699 = vunpack.c.l.b16 %v1633
      %v1700 = vunpack.c.l.b16 %v1634
      %v1701 = vunpack.c.l.b16 %v1635
      %v1702 = vunpack.c.l.b16 %v1636
      %v1703 = vunpack.c.l.b16 %v1637
      %v1704 = vunpack.c.l.b16 %v1638
      %v1705 = vunpack.c.l.b16 %v1639
      %v1706 = vunpack.c.l.b16 %v1640
      %v1707 = vunpack.c.l.b16 %v1641
      %v1708 = vunpack.c.l.b16 %v1642
      %v1709 = vunpack.c.l.b16 %v1643
      %v1710 = vunpack.c.l.b16 %v1644
      %v1711 = vunpack.c.l.b16 %v1645
      %v1712 = vunpack.c.l.b16 %v1646
      %v1713 = vunpack.c.l.b16 %v1647
      %v1714 = vunpack.c.l.b16 %v1648
      %v1715 = vunpack.c.l.b16 %v1649
      %v1716 = vunpack.c.l.b16 %v1650
      %v1717 = vunpack.c.l.b16 %v1651
      %v1718 = vunpack.c.l.b16 %v1652
      %v1719 = vunpack.c.l.b16 %v1653
      %v1720 = vpack.c.b16 %v1689, %v1688
      %v1721 = vpack.c.b16 %v1691, %v1690
      %v1722 = vpack.c.b16 %v1693, %v1692
      %v1723 = vpack.c.b16 %v1695, %v1694
      %v1724 = vpack.c.b16 %v1697, %v1696
      %v1725 = vpack.c.b16 %v1699, %v1698
      %v1726 = vpack.c.b16 %v1701, %v1700
      %v1727 = vpack.c.b16 %v1703, %v1702
      %v1728 = vpack.c.b16 %v1705, %v1704
      %v1729 = vpack.c.b16 %v1707, %v1706
      %v1730 = vpack.c.b16 %v1709, %v1708
      %v1731 = vpack.c.b16 %v1711, %v1710
      %v1732 = vpack.c.b16 %v1713, %v1712
      %v1733 = vpack.c.b16 %v1715, %v1714
      %v1734 = vpack.c.b16 %v1717, %v1716
      %v1735 = vpack.c.b16 %v1719, %v1718
      %v1737 = vsel %vm658, %v1720, 0
      %v1740 = vsel %vm658, %v1721, 0
      %v1743 = vsel %vm658, %v1722, 0
      %v1746 = vsel %vm658, %v1723, 0
      %v1749 = vsel %vm658, %v1724, 0
      %v1752 = vsel %vm658, %v1725, 0
      %v1755 = vsel %vm658, %v1726, 0
      %v1758 = vsel %vm658, %v1727, 0
      %v1761 = vsel %vm658, %v1728, 0
      %v1764 = vsel %vm658, %v1729, 0
      %v1767 = vsel %vm658, %v1730, 0
      %v1770 = vsel %vm658, %v1731, 0
      %v1773 = vsel %vm658, %v1732, 0
      %v1776 = vsel %vm658, %v1733, 0
      %v1779 = vsel %vm658, %v1734, 0
      %v1782 = vsel %vm658, %v1735, 0
      %v1785 = vsel %vm707, %v1655, 0
      %1787 = vmatprep.subr.bf16.mxu0 0
      %1788 = vmatpush1.bf16.msra.mxu0 %v1785
      %1789 = vmatprep.subr.bf16.mxu0 0
      %1790 = vmatpush1.bf16.msra.mxu0 0
      %1791 = vmatprep.subr.bf16.mxu0 0
      %1792 = vmatpush1.bf16.msra.mxu0 0
      %1793 = vmatprep.subr.bf16.mxu0 0
      %1794 = vmatpush1.bf16.msra.mxu0 0
      %1795 = vmatprep.subr.bf16.mxu0 0
      %1796 = vmatpush1.bf16.msra.mxu0 0
      %1797 = vmatprep.subr.bf16.mxu0 0
      %1798 = vmatpush1.bf16.msra.mxu0 0
      %1799 = vmatprep.subr.bf16.mxu0 0
      %1800 = vmatpush1.bf16.msra.mxu0 0
      %1801 = vmatprep.subr.bf16.mxu0 0
      %1802 = vmatpush1.bf16.msra.mxu0 0
      %1803 = vmatprep.subr.bf16.mxu0 0
      %1804 = vmatpush1.bf16.msra.mxu0 0
      %1805 = vmatprep.subr.bf16.mxu0 0
      %1806 = vmatpush1.bf16.msra.mxu0 0
      %1807 = vmatprep.subr.bf16.mxu0 0
      %1808 = vmatpush1.bf16.msra.mxu0 0
      %1809 = vmatprep.subr.bf16.mxu0 0
      %1810 = vmatpush1.bf16.msra.mxu0 0
      %1811 = vmatprep.subr.bf16.mxu0 0
      %1812 = vmatpush1.bf16.msra.mxu0 0
      %1813 = vmatprep.subr.bf16.mxu0 0
      %1814 = vmatpush1.bf16.msra.mxu0 0
      %1815 = vmatprep.subr.bf16.mxu0 0
      %1816 = vmatpush1.bf16.msra.mxu0 0
      %1817 = vmatprep.subr.bf16.mxu0 0
      %1818 = vmatpush1.bf16.msra.mxu0 0
      %1819 = vmatprep.mubr.bf16.mxu0 0
      %1820 = vmatmul.mubr.bf16.gmra.mrb[0].mxu0 %v1737
      %v1821 = vpop.f32.mrb[0].mxu0
      %v1822 = vadd.f32 0.0, %v1821
      %v1823 = vpop.f32.mrb[0].mxu0
      %v1824 = vpop.f32.mrb[0].mxu0
      %v1825 = vadd.f32 0.0, %v1824
      %v1826 = vpop.f32.mrb[0].mxu0
      %1827 = vmatprep.mubr.bf16.mxu0 0
      %1828 = vmatmul.mubr.bf16.gmra.mrb[0].mxu0 %v1740
      %v1829 = vpop.f32.mrb[0].mxu0
      %v1830 = vadd.f32 0.0, %v1829
      %v1831 = vpop.f32.mrb[0].mxu0
      %v1832 = vpop.f32.mrb[0].mxu0
      %v1833 = vadd.f32 0.0, %v1832
      %v1834 = vpop.f32.mrb[0].mxu0
      %1835 = vmatprep.mubr.bf16.mxu0 0
      %1836 = vmatmul.mubr.bf16.gmra.mrb[0].mxu0 %v1743
      %v1837 = vpop.f32.mrb[0].mxu0
      %v1838 = vadd.f32 0.0, %v1837
      %v1839 = vpop.f32.mrb[0].mxu0
      %v1840 = vpop.f32.mrb[0].mxu0
      %v1841 = vadd.f32 0.0, %v1840
      %v1842 = vpop.f32.mrb[0].mxu0
      %1843 = vmatprep.mubr.bf16.mxu0 0
      %1844 = vmatmul.mubr.bf16.gmra.mrb[0].mxu0 %v1746
      %v1845 = vpop.f32.mrb[0].mxu0
      %v1846 = vadd.f32 0.0, %v1845
      %v1847 = vpop.f32.mrb[0].mxu0
      %v1848 = vpop.f32.mrb[0].mxu0
      %v1849 = vadd.f32 0.0, %v1848
      %v1850 = vpop.f32.mrb[0].mxu0
      %1851 = vmatprep.mubr.bf16.mxu0 0
      %1852 = vmatmul.mubr.bf16.gmra.mrb[0].mxu0 %v1749
      %v1853 = vpop.f32.mrb[0].mxu0
      %v1854 = vadd.f32 0.0, %v1853
      %v1855 = vpop.f32.mrb[0].mxu0
      %v1856 = vpop.f32.mrb[0].mxu0
      %v1857 = vadd.f32 0.0, %v1856
      %v1858 = vpop.f32.mrb[0].mxu0
      %1859 = vmatprep.mubr.bf16.mxu0 0
      %1860 = vmatmul.mubr.bf16.gmra.mrb[0].mxu0 %v1752
      %v1861 = vpop.f32.mrb[0].mxu0
      %v1862 = vadd.f32 0.0, %v1861
      %v1863 = vpop.f32.mrb[0].mxu0
      %v1864 = vpop.f32.mrb[0].mxu0
      %v1865 = vadd.f32 0.0, %v1864
      %v1866 = vpop.f32.mrb[0].mxu0
      %1867 = vmatprep.mubr.bf16.mxu0 0
      %1868 = vmatmul.mubr.bf16.gmra.mrb[0].mxu0 %v1755
      %v1869 = vpop.f32.mrb[0].mxu0
      %v1870 = vadd.f32 0.0, %v1869
      %v1871 = vpop.f32.mrb[0].mxu0
      %v1872 = vpop.f32.mrb[0].mxu0
      %v1873 = vadd.f32 0.0, %v1872
      %v1874 = vpop.f32.mrb[0].mxu0
      %1875 = vmatprep.mubr.bf16.mxu0 0
      %1876 = vmatmul.mubr.bf16.gmra.mrb[0].mxu0 %v1758
      %v1877 = vpop.f32.mrb[0].mxu0
      %v1878 = vadd.f32 0.0, %v1877
      %v1879 = vpop.f32.mrb[0].mxu0
      %v1880 = vpop.f32.mrb[0].mxu0
      %v1881 = vadd.f32 0.0, %v1880
      %v1882 = vpop.f32.mrb[0].mxu0
      %1883 = vmatprep.mubr.bf16.mxu0 0
      %1884 = vmatmul.mubr.bf16.gmra.mrb[0].mxu0 %v1761
      %v1885 = vpop.f32.mrb[0].mxu0
      %v1886 = vadd.f32 0.0, %v1885
      %v1887 = vpop.f32.mrb[0].mxu0
      %v1888 = vpop.f32.mrb[0].mxu0
      %v1889 = vadd.f32 0.0, %v1888
      %v1890 = vpop.f32.mrb[0].mxu0
      %1891 = vmatprep.mubr.bf16.mxu0 0
      %1892 = vmatmul.mubr.bf16.gmra.mrb[0].mxu0 %v1764
      %v1893 = vpop.f32.mrb[0].mxu0
      %v1894 = vadd.f32 0.0, %v1893
      %v1895 = vpop.f32.mrb[0].mxu0
      %v1896 = vpop.f32.mrb[0].mxu0
      %v1897 = vadd.f32 0.0, %v1896
      %v1898 = vpop.f32.mrb[0].mxu0
      %1899 = vmatprep.mubr.bf16.mxu0 0
      %1900 = vmatmul.mubr.bf16.gmra.mrb[0].mxu0 %v1767
      %v1901 = vpop.f32.mrb[0].mxu0
      %v1902 = vadd.f32 0.0, %v1901
      %v1903 = vpop.f32.mrb[0].mxu0
      %v1904 = vpop.f32.mrb[0].mxu0
      %v1905 = vadd.f32 0.0, %v1904
      %v1906 = vpop.f32.mrb[0].mxu0
      %1907 = vmatprep.mubr.bf16.mxu0 0
      %1908 = vmatmul.mubr.bf16.gmra.mrb[0].mxu0 %v1770
      %v1909 = vpop.f32.mrb[0].mxu0
      %v1910 = vadd.f32 0.0, %v1909
      %v1911 = vpop.f32.mrb[0].mxu0
      %v1912 = vpop.f32.mrb[0].mxu0
      %v1913 = vadd.f32 0.0, %v1912
      %v1914 = vpop.f32.mrb[0].mxu0
      %1915 = vmatprep.mubr.bf16.mxu0 0
      %1916 = vmatmul.mubr.bf16.gmra.mrb[0].mxu0 %v1773
      %v1917 = vpop.f32.mrb[0].mxu0
      %v1918 = vadd.f32 0.0, %v1917
      %v1919 = vpop.f32.mrb[0].mxu0
      %v1920 = vpop.f32.mrb[0].mxu0
      %v1921 = vadd.f32 0.0, %v1920
      %v1922 = vpop.f32.mrb[0].mxu0
      %1923 = vmatprep.mubr.bf16.mxu0 0
      %1924 = vmatmul.mubr.bf16.gmra.mrb[0].mxu0 %v1776
      %v1925 = vpop.f32.mrb[0].mxu0
      %v1926 = vadd.f32 0.0, %v1925
      %v1927 = vpop.f32.mrb[0].mxu0
      %v1928 = vpop.f32.mrb[0].mxu0
      %v1929 = vadd.f32 0.0, %v1928
      %v1930 = vpop.f32.mrb[0].mxu0
      %1931 = vmatprep.mubr.bf16.mxu0 0
      %1932 = vmatmul.mubr.bf16.gmra.mrb[0].mxu0 %v1779
      %v1933 = vpop.f32.mrb[0].mxu0
      %v1934 = vadd.f32 0.0, %v1933
      %v1935 = vpop.f32.mrb[0].mxu0
      %v1936 = vpop.f32.mrb[0].mxu0
      %v1937 = vadd.f32 0.0, %v1936
      %v1938 = vpop.f32.mrb[0].mxu0
      %1939 = vmatprep.mubr.bf16.mxu0 0
      %1940 = vmatmul.mubr.bf16.gmra.mrb[0].mxu0 %v1782
      %v1941 = vpop.f32.mrb[0].mxu0
      %v1942 = vadd.f32 0.0, %v1941
      %v1943 = vpop.f32.mrb[0].mxu0
      %v1944 = vpop.f32.mrb[0].mxu0
      %v1945 = vadd.f32 0.0, %v1944
      %v1946 = vpop.f32.mrb[0].mxu0
      %1947 = vdwg.mxu0
      %v1948 = vadd.f32 %v1589, %v1822
      %v1949 = vadd.f32 %v1590, %v1825
      %v1950 = vadd.f32 %v1591, %v1830
      %v1951 = vadd.f32 %v1592, %v1833
      %v1952 = vadd.f32 %v1593, %v1838
      %v1953 = vadd.f32 %v1594, %v1841
      %v1954 = vadd.f32 %v1595, %v1846
      %v1955 = vadd.f32 %v1596, %v1849
      %v1956 = vadd.f32 %v1597, %v1854
      %v1957 = vadd.f32 %v1598, %v1857
      %v1958 = vadd.f32 %v1599, %v1862
      %v1959 = vadd.f32 %v1600, %v1865
      %v1960 = vadd.f32 %v1601, %v1870
      %v1961 = vadd.f32 %v1602, %v1873
      %v1962 = vadd.f32 %v1603, %v1878
      %v1963 = vadd.f32 %v1604, %v1881
      %v1964 = vadd.f32 %v1605, %v1886
      %v1965 = vadd.f32 %v1606, %v1889
      %v1966 = vadd.f32 %v1607, %v1894
      %v1967 = vadd.f32 %v1608, %v1897
      %v1968 = vadd.f32 %v1609, %v1902
      %v1969 = vadd.f32 %v1610, %v1905
      %v1970 = vadd.f32 %v1611, %v1910
      %v1971 = vadd.f32 %v1612, %v1913
      %v1972 = vadd.f32 %v1613, %v1918
      %v1973 = vadd.f32 %v1614, %v1921
      %v1974 = vadd.f32 %v1615, %v1926
      %v1975 = vadd.f32 %v1616, %v1929
      %v1976 = vadd.f32 %v1617, %v1934
      %v1977 = vadd.f32 %v1618, %v1937
      %v1978 = vadd.f32 %v1619, %v1942
      %v1979 = vadd.f32 %v1620, %v1945
      %v1980 = vld [vmem:[%s1621] sm:$0xf]
      %v1981 = vld [vmem:[%s1621 + $0x4] sm:$0xf]
      %v1982 = vld [vmem:[%s1621 + $0x8] sm:$0x1]
      %v1983 = vld [vmem:[%s1621 + $0xc] sm:$0xf]
      %v1984 = vld [vmem:[%s1621 + $0x10] sm:$0xf]
      %v1985 = vld [vmem:[%s1621 + $0x14] sm:$0x1]
      %v1986 = vld [vmem:[%s1621 + $0x18] sm:$0xf]
      %v1987 = vld [vmem:[%s1621 + $0x1c] sm:$0xf]
      %v1988 = vld [vmem:[%s1621 + $0x20] sm:$0x1]
      %v1989 = vld [vmem:[%s1621 + $0x24] sm:$0xf]
      %v1990 = vld [vmem:[%s1621 + $0x28] sm:$0xf]
      %v1991 = vld [vmem:[%s1621 + $0x2c] sm:$0x1]
      %v1992 = vld [vmem:[%s1621 + $0x30] sm:$0xf]
      %v1993 = vld [vmem:[%s1621 + $0x34] sm:$0xf]
      %v1994 = vld [vmem:[%s1621 + $0x38] sm:$0x1]
      %v1995 = vld [vmem:[%s1621 + $0x3c] sm:$0xf]
      %v1996 = vld [vmem:[%s1621 + $0x40] sm:$0xf]
      %v1997 = vld [vmem:[%s1621 + $0x44] sm:$0x1]
      %v1998 = vld [vmem:[%s1621 + $0x48] sm:$0xf]
      %v1999 = vld [vmem:[%s1621 + $0x4c] sm:$0xf]
      %v2000 = vld [vmem:[%s1621 + $0x50] sm:$0x1]
      %v2001 = vld [vmem:[%s1621 + $0x54] sm:$0xf]
      %v2002 = vld [vmem:[%s1621 + $0x58] sm:$0xf]
      %v2003 = vld [vmem:[%s1621 + $0x5c] sm:$0x1]
      %v2004 = vld [vmem:[%s1621 + $0x60] sm:$0xf]
      %v2005 = vld [vmem:[%s1621 + $0x64] sm:$0xf]
      %v2006 = vld [vmem:[%s1621 + $0x68] sm:$0x1]
      %v2007 = vld [vmem:[%s1621 + $0x6c] sm:$0xf]
      %v2008 = vld [vmem:[%s1621 + $0x70] sm:$0xf]
      %v2009 = vld [vmem:[%s1621 + $0x74] sm:$0x1]
      %v2010 = vld [vmem:[%s1621 + $0x78] sm:$0xf]
      %v2011 = vld [vmem:[%s1621 + $0x7c] sm:$0xf]
      %v2012 = vld [vmem:[%s1621 + $0x80] sm:$0x1]
      %v2013 = vld [vmem:[%s1621 + $0x84] sm:$0xf]
      %v2014 = vld [vmem:[%s1621 + $0x88] sm:$0xf]
      %v2015 = vld [vmem:[%s1621 + $0x8c] sm:$0x1]
      %v2016 = vld [vmem:[%s1621 + $0x90] sm:$0xf]
      %v2017 = vld [vmem:[%s1621 + $0x94] sm:$0xf]
      %v2018 = vld [vmem:[%s1621 + $0x98] sm:$0x1]
      %v2019 = vld [vmem:[%s1621 + $0x9c] sm:$0xf]
      %v2020 = vld [vmem:[%s1621 + $0xa0] sm:$0xf]
      %v2021 = vld [vmem:[%s1621 + $0xa4] sm:$0x1]
      %v2022 = vld [vmem:[%s1621 + $0xa8] sm:$0xf]
      %v2023 = vld [vmem:[%s1621 + $0xac] sm:$0xf]
      %v2024 = vld [vmem:[%s1621 + $0xb0] sm:$0x1]
      %v2025 = vld [vmem:[%s1621 + $0xb4] sm:$0xf]
      %v2026 = vld [vmem:[%s1621 + $0xb8] sm:$0xf]
      %v2027 = vld [vmem:[%s1621 + $0xbc] sm:$0x1]
      %v2029 = vshrl.u32 %v1980, 16
      %v2031 = vrot.slane %v2029, 4
      %v2032 = vshll.u32 %v1980, 16
      %v2034 = vrot.slane %v2032, 5
      %v2035 = vor.u32 %v2031, %v2034
      %v2036 = vrot.slane %v2035, 4
      %v2038 = vshll.u32 %v1981, 16
      %v2040 = vrot.slane %v2038, 5
      %v2041 = vsel %vm223, %v2036, %v2040
      %v2042 = vshrl.u32 %v1981, 16
      %v2044 = vrot.slane %v2042, 4
      %v2045 = vor.u32 %v2044, %v2040
      %v2046 = vrot.slane %v2045, 4
      %v2048 = vshll.u32 %v1982, 16
      %v2050 = vrot.slane %v2048, 5
      %v2051 = vsel %vm223, %v2046, %v2050
      %v2053 = vshrl.u32 %v1983, 16
      %v2055 = vrot.slane %v2053, 4
      %v2056 = vshll.u32 %v1983, 16
      %v2058 = vrot.slane %v2056, 5
      %v2059 = vor.u32 %v2055, %v2058
      %v2060 = vrot.slane %v2059, 4
      %v2062 = vshll.u32 %v1984, 16
      %v2064 = vrot.slane %v2062, 5
      %v2065 = vsel %vm223, %v2060, %v2064
      %v2066 = vshrl.u32 %v1984, 16
      %v2068 = vrot.slane %v2066, 4
      %v2069 = vor.u32 %v2068, %v2064
      %v2070 = vrot.slane %v2069, 4
      %v2072 = vshll.u32 %v1985, 16
      %v2074 = vrot.slane %v2072, 5
      %v2075 = vsel %vm223, %v2070, %v2074
      %v2077 = vshrl.u32 %v1986, 16
      %v2079 = vrot.slane %v2077, 4
      %v2080 = vshll.u32 %v1986, 16
      %v2082 = vrot.slane %v2080, 5
      %v2083 = vor.u32 %v2079, %v2082
      %v2084 = vrot.slane %v2083, 4
      %v2086 = vshll.u32 %v1987, 16
      %v2088 = vrot.slane %v2086, 5
      %v2089 = vsel %vm223, %v2084, %v2088
      %v2090 = vshrl.u32 %v1987, 16
      %v2092 = vrot.slane %v2090, 4
      %v2093 = vor.u32 %v2092, %v2088
      %v2094 = vrot.slane %v2093, 4
      %v2096 = vshll.u32 %v1988, 16
      %v2098 = vrot.slane %v2096, 5
      %v2099 = vsel %vm223, %v2094, %v2098
      %v2101 = vshrl.u32 %v1989, 16
      %v2103 = vrot.slane %v2101, 4
      %v2104 = vshll.u32 %v1989, 16
      %v2106 = vrot.slane %v2104, 5
      %v2107 = vor.u32 %v2103, %v2106
      %v2108 = vrot.slane %v2107, 4
      %v2110 = vshll.u32 %v1990, 16
      %v2112 = vrot.slane %v2110, 5
      %v2113 = vsel %vm223, %v2108, %v2112
      %v2114 = vshrl.u32 %v1990, 16
      %v2116 = vrot.slane %v2114, 4
      %v2117 = vor.u32 %v2116, %v2112
      %v2118 = vrot.slane %v2117, 4
      %v2120 = vshll.u32 %v1991, 16
      %v2122 = vrot.slane %v2120, 5
      %v2123 = vsel %vm223, %v2118, %v2122
      %v2125 = vshrl.u32 %v1992, 16
      %v2127 = vrot.slane %v2125, 4
      %v2128 = vshll.u32 %v1992, 16
      %v2130 = vrot.slane %v2128, 5
      %v2131 = vor.u32 %v2127, %v2130
      %v2132 = vrot.slane %v2131, 4
      %v2134 = vshll.u32 %v1993, 16
      %v2136 = vrot.slane %v2134, 5
      %v2137 = vsel %vm223, %v2132, %v2136
      %v2138 = vshrl.u32 %v1993, 16
      %v2140 = vrot.slane %v2138, 4
      %v2141 = vor.u32 %v2140, %v2136
      %v2142 = vrot.slane %v2141, 4
      %v2144 = vshll.u32 %v1994, 16
      %v2146 = vrot.slane %v2144, 5
      %v2147 = vsel %vm223, %v2142, %v2146
      %v2149 = vshrl.u32 %v1995, 16
      %v2151 = vrot.slane %v2149, 4
      %v2152 = vshll.u32 %v1995, 16
      %v2154 = vrot.slane %v2152, 5
      %v2155 = vor.u32 %v2151, %v2154
      %v2156 = vrot.slane %v2155, 4
      %v2158 = vshll.u32 %v1996, 16
      %v2160 = vrot.slane %v2158, 5
      %v2161 = vsel %vm223, %v2156, %v2160
      %v2162 = vshrl.u32 %v1996, 16
      %v2164 = vrot.slane %v2162, 4
      %v2165 = vor.u32 %v2164, %v2160
      %v2166 = vrot.slane %v2165, 4
      %v2168 = vshll.u32 %v1997, 16
      %v2170 = vrot.slane %v2168, 5
      %v2171 = vsel %vm223, %v2166, %v2170
      %v2173 = vshrl.u32 %v1998, 16
      %v2175 = vrot.slane %v2173, 4
      %v2176 = vshll.u32 %v1998, 16
      %v2178 = vrot.slane %v2176, 5
      %v2179 = vor.u32 %v2175, %v2178
      %v2180 = vrot.slane %v2179, 4
      %v2182 = vshll.u32 %v1999, 16
      %v2184 = vrot.slane %v2182, 5
      %v2185 = vsel %vm223, %v2180, %v2184
      %v2186 = vshrl.u32 %v1999, 16
      %v2188 = vrot.slane %v2186, 4
      %v2189 = vor.u32 %v2188, %v2184
      %v2190 = vrot.slane %v2189, 4
      %v2192 = vshll.u32 %v2000, 16
      %v2194 = vrot.slane %v2192, 5
      %v2195 = vsel %vm223, %v2190, %v2194
      %v2197 = vshrl.u32 %v2001, 16
      %v2199 = vrot.slane %v2197, 4
      %v2200 = vshll.u32 %v2001, 16
      %v2202 = vrot.slane %v2200, 5
      %v2203 = vor.u32 %v2199, %v2202
      %v2204 = vrot.slane %v2203, 4
      %v2206 = vshll.u32 %v2002, 16
      %v2208 = vrot.slane %v2206, 5
      %v2209 = vsel %vm223, %v2204, %v2208
      %v2210 = vshrl.u32 %v2002, 16
      %v2212 = vrot.slane %v2210, 4
      %v2213 = vor.u32 %v2212, %v2208
      %v2214 = vrot.slane %v2213, 4
      %v2216 = vshll.u32 %v2003, 16
      %v2218 = vrot.slane %v2216, 5
      %v2219 = vsel %vm223, %v2214, %v2218
      %v2221 = vshrl.u32 %v2004, 16
      %v2223 = vrot.slane %v2221, 4
      %v2224 = vshll.u32 %v2004, 16
      %v2226 = vrot.slane %v2224, 5
      %v2227 = vor.u32 %v2223, %v2226
      %v2228 = vrot.slane %v2227, 4
      %v2230 = vshll.u32 %v2005, 16
      %v2232 = vrot.slane %v2230, 5
      %v2233 = vsel %vm223, %v2228, %v2232
      %v2234 = vshrl.u32 %v2005, 16
      %v2236 = vrot.slane %v2234, 4
      %v2237 = vor.u32 %v2236, %v2232
      %v2238 = vrot.slane %v2237, 4
      %v2240 = vshll.u32 %v2006, 16
      %v2242 = vrot.slane %v2240, 5
      %v2243 = vsel %vm223, %v2238, %v2242
      %v2245 = vshrl.u32 %v2007, 16
      %v2247 = vrot.slane %v2245, 4
      %v2248 = vshll.u32 %v2007, 16
      %v2250 = vrot.slane %v2248, 5
      %v2251 = vor.u32 %v2247, %v2250
      %v2252 = vrot.slane %v2251, 4
      %v2254 = vshll.u32 %v2008, 16
      %v2256 = vrot.slane %v2254, 5
      %v2257 = vsel %vm223, %v2252, %v2256
      %v2258 = vshrl.u32 %v2008, 16
      %v2260 = vrot.slane %v2258, 4
      %v2261 = vor.u32 %v2260, %v2256
      %v2262 = vrot.slane %v2261, 4
      %v2264 = vshll.u32 %v2009, 16
      %v2266 = vrot.slane %v2264, 5
      %v2267 = vsel %vm223, %v2262, %v2266
      %v2269 = vshrl.u32 %v2010, 16
      %v2271 = vrot.slane %v2269, 4
      %v2272 = vshll.u32 %v2010, 16
      %v2274 = vrot.slane %v2272, 5
      %v2275 = vor.u32 %v2271, %v2274
      %v2276 = vrot.slane %v2275, 4
      %v2278 = vshll.u32 %v2011, 16
      %v2280 = vrot.slane %v2278, 5
      %v2281 = vsel %vm223, %v2276, %v2280
      %v2282 = vshrl.u32 %v2011, 16
      %v2284 = vrot.slane %v2282, 4
      %v2285 = vor.u32 %v2284, %v2280
      %v2286 = vrot.slane %v2285, 4
      %v2288 = vshll.u32 %v2012, 16
      %v2290 = vrot.slane %v2288, 5
      %v2291 = vsel %vm223, %v2286, %v2290
      %v2293 = vshrl.u32 %v2013, 16
      %v2295 = vrot.slane %v2293, 4
      %v2296 = vshll.u32 %v2013, 16
      %v2298 = vrot.slane %v2296, 5
      %v2299 = vor.u32 %v2295, %v2298
      %v2300 = vrot.slane %v2299, 4
      %v2302 = vshll.u32 %v2014, 16
      %v2304 = vrot.slane %v2302, 5
      %v2305 = vsel %vm223, %v2300, %v2304
      %v2306 = vshrl.u32 %v2014, 16
      %v2308 = vrot.slane %v2306, 4
      %v2309 = vor.u32 %v2308, %v2304
      %v2310 = vrot.slane %v2309, 4
      %v2312 = vshll.u32 %v2015, 16
      %v2314 = vrot.slane %v2312, 5
      %v2315 = vsel %vm223, %v2310, %v2314
      %v2317 = vshrl.u32 %v2016, 16
      %v2319 = vrot.slane %v2317, 4
      %v2320 = vshll.u32 %v2016, 16
      %v2322 = vrot.slane %v2320, 5
      %v2323 = vor.u32 %v2319, %v2322
      %v2324 = vrot.slane %v2323, 4
      %v2326 = vshll.u32 %v2017, 16
      %v2328 = vrot.slane %v2326, 5
      %v2329 = vsel %vm223, %v2324, %v2328
      %v2330 = vshrl.u32 %v2017, 16
      %v2332 = vrot.slane %v2330, 4
      %v2333 = vor.u32 %v2332, %v2328
      %v2334 = vrot.slane %v2333, 4
      %v2336 = vshll.u32 %v2018, 16
      %v2338 = vrot.slane %v2336, 5
      %v2339 = vsel %vm223, %v2334, %v2338
      %v2341 = vshrl.u32 %v2019, 16
      %v2343 = vrot.slane %v2341, 4
      %v2344 = vshll.u32 %v2019, 16
      %v2346 = vrot.slane %v2344, 5
      %v2347 = vor.u32 %v2343, %v2346
      %v2348 = vrot.slane %v2347, 4
      %v2350 = vshll.u32 %v2020, 16
      %v2352 = vrot.slane %v2350, 5
      %v2353 = vsel %vm223, %v2348, %v2352
      %v2354 = vshrl.u32 %v2020, 16
      %v2356 = vrot.slane %v2354, 4
      %v2357 = vor.u32 %v2356, %v2352
      %v2358 = vrot.slane %v2357, 4
      %v2360 = vshll.u32 %v2021, 16
      %v2362 = vrot.slane %v2360, 5
      %v2363 = vsel %vm223, %v2358, %v2362
      %v2365 = vshrl.u32 %v2022, 16
      %v2367 = vrot.slane %v2365, 4
      %v2368 = vshll.u32 %v2022, 16
      %v2370 = vrot.slane %v2368, 5
      %v2371 = vor.u32 %v2367, %v2370
      %v2372 = vrot.slane %v2371, 4
      %v2374 = vshll.u32 %v2023, 16
      %v2376 = vrot.slane %v2374, 5
      %v2377 = vsel %vm223, %v2372, %v2376
      %v2378 = vshrl.u32 %v2023, 16
      %v2380 = vrot.slane %v2378, 4
      %v2381 = vor.u32 %v2380, %v2376
      %v2382 = vrot.slane %v2381, 4
      %v2384 = vshll.u32 %v2024, 16
      %v2386 = vrot.slane %v2384, 5
      %v2387 = vsel %vm223, %v2382, %v2386
      %v2389 = vshrl.u32 %v2025, 16
      %v2391 = vrot.slane %v2389, 4
      %v2392 = vshll.u32 %v2025, 16
      %v2394 = vrot.slane %v2392, 5
      %v2395 = vor.u32 %v2391, %v2394
      %v2396 = vrot.slane %v2395, 4
      %v2398 = vshll.u32 %v2026, 16
      %v2400 = vrot.slane %v2398, 5
      %v2401 = vsel %vm223, %v2396, %v2400
      %v2402 = vshrl.u32 %v2026, 16
      %v2404 = vrot.slane %v2402, 4
      %v2405 = vor.u32 %v2404, %v2400
      %v2406 = vrot.slane %v2405, 4
      %v2408 = vshll.u32 %v2027, 16
      %v2410 = vrot.slane %v2408, 5
      %v2411 = vsel %vm223, %v2406, %v2410
      %s2412 = scalar_lea.vmem %s1, 16
      %v2413 = vld [vmem:[%s2412] sm:$0x7]
      %v2414 = vunpack.c.l.b16 %v2041
      %v2415 = vunpack.c.l.b16 %v2051
      %v2416 = vunpack.c.l.b16 %v2065
      %v2417 = vunpack.c.l.b16 %v2075
      %v2418 = vunpack.c.l.b16 %v2089
      %v2419 = vunpack.c.l.b16 %v2099
      %v2420 = vunpack.c.l.b16 %v2113
      %v2421 = vunpack.c.l.b16 %v2123
      %v2422 = vunpack.c.l.b16 %v2137
      %v2423 = vunpack.c.l.b16 %v2147
      %v2424 = vunpack.c.l.b16 %v2161
      %v2425 = vunpack.c.l.b16 %v2171
      %v2426 = vunpack.c.l.b16 %v2185
      %v2427 = vunpack.c.l.b16 %v2195
      %v2428 = vunpack.c.l.b16 %v2209
      %v2429 = vunpack.c.l.b16 %v2219
      %v2430 = vunpack.c.l.b16 %v2233
      %v2431 = vunpack.c.l.b16 %v2243
      %v2432 = vunpack.c.l.b16 %v2257
      %v2433 = vunpack.c.l.b16 %v2267
      %v2434 = vunpack.c.l.b16 %v2281
      %v2435 = vunpack.c.l.b16 %v2291
      %v2436 = vunpack.c.l.b16 %v2305
      %v2437 = vunpack.c.l.b16 %v2315
      %v2438 = vunpack.c.l.b16 %v2329
      %v2439 = vunpack.c.l.b16 %v2339
      %v2440 = vunpack.c.l.b16 %v2353
      %v2441 = vunpack.c.l.b16 %v2363
      %v2442 = vunpack.c.l.b16 %v2377
      %v2443 = vunpack.c.l.b16 %v2387
      %v2444 = vunpack.c.l.b16 %v2401
      %v2445 = vunpack.c.l.b16 %v2411
      %v2446 = vpack.c.b16 %v2415, %v2414
      %v2447 = vpack.c.b16 %v2417, %v2416
      %v2448 = vpack.c.b16 %v2419, %v2418
      %v2449 = vpack.c.b16 %v2421, %v2420
      %v2450 = vpack.c.b16 %v2423, %v2422
      %v2451 = vpack.c.b16 %v2425, %v2424
      %v2452 = vpack.c.b16 %v2427, %v2426
      %v2453 = vpack.c.b16 %v2429, %v2428
      %v2454 = vpack.c.b16 %v2431, %v2430
      %v2455 = vpack.c.b16 %v2433, %v2432
      %v2456 = vpack.c.b16 %v2435, %v2434
      %v2457 = vpack.c.b16 %v2437, %v2436
      %v2458 = vpack.c.b16 %v2439, %v2438
      %v2459 = vpack.c.b16 %v2441, %v2440
      %v2460 = vpack.c.b16 %v2443, %v2442
      %v2461 = vpack.c.b16 %v2445, %v2444
      %v2463 = vsel %vm658, %v2446, 0
      %v2466 = vsel %vm658, %v2447, 0
      %v2469 = vsel %vm658, %v2448, 0
      %v2472 = vsel %vm658, %v2449, 0
      %v2475 = vsel %vm658, %v2450, 0
      %v2478 = vsel %vm658, %v2451, 0
      %v2481 = vsel %vm658, %v2452, 0
      %v2484 = vsel %vm658, %v2453, 0
      %v2487 = vsel %vm658, %v2454, 0
      %v2490 = vsel %vm658, %v2455, 0
      %v2493 = vsel %vm658, %v2456, 0
      %v2496 = vsel %vm658, %v2457, 0
      %v2499 = vsel %vm658, %v2458, 0
      %v2502 = vsel %vm658, %v2459, 0
      %v2505 = vsel %vm658, %v2460, 0
      %v2508 = vsel %vm658, %v2461, 0
      %v2511 = vsel %vm707, %v2413, 0
      %2513 = vmatprep.subr.bf16.mxu0 0
      %2514 = vmatpush1.bf16.msra.mxu0 %v2511
      %2515 = vmatprep.subr.bf16.mxu0 0
      %2516 = vmatpush1.bf16.msra.mxu0 0
      %2517 = vmatprep.subr.bf16.mxu0 0
      %2518 = vmatpush1.bf16.msra.mxu0 0
      %2519 = vmatprep.subr.bf16.mxu0 0
      %2520 = vmatpush1.bf16.msra.mxu0 0
      %2521 = vmatprep.subr.bf16.mxu0 0
      %2522 = vmatpush1.bf16.msra.mxu0 0
      %2523 = vmatprep.subr.bf16.mxu0 0
      %2524 = vmatpush1.bf16.msra.mxu0 0
      %2525 = vmatprep.subr.bf16.mxu0 0
      %2526 = vmatpush1.bf16.msra.mxu0 0
      %2527 = vmatprep.subr.bf16.mxu0 0
      %2528 = vmatpush1.bf16.msra.mxu0 0
      %2529 = vmatprep.subr.bf16.mxu0 0
      %2530 = vmatpush1.bf16.msra.mxu0 0
      %2531 = vmatprep.subr.bf16.mxu0 0
      %2532 = vmatpush1.bf16.msra.mxu0 0
      %2533 = vmatprep.subr.bf16.mxu0 0
      %2534 = vmatpush1.bf16.msra.mxu0 0
      %2535 = vmatprep.subr.bf16.mxu0 0
      %2536 = vmatpush1.bf16.msra.mxu0 0
      %2537 = vmatprep.subr.bf16.mxu0 0
      %2538 = vmatpush1.bf16.msra.mxu0 0
      %2539 = vmatprep.subr.bf16.mxu0 0
      %2540 = vmatpush1.bf16.msra.mxu0 0
      %2541 = vmatprep.subr.bf16.mxu0 0
      %2542 = vmatpush1.bf16.msra.mxu0 0
      %2543 = vmatprep.subr.bf16.mxu0 0
      %2544 = vmatpush1.bf16.msra.mxu0 0
      %2545 = vmatprep.mubr.bf16.mxu0 0
      %2546 = vmatmul.mubr.bf16.gmra.mrb[0].mxu0 %v2463
      %v2547 = vpop.f32.mrb[0].mxu0
      %v2548 = vadd.f32 0.0, %v2547
      %v2549 = vpop.f32.mrb[0].mxu0
      %v2550 = vpop.f32.mrb[0].mxu0
      %v2551 = vadd.f32 0.0, %v2550
      %v2552 = vpop.f32.mrb[0].mxu0
      %2553 = vmatprep.mubr.bf16.mxu0 0
      %2554 = vmatmul.mubr.bf16.gmra.mrb[0].mxu0 %v2466
      %v2555 = vpop.f32.mrb[0].mxu0
      %v2556 = vadd.f32 0.0, %v2555
      %v2557 = vpop.f32.mrb[0].mxu0
      %v2558 = vpop.f32.mrb[0].mxu0
      %v2559 = vadd.f32 0.0, %v2558
      %v2560 = vpop.f32.mrb[0].mxu0
      %2561 = vmatprep.mubr.bf16.mxu0 0
      %2562 = vmatmul.mubr.bf16.gmra.mrb[0].mxu0 %v2469
      %v2563 = vpop.f32.mrb[0].mxu0
      %v2564 = vadd.f32 0.0, %v2563
      %v2565 = vpop.f32.mrb[0].mxu0
      %v2566 = vpop.f32.mrb[0].mxu0
      %v2567 = vadd.f32 0.0, %v2566
      %v2568 = vpop.f32.mrb[0].mxu0
      %2569 = vmatprep.mubr.bf16.mxu0 0
      %2570 = vmatmul.mubr.bf16.gmra.mrb[0].mxu0 %v2472
      %v2571 = vpop.f32.mrb[0].mxu0
      %v2572 = vadd.f32 0.0, %v2571
      %v2573 = vpop.f32.mrb[0].mxu0
      %v2574 = vpop.f32.mrb[0].mxu0
      %v2575 = vadd.f32 0.0, %v2574
      %v2576 = vpop.f32.mrb[0].mxu0
      %2577 = vmatprep.mubr.bf16.mxu0 0
      %2578 = vmatmul.mubr.bf16.gmra.mrb[0].mxu0 %v2475
      %v2579 = vpop.f32.mrb[0].mxu0
      %v2580 = vadd.f32 0.0, %v2579
      %v2581 = vpop.f32.mrb[0].mxu0
      %v2582 = vpop.f32.mrb[0].mxu0
      %v2583 = vadd.f32 0.0, %v2582
      %v2584 = vpop.f32.mrb[0].mxu0
      %2585 = vmatprep.mubr.bf16.mxu0 0
      %2586 = vmatmul.mubr.bf16.gmra.mrb[0].mxu0 %v2478
      %v2587 = vpop.f32.mrb[0].mxu0
      %v2588 = vadd.f32 0.0, %v2587
      %v2589 = vpop.f32.mrb[0].mxu0
      %v2590 = vpop.f32.mrb[0].mxu0
      %v2591 = vadd.f32 0.0, %v2590
      %v2592 = vpop.f32.mrb[0].mxu0
      %2593 = vmatprep.mubr.bf16.mxu0 0
      %2594 = vmatmul.mubr.bf16.gmra.mrb[0].mxu0 %v2481
      %v2595 = vpop.f32.mrb[0].mxu0
      %v2596 = vadd.f32 0.0, %v2595
      %v2597 = vpop.f32.mrb[0].mxu0
      %v2598 = vpop.f32.mrb[0].mxu0
      %v2599 = vadd.f32 0.0, %v2598
      %v2600 = vpop.f32.mrb[0].mxu0
      %2601 = vmatprep.mubr.bf16.mxu0 0
      %2602 = vmatmul.mubr.bf16.gmra.mrb[0].mxu0 %v2484
      %v2603 = vpop.f32.mrb[0].mxu0
      %v2604 = vadd.f32 0.0, %v2603
      %v2605 = vpop.f32.mrb[0].mxu0
      %v2606 = vpop.f32.mrb[0].mxu0
      %v2607 = vadd.f32 0.0, %v2606
      %v2608 = vpop.f32.mrb[0].mxu0
      %2609 = vmatprep.mubr.bf16.mxu0 0
      %2610 = vmatmul.mubr.bf16.gmra.mrb[0].mxu0 %v2487
      %v2611 = vpop.f32.mrb[0].mxu0
      %v2612 = vadd.f32 0.0, %v2611
      %v2613 = vpop.f32.mrb[0].mxu0
      %v2614 = vpop.f32.mrb[0].mxu0
      %v2615 = vadd.f32 0.0, %v2614
      %v2616 = vpop.f32.mrb[0].mxu0
      %2617 = vmatprep.mubr.bf16.mxu0 0
      %2618 = vmatmul.mubr.bf16.gmra.mrb[0].mxu0 %v2490
      %v2619 = vpop.f32.mrb[0].mxu0
      %v2620 = vadd.f32 0.0, %v2619
      %v2621 = vpop.f32.mrb[0].mxu0
      %v2622 = vpop.f32.mrb[0].mxu0
      %v2623 = vadd.f32 0.0, %v2622
      %v2624 = vpop.f32.mrb[0].mxu0
      %2625 = vmatprep.mubr.bf16.mxu0 0
      %2626 = vmatmul.mubr.bf16.gmra.mrb[0].mxu0 %v2493
      %v2627 = vpop.f32.mrb[0].mxu0
      %v2628 = vadd.f32 0.0, %v2627
      %v2629 = vpop.f32.mrb[0].mxu0
      %v2630 = vpop.f32.mrb[0].mxu0
      %v2631 = vadd.f32 0.0, %v2630
      %v2632 = vpop.f32.mrb[0].mxu0
      %2633 = vmatprep.mubr.bf16.mxu0 0
      %2634 = vmatmul.mubr.bf16.gmra.mrb[0].mxu0 %v2496
      %v2635 = vpop.f32.mrb[0].mxu0
      %v2636 = vadd.f32 0.0, %v2635
      %v2637 = vpop.f32.mrb[0].mxu0
      %v2638 = vpop.f32.mrb[0].mxu0
      %v2639 = vadd.f32 0.0, %v2638
      %v2640 = vpop.f32.mrb[0].mxu0
      %2641 = vmatprep.mubr.bf16.mxu0 0
      %2642 = vmatmul.mubr.bf16.gmra.mrb[0].mxu0 %v2499
      %v2643 = vpop.f32.mrb[0].mxu0
      %v2644 = vadd.f32 0.0, %v2643
      %v2645 = vpop.f32.mrb[0].mxu0
      %v2646 = vpop.f32.mrb[0].mxu0
      %v2647 = vadd.f32 0.0, %v2646
      %v2648 = vpop.f32.mrb[0].mxu0
      %2649 = vmatprep.mubr.bf16.mxu0 0
      %2650 = vmatmul.mubr.bf16.gmra.mrb[0].mxu0 %v2502
      %v2651 = vpop.f32.mrb[0].mxu0
      %v2652 = vadd.f32 0.0, %v2651
      %v2653 = vpop.f32.mrb[0].mxu0
      %v2654 = vpop.f32.mrb[0].mxu0
      %v2655 = vadd.f32 0.0, %v2654
      %v2656 = vpop.f32.mrb[0].mxu0
      %2657 = vmatprep.mubr.bf16.mxu0 0
      %2658 = vmatmul.mubr.bf16.gmra.mrb[0].mxu0 %v2505
      %v2659 = vpop.f32.mrb[0].mxu0
      %v2660 = vadd.f32 0.0, %v2659
      %v2661 = vpop.f32.mrb[0].mxu0
      %v2662 = vpop.f32.mrb[0].mxu0
      %v2663 = vadd.f32 0.0, %v2662
      %v2664 = vpop.f32.mrb[0].mxu0
      %2665 = vmatprep.mubr.bf16.mxu0 0
      %2666 = vmatmul.mubr.bf16.gmra.mrb[0].mxu0 %v2508
      %v2667 = vpop.f32.mrb[0].mxu0
      %v2668 = vadd.f32 0.0, %v2667
      %v2669 = vpop.f32.mrb[0].mxu0
      %v2670 = vpop.f32.mrb[0].mxu0
      %v2671 = vadd.f32 0.0, %v2670
      %v2672 = vpop.f32.mrb[0].mxu0
      %2673 = vdwg.mxu0
      %v2674 = vadd.f32 %v1948, %v2548
      %v2675 = vadd.f32 %v1949, %v2551
      %v2676 = vadd.f32 %v1950, %v2556
      %v2677 = vadd.f32 %v1951, %v2559
      %v2678 = vadd.f32 %v1952, %v2564
      %v2679 = vadd.f32 %v1953, %v2567
      %v2680 = vadd.f32 %v1954, %v2572
      %v2681 = vadd.f32 %v1955, %v2575
      %v2682 = vadd.f32 %v1956, %v2580
      %v2683 = vadd.f32 %v1957, %v2583
      %v2684 = vadd.f32 %v1958, %v2588
      %v2685 = vadd.f32 %v1959, %v2591
      %v2686 = vadd.f32 %v1960, %v2596
      %v2687 = vadd.f32 %v1961, %v2599
      %v2688 = vadd.f32 %v1962, %v2604
      %v2689 = vadd.f32 %v1963, %v2607
      %v2690 = vadd.f32 %v1964, %v2612
      %v2691 = vadd.f32 %v1965, %v2615
      %v2692 = vadd.f32 %v1966, %v2620
      %v2693 = vadd.f32 %v1967, %v2623
      %v2694 = vadd.f32 %v1968, %v2628
      %v2695 = vadd.f32 %v1969, %v2631
      %v2696 = vadd.f32 %v1970, %v2636
      %v2697 = vadd.f32 %v1971, %v2639
      %v2698 = vadd.f32 %v1972, %v2644
      %v2699 = vadd.f32 %v1973, %v2647
      %v2700 = vadd.f32 %v1974, %v2652
      %v2701 = vadd.f32 %v1975, %v2655
      %v2702 = vadd.f32 %v1976, %v2660
      %v2703 = vadd.f32 %v1977, %v2663
      %v2704 = vadd.f32 %v1978, %v2668
      %v2705 = vadd.f32 %v1979, %v2671
      %v2706 = vld [vmem:[%s1621] sm:$0xe]
      %v2707 = vld [vmem:[%s1621 + $0xc] sm:$0xe]
      %v2708 = vld [vmem:[%s1621 + $0x18] sm:$0xe]
      %v2709 = vld [vmem:[%s1621 + $0x24] sm:$0xe]
      %v2710 = vld [vmem:[%s1621 + $0x30] sm:$0xe]
      %v2711 = vld [vmem:[%s1621 + $0x3c] sm:$0xe]
      %v2712 = vld [vmem:[%s1621 + $0x48] sm:$0xe]
      %v2713 = vld [vmem:[%s1621 + $0x54] sm:$0xe]
      %v2714 = vld [vmem:[%s1621 + $0x60] sm:$0xe]
      %v2715 = vld [vmem:[%s1621 + $0x6c] sm:$0xe]
      %v2716 = vld [vmem:[%s1621 + $0x78] sm:$0xe]
      %v2717 = vld [vmem:[%s1621 + $0x84] sm:$0xe]
      %v2718 = vld [vmem:[%s1621 + $0x90] sm:$0xe]
      %v2719 = vld [vmem:[%s1621 + $0x9c] sm:$0xe]
      %v2720 = vld [vmem:[%s1621 + $0xa8] sm:$0xe]
      %v2721 = vld [vmem:[%s1621 + $0xb4] sm:$0xe]
      %v2770 = vrot.slane %v2706, 5
      %v2771 = vrot.slane %v2770, 4
      %v2772 = vrot.slane %v1981, 5
      %v2773 = vsel %vm1214, %v2771, %v2772
      %v2774 = vrot.slane %v2772, 4
      %v2775 = vrot.slane %v1982, 5
      %v2776 = vsel %vm1214, %v2774, %v2775
      %v2777 = vrot.slane %v2707, 5
      %v2778 = vrot.slane %v2777, 4
      %v2779 = vrot.slane %v1984, 5
      %v2780 = vsel %vm1214, %v2778, %v2779
      %v2781 = vrot.slane %v2779, 4
      %v2782 = vrot.slane %v1985, 5
      %v2783 = vsel %vm1214, %v2781, %v2782
      %v2784 = vrot.slane %v2708, 5
      %v2785 = vrot.slane %v2784, 4
      %v2786 = vrot.slane %v1987, 5
      %v2787 = vsel %vm1214, %v2785, %v2786
      %v2788 = vrot.slane %v2786, 4
      %v2789 = vrot.slane %v1988, 5
      %v2790 = vsel %vm1214, %v2788, %v2789
      %v2791 = vrot.slane %v2709, 5
      %v2792 = vrot.slane %v2791, 4
      %v2793 = vrot.slane %v1990, 5
      %v2794 = vsel %vm1214, %v2792, %v2793
      %v2795 = vrot.slane %v2793, 4
      %v2796 = vrot.slane %v1991, 5
      %v2797 = vsel %vm1214, %v2795, %v2796
      %v2798 = vrot.slane %v2710, 5
      %v2799 = vrot.slane %v2798, 4
      %v2800 = vrot.slane %v1993, 5
      %v2801 = vsel %vm1214, %v2799, %v2800
      %v2802 = vrot.slane %v2800, 4
      %v2803 = vrot.slane %v1994, 5
      %v2804 = vsel %vm1214, %v2802, %v2803
      %v2805 = vrot.slane %v2711, 5
      %v2806 = vrot.slane %v2805, 4
      %v2807 = vrot.slane %v1996, 5
      %v2808 = vsel %vm1214, %v2806, %v2807
      %v2809 = vrot.slane %v2807, 4
      %v2810 = vrot.slane %v1997, 5
      %v2811 = vsel %vm1214, %v2809, %v2810
      %v2812 = vrot.slane %v2712, 5
      %v2813 = vrot.slane %v2812, 4
      %v2814 = vrot.slane %v1999, 5
      %v2815 = vsel %vm1214, %v2813, %v2814
      %v2816 = vrot.slane %v2814, 4
      %v2817 = vrot.slane %v2000, 5
      %v2818 = vsel %vm1214, %v2816, %v2817
      %v2819 = vrot.slane %v2713, 5
      %v2820 = vrot.slane %v2819, 4
      %v2821 = vrot.slane %v2002, 5
      %v2822 = vsel %vm1214, %v2820, %v2821
      %v2823 = vrot.slane %v2821, 4
      %v2824 = vrot.slane %v2003, 5
      %v2825 = vsel %vm1214, %v2823, %v2824
      %v2826 = vrot.slane %v2714, 5
      %v2827 = vrot.slane %v2826, 4
      %v2828 = vrot.slane %v2005, 5
      %v2829 = vsel %vm1214, %v2827, %v2828
      %v2830 = vrot.slane %v2828, 4
      %v2831 = vrot.slane %v2006, 5
      %v2832 = vsel %vm1214, %v2830, %v2831
      %v2833 = vrot.slane %v2715, 5
      %v2834 = vrot.slane %v2833, 4
      %v2835 = vrot.slane %v2008, 5
      %v2836 = vsel %vm1214, %v2834, %v2835
      %v2837 = vrot.slane %v2835, 4
      %v2838 = vrot.slane %v2009, 5
      %v2839 = vsel %vm1214, %v2837, %v2838
      %v2840 = vrot.slane %v2716, 5
      %v2841 = vrot.slane %v2840, 4
      %v2842 = vrot.slane %v2011, 5
      %v2843 = vsel %vm1214, %v2841, %v2842
      %v2844 = vrot.slane %v2842, 4
      %v2845 = vrot.slane %v2012, 5
      %v2846 = vsel %vm1214, %v2844, %v2845
      %v2847 = vrot.slane %v2717, 5
      %v2848 = vrot.slane %v2847, 4
      %v2849 = vrot.slane %v2014, 5
      %v2850 = vsel %vm1214, %v2848, %v2849
      %v2851 = vrot.slane %v2849, 4
      %v2852 = vrot.slane %v2015, 5
      %v2853 = vsel %vm1214, %v2851, %v2852
      %v2854 = vrot.slane %v2718, 5
      %v2855 = vrot.slane %v2854, 4
      %v2856 = vrot.slane %v2017, 5
      %v2857 = vsel %vm1214, %v2855, %v2856
      %v2858 = vrot.slane %v2856, 4
      %v2859 = vrot.slane %v2018, 5
      %v2860 = vsel %vm1214, %v2858, %v2859
      %v2861 = vrot.slane %v2719, 5
      %v2862 = vrot.slane %v2861, 4
      %v2863 = vrot.slane %v2020, 5
      %v2864 = vsel %vm1214, %v2862, %v2863
      %v2865 = vrot.slane %v2863, 4
      %v2866 = vrot.slane %v2021, 5
      %v2867 = vsel %vm1214, %v2865, %v2866
      %v2868 = vrot.slane %v2720, 5
      %v2869 = vrot.slane %v2868, 4
      %v2870 = vrot.slane %v2023, 5
      %v2871 = vsel %vm1214, %v2869, %v2870
      %v2872 = vrot.slane %v2870, 4
      %v2873 = vrot.slane %v2024, 5
      %v2874 = vsel %vm1214, %v2872, %v2873
      %v2875 = vrot.slane %v2721, 5
      %v2876 = vrot.slane %v2875, 4
      %v2877 = vrot.slane %v2026, 5
      %v2878 = vsel %vm1214, %v2876, %v2877
      %v2879 = vrot.slane %v2877, 4
      %v2880 = vrot.slane %v2027, 5
      %v2881 = vsel %vm1214, %v2879, %v2880
      %s2882 = scalar_lea.vmem %s1, 20
      %v2883 = vld [vmem:[%s2882] sm:$0x7]
      %v2884 = vunpack.c.l.b16 %v2773
      %v2885 = vunpack.c.l.b16 %v2776
      %v2886 = vunpack.c.l.b16 %v2780
      %v2887 = vunpack.c.l.b16 %v2783
      %v2888 = vunpack.c.l.b16 %v2787
      %v2889 = vunpack.c.l.b16 %v2790
      %v2890 = vunpack.c.l.b16 %v2794
      %v2891 = vunpack.c.l.b16 %v2797
      %v2892 = vunpack.c.l.b16 %v2801
      %v2893 = vunpack.c.l.b16 %v2804
      %v2894 = vunpack.c.l.b16 %v2808
      %v2895 = vunpack.c.l.b16 %v2811
      %v2896 = vunpack.c.l.b16 %v2815
      %v2897 = vunpack.c.l.b16 %v2818
      %v2898 = vunpack.c.l.b16 %v2822
      %v2899 = vunpack.c.l.b16 %v2825
      %v2900 = vunpack.c.l.b16 %v2829
      %v2901 = vunpack.c.l.b16 %v2832
      %v2902 = vunpack.c.l.b16 %v2836
      %v2903 = vunpack.c.l.b16 %v2839
      %v2904 = vunpack.c.l.b16 %v2843
      %v2905 = vunpack.c.l.b16 %v2846
      %v2906 = vunpack.c.l.b16 %v2850
      %v2907 = vunpack.c.l.b16 %v2853
      %v2908 = vunpack.c.l.b16 %v2857
      %v2909 = vunpack.c.l.b16 %v2860
      %v2910 = vunpack.c.l.b16 %v2864
      %v2911 = vunpack.c.l.b16 %v2867
      %v2912 = vunpack.c.l.b16 %v2871
      %v2913 = vunpack.c.l.b16 %v2874
      %v2914 = vunpack.c.l.b16 %v2878
      %v2915 = vunpack.c.l.b16 %v2881
      %v2916 = vpack.c.b16 %v2885, %v2884
      %v2917 = vpack.c.b16 %v2887, %v2886
      %v2918 = vpack.c.b16 %v2889, %v2888
      %v2919 = vpack.c.b16 %v2891, %v2890
      %v2920 = vpack.c.b16 %v2893, %v2892
      %v2921 = vpack.c.b16 %v2895, %v2894
      %v2922 = vpack.c.b16 %v2897, %v2896
      %v2923 = vpack.c.b16 %v2899, %v2898
      %v2924 = vpack.c.b16 %v2901, %v2900
      %v2925 = vpack.c.b16 %v2903, %v2902
      %v2926 = vpack.c.b16 %v2905, %v2904
      %v2927 = vpack.c.b16 %v2907, %v2906
      %v2928 = vpack.c.b16 %v2909, %v2908
      %v2929 = vpack.c.b16 %v2911, %v2910
      %v2930 = vpack.c.b16 %v2913, %v2912
      %v2931 = vpack.c.b16 %v2915, %v2914
      %v2933 = vsel %vm658, %v2916, 0
      %v2936 = vsel %vm658, %v2917, 0
      %v2939 = vsel %vm658, %v2918, 0
      %v2942 = vsel %vm658, %v2919, 0
      %v2945 = vsel %vm658, %v2920, 0
      %v2948 = vsel %vm658, %v2921, 0
      %v2951 = vsel %vm658, %v2922, 0
      %v2954 = vsel %vm658, %v2923, 0
      %v2957 = vsel %vm658, %v2924, 0
      %v2960 = vsel %vm658, %v2925, 0
      %v2963 = vsel %vm658, %v2926, 0
      %v2966 = vsel %vm658, %v2927, 0
      %v2969 = vsel %vm658, %v2928, 0
      %v2972 = vsel %vm658, %v2929, 0
      %v2975 = vsel %vm658, %v2930, 0
      %v2978 = vsel %vm658, %v2931, 0
      %v2981 = vsel %vm707, %v2883, 0
      %2983 = vmatprep.subr.bf16.mxu0 0
      %2984 = vmatpush1.bf16.msra.mxu0 %v2981
      %2985 = vmatprep.subr.bf16.mxu0 0
      %2986 = vmatpush1.bf16.msra.mxu0 0
      %2987 = vmatprep.subr.bf16.mxu0 0
      %2988 = vmatpush1.bf16.msra.mxu0 0
      %2989 = vmatprep.subr.bf16.mxu0 0
      %2990 = vmatpush1.bf16.msra.mxu0 0
      %2991 = vmatprep.subr.bf16.mxu0 0
      %2992 = vmatpush1.bf16.msra.mxu0 0
      %2993 = vmatprep.subr.bf16.mxu0 0
      %2994 = vmatpush1.bf16.msra.mxu0 0
      %2995 = vmatprep.subr.bf16.mxu0 0
      %2996 = vmatpush1.bf16.msra.mxu0 0
      %2997 = vmatprep.subr.bf16.mxu0 0
      %2998 = vmatpush1.bf16.msra.mxu0 0
      %2999 = vmatprep.subr.bf16.mxu0 0
      %3000 = vmatpush1.bf16.msra.mxu0 0
      %3001 = vmatprep.subr.bf16.mxu0 0
      %3002 = vmatpush1.bf16.msra.mxu0 0
      %3003 = vmatprep.subr.bf16.mxu0 0
      %3004 = vmatpush1.bf16.msra.mxu0 0
      %3005 = vmatprep.subr.bf16.mxu0 0
      %3006 = vmatpush1.bf16.msra.mxu0 0
      %3007 = vmatprep.subr.bf16.mxu0 0
      %3008 = vmatpush1.bf16.msra.mxu0 0
      %3009 = vmatprep.subr.bf16.mxu0 0
      %3010 = vmatpush1.bf16.msra.mxu0 0
      %3011 = vmatprep.subr.bf16.mxu0 0
      %3012 = vmatpush1.bf16.msra.mxu0 0
      %3013 = vmatprep.subr.bf16.mxu0 0
      %3014 = vmatpush1.bf16.msra.mxu0 0
      %3015 = vmatprep.mubr.bf16.mxu0 0
      %3016 = vmatmul.mubr.bf16.gmra.mrb[0].mxu0 %v2933
      %v3017 = vpop.f32.mrb[0].mxu0
      %v3018 = vadd.f32 0.0, %v3017
      %v3019 = vpop.f32.mrb[0].mxu0
      %v3020 = vpop.f32.mrb[0].mxu0
      %v3021 = vadd.f32 0.0, %v3020
      %v3022 = vpop.f32.mrb[0].mxu0
      %3023 = vmatprep.mubr.bf16.mxu0 0
      %3024 = vmatmul.mubr.bf16.gmra.mrb[0].mxu0 %v2936
      %v3025 = vpop.f32.mrb[0].mxu0
      %v3026 = vadd.f32 0.0, %v3025
      %v3027 = vpop.f32.mrb[0].mxu0
      %v3028 = vpop.f32.mrb[0].mxu0
      %v3029 = vadd.f32 0.0, %v3028
      %v3030 = vpop.f32.mrb[0].mxu0
      %3031 = vmatprep.mubr.bf16.mxu0 0
      %3032 = vmatmul.mubr.bf16.gmra.mrb[0].mxu0 %v2939
      %v3033 = vpop.f32.mrb[0].mxu0
      %v3034 = vadd.f32 0.0, %v3033
      %v3035 = vpop.f32.mrb[0].mxu0
      %v3036 = vpop.f32.mrb[0].mxu0
      %v3037 = vadd.f32 0.0, %v3036
      %v3038 = vpop.f32.mrb[0].mxu0
      %3039 = vmatprep.mubr.bf16.mxu0 0
      %3040 = vmatmul.mubr.bf16.gmra.mrb[0].mxu0 %v2942
      %v3041 = vpop.f32.mrb[0].mxu0
      %v3042 = vadd.f32 0.0, %v3041
      %v3043 = vpop.f32.mrb[0].mxu0
      %v3044 = vpop.f32.mrb[0].mxu0
      %v3045 = vadd.f32 0.0, %v3044
      %v3046 = vpop.f32.mrb[0].mxu0
      %3047 = vmatprep.mubr.bf16.mxu0 0
      %3048 = vmatmul.mubr.bf16.gmra.mrb[0].mxu0 %v2945
      %v3049 = vpop.f32.mrb[0].mxu0
      %v3050 = vadd.f32 0.0, %v3049
      %v3051 = vpop.f32.mrb[0].mxu0
      %v3052 = vpop.f32.mrb[0].mxu0
      %v3053 = vadd.f32 0.0, %v3052
      %v3054 = vpop.f32.mrb[0].mxu0
      %3055 = vmatprep.mubr.bf16.mxu0 0
      %3056 = vmatmul.mubr.bf16.gmra.mrb[0].mxu0 %v2948
      %v3057 = vpop.f32.mrb[0].mxu0
      %v3058 = vadd.f32 0.0, %v3057
      %v3059 = vpop.f32.mrb[0].mxu0
      %v3060 = vpop.f32.mrb[0].mxu0
      %v3061 = vadd.f32 0.0, %v3060
      %v3062 = vpop.f32.mrb[0].mxu0
      %3063 = vmatprep.mubr.bf16.mxu0 0
      %3064 = vmatmul.mubr.bf16.gmra.mrb[0].mxu0 %v2951
      %v3065 = vpop.f32.mrb[0].mxu0
      %v3066 = vadd.f32 0.0, %v3065
      %v3067 = vpop.f32.mrb[0].mxu0
      %v3068 = vpop.f32.mrb[0].mxu0
      %v3069 = vadd.f32 0.0, %v3068
      %v3070 = vpop.f32.mrb[0].mxu0
      %3071 = vmatprep.mubr.bf16.mxu0 0
      %3072 = vmatmul.mubr.bf16.gmra.mrb[0].mxu0 %v2954
      %v3073 = vpop.f32.mrb[0].mxu0
      %v3074 = vadd.f32 0.0, %v3073
      %v3075 = vpop.f32.mrb[0].mxu0
      %v3076 = vpop.f32.mrb[0].mxu0
      %v3077 = vadd.f32 0.0, %v3076
      %v3078 = vpop.f32.mrb[0].mxu0
      %3079 = vmatprep.mubr.bf16.mxu0 0
      %3080 = vmatmul.mubr.bf16.gmra.mrb[0].mxu0 %v2957
      %v3081 = vpop.f32.mrb[0].mxu0
      %v3082 = vadd.f32 0.0, %v3081
      %v3083 = vpop.f32.mrb[0].mxu0
      %v3084 = vpop.f32.mrb[0].mxu0
      %v3085 = vadd.f32 0.0, %v3084
      %v3086 = vpop.f32.mrb[0].mxu0
      %3087 = vmatprep.mubr.bf16.mxu0 0
      %3088 = vmatmul.mubr.bf16.gmra.mrb[0].mxu0 %v2960
      %v3089 = vpop.f32.mrb[0].mxu0
      %v3090 = vadd.f32 0.0, %v3089
      %v3091 = vpop.f32.mrb[0].mxu0
      %v3092 = vpop.f32.mrb[0].mxu0
      %v3093 = vadd.f32 0.0, %v3092
      %v3094 = vpop.f32.mrb[0].mxu0
      %3095 = vmatprep.mubr.bf16.mxu0 0
      %3096 = vmatmul.mubr.bf16.gmra.mrb[0].mxu0 %v2963
      %v3097 = vpop.f32.mrb[0].mxu0
      %v3098 = vadd.f32 0.0, %v3097
      %v3099 = vpop.f32.mrb[0].mxu0
      %v3100 = vpop.f32.mrb[0].mxu0
      %v3101 = vadd.f32 0.0, %v3100
      %v3102 = vpop.f32.mrb[0].mxu0
      %3103 = vmatprep.mubr.bf16.mxu0 0
      %3104 = vmatmul.mubr.bf16.gmra.mrb[0].mxu0 %v2966
      %v3105 = vpop.f32.mrb[0].mxu0
      %v3106 = vadd.f32 0.0, %v3105
      %v3107 = vpop.f32.mrb[0].mxu0
      %v3108 = vpop.f32.mrb[0].mxu0
      %v3109 = vadd.f32 0.0, %v3108
      %v3110 = vpop.f32.mrb[0].mxu0
      %3111 = vmatprep.mubr.bf16.mxu0 0
      %3112 = vmatmul.mubr.bf16.gmra.mrb[0].mxu0 %v2969
      %v3113 = vpop.f32.mrb[0].mxu0
      %v3114 = vadd.f32 0.0, %v3113
      %v3115 = vpop.f32.mrb[0].mxu0
      %v3116 = vpop.f32.mrb[0].mxu0
      %v3117 = vadd.f32 0.0, %v3116
      %v3118 = vpop.f32.mrb[0].mxu0
      %3119 = vmatprep.mubr.bf16.mxu0 0
      %3120 = vmatmul.mubr.bf16.gmra.mrb[0].mxu0 %v2972
      %v3121 = vpop.f32.mrb[0].mxu0
      %v3122 = vadd.f32 0.0, %v3121
      %v3123 = vpop.f32.mrb[0].mxu0
      %v3124 = vpop.f32.mrb[0].mxu0
      %v3125 = vadd.f32 0.0, %v3124
      %v3126 = vpop.f32.mrb[0].mxu0
      %3127 = vmatprep.mubr.bf16.mxu0 0
      %3128 = vmatmul.mubr.bf16.gmra.mrb[0].mxu0 %v2975
      %v3129 = vpop.f32.mrb[0].mxu0
      %v3130 = vadd.f32 0.0, %v3129
      %v3131 = vpop.f32.mrb[0].mxu0
      %v3132 = vpop.f32.mrb[0].mxu0
      %v3133 = vadd.f32 0.0, %v3132
      %v3134 = vpop.f32.mrb[0].mxu0
      %3135 = vmatprep.mubr.bf16.mxu0 0
      %3136 = vmatmul.mubr.bf16.gmra.mrb[0].mxu0 %v2978
      %v3137 = vpop.f32.mrb[0].mxu0
      %v3138 = vadd.f32 0.0, %v3137
      %v3139 = vpop.f32.mrb[0].mxu0
      %v3140 = vpop.f32.mrb[0].mxu0
      %v3141 = vadd.f32 0.0, %v3140
      %v3142 = vpop.f32.mrb[0].mxu0
      %3143 = vdwg.mxu0
      %v3144 = vadd.f32 %v2674, %v3018
      %v3145 = vadd.f32 %v2675, %v3021
      %v3146 = vadd.f32 %v2676, %v3026
      %v3147 = vadd.f32 %v2677, %v3029
      %v3148 = vadd.f32 %v2678, %v3034
      %v3149 = vadd.f32 %v2679, %v3037
      %v3150 = vadd.f32 %v2680, %v3042
      %v3151 = vadd.f32 %v2681, %v3045
      %v3152 = vadd.f32 %v2682, %v3050
      %v3153 = vadd.f32 %v2683, %v3053
      %v3154 = vadd.f32 %v2684, %v3058
      %v3155 = vadd.f32 %v2685, %v3061
      %v3156 = vadd.f32 %v2686, %v3066
      %v3157 = vadd.f32 %v2687, %v3069
      %v3158 = vadd.f32 %v2688, %v3074
      %v3159 = vadd.f32 %v2689, %v3077
      %v3160 = vadd.f32 %v2690, %v3082
      %v3161 = vadd.f32 %v2691, %v3085
      %v3162 = vadd.f32 %v2692, %v3090
      %v3163 = vadd.f32 %v2693, %v3093
      %v3164 = vadd.f32 %v2694, %v3098
      %v3165 = vadd.f32 %v2695, %v3101
      %v3166 = vadd.f32 %v2696, %v3106
      %v3167 = vadd.f32 %v2697, %v3109
      %v3168 = vadd.f32 %v2698, %v3114
      %v3169 = vadd.f32 %v2699, %v3117
      %v3170 = vadd.f32 %v2700, %v3122
      %v3171 = vadd.f32 %v2701, %v3125
      %v3172 = vadd.f32 %v2702, %v3130
      %v3173 = vadd.f32 %v2703, %v3133
      %v3174 = vadd.f32 %v2704, %v3138
      %v3175 = vadd.f32 %v2705, %v3141
      %s3176 = scalar_lea.vmem %s165, 24
      %v3177 = vld [vmem:[%s3176] sm:$0xf]
      %v3178 = vld [vmem:[%s3176 + $0x4] sm:$0xf]
      %v3179 = vld [vmem:[%s3176 + $0xc] sm:$0xf]
      %v3180 = vld [vmem:[%s3176 + $0x10] sm:$0xf]
      %v3181 = vld [vmem:[%s3176 + $0x18] sm:$0xf]
      %v3182 = vld [vmem:[%s3176 + $0x1c] sm:$0xf]
      %v3183 = vld [vmem:[%s3176 + $0x24] sm:$0xf]
      %v3184 = vld [vmem:[%s3176 + $0x28] sm:$0xf]
      %v3185 = vld [vmem:[%s3176 + $0x30] sm:$0xf]
      %v3186 = vld [vmem:[%s3176 + $0x34] sm:$0xf]
      %v3187 = vld [vmem:[%s3176 + $0x3c] sm:$0xf]
      %v3188 = vld [vmem:[%s3176 + $0x40] sm:$0xf]
      %v3189 = vld [vmem:[%s3176 + $0x48] sm:$0xf]
      %v3190 = vld [vmem:[%s3176 + $0x4c] sm:$0xf]
      %v3191 = vld [vmem:[%s3176 + $0x54] sm:$0xf]
      %v3192 = vld [vmem:[%s3176 + $0x58] sm:$0xf]
      %v3193 = vld [vmem:[%s3176 + $0x60] sm:$0xf]
      %v3194 = vld [vmem:[%s3176 + $0x64] sm:$0xf]
      %v3195 = vld [vmem:[%s3176 + $0x6c] sm:$0xf]
      %v3196 = vld [vmem:[%s3176 + $0x70] sm:$0xf]
      %v3197 = vld [vmem:[%s3176 + $0x78] sm:$0xf]
      %v3198 = vld [vmem:[%s3176 + $0x7c] sm:$0xf]
      %v3199 = vld [vmem:[%s3176 + $0x84] sm:$0xf]
      %v3200 = vld [vmem:[%s3176 + $0x88] sm:$0xf]
      %v3201 = vld [vmem:[%s3176 + $0x90] sm:$0xf]
      %v3202 = vld [vmem:[%s3176 + $0x94] sm:$0xf]
      %v3203 = vld [vmem:[%s3176 + $0x9c] sm:$0xf]
      %v3204 = vld [vmem:[%s3176 + $0xa0] sm:$0xf]
      %v3205 = vld [vmem:[%s3176 + $0xa8] sm:$0xf]
      %v3206 = vld [vmem:[%s3176 + $0xac] sm:$0xf]
      %v3207 = vld [vmem:[%s3176 + $0xb4] sm:$0xf]
      %v3208 = vld [vmem:[%s3176 + $0xb8] sm:$0xf]
      %s3209 = scalar_lea.vmem %s1, 24
      %v3210 = vld [vmem:[%s3209] sm:$0x7]
      %v3243 = vunpack.c.l.b16 %v3177
      %v3244 = vunpack.c.l.b16 %v3178
      %v3245 = vunpack.c.l.b16 %v3179
      %v3246 = vunpack.c.l.b16 %v3180
      %v3247 = vunpack.c.l.b16 %v3181
      %v3248 = vunpack.c.l.b16 %v3182
      %v3249 = vunpack.c.l.b16 %v3183
      %v3250 = vunpack.c.l.b16 %v3184
      %v3251 = vunpack.c.l.b16 %v3185
      %v3252 = vunpack.c.l.b16 %v3186
      %v3253 = vunpack.c.l.b16 %v3187
      %v3254 = vunpack.c.l.b16 %v3188
      %v3255 = vunpack.c.l.b16 %v3189
      %v3256 = vunpack.c.l.b16 %v3190
      %v3257 = vunpack.c.l.b16 %v3191
      %v3258 = vunpack.c.l.b16 %v3192
      %v3259 = vunpack.c.l.b16 %v3193
      %v3260 = vunpack.c.l.b16 %v3194
      %v3261 = vunpack.c.l.b16 %v3195
      %v3262 = vunpack.c.l.b16 %v3196
      %v3263 = vunpack.c.l.b16 %v3197
      %v3264 = vunpack.c.l.b16 %v3198
      %v3265 = vunpack.c.l.b16 %v3199
      %v3266 = vunpack.c.l.b16 %v3200
      %v3267 = vunpack.c.l.b16 %v3201
      %v3268 = vunpack.c.l.b16 %v3202
      %v3269 = vunpack.c.l.b16 %v3203
      %v3270 = vunpack.c.l.b16 %v3204
      %v3271 = vunpack.c.l.b16 %v3205
      %v3272 = vunpack.c.l.b16 %v3206
      %v3273 = vunpack.c.l.b16 %v3207
      %v3274 = vunpack.c.l.b16 %v3208
      %v3275 = vpack.c.b16 %v3244, %v3243
      %v3276 = vpack.c.b16 %v3246, %v3245
      %v3277 = vpack.c.b16 %v3248, %v3247
      %v3278 = vpack.c.b16 %v3250, %v3249
      %v3279 = vpack.c.b16 %v3252, %v3251
      %v3280 = vpack.c.b16 %v3254, %v3253
      %v3281 = vpack.c.b16 %v3256, %v3255
      %v3282 = vpack.c.b16 %v3258, %v3257
      %v3283 = vpack.c.b16 %v3260, %v3259
      %v3284 = vpack.c.b16 %v3262, %v3261
      %v3285 = vpack.c.b16 %v3264, %v3263
      %v3286 = vpack.c.b16 %v3266, %v3265
      %v3287 = vpack.c.b16 %v3268, %v3267
      %v3288 = vpack.c.b16 %v3270, %v3269
      %v3289 = vpack.c.b16 %v3272, %v3271
      %v3290 = vpack.c.b16 %v3274, %v3273
      %v3292 = vsel %vm658, %v3275, 0
      %v3295 = vsel %vm658, %v3276, 0
      %v3298 = vsel %vm658, %v3277, 0
      %v3301 = vsel %vm658, %v3278, 0
      %v3304 = vsel %vm658, %v3279, 0
      %v3307 = vsel %vm658, %v3280, 0
      %v3310 = vsel %vm658, %v3281, 0
      %v3313 = vsel %vm658, %v3282, 0
      %v3316 = vsel %vm658, %v3283, 0
      %v3319 = vsel %vm658, %v3284, 0
      %v3322 = vsel %vm658, %v3285, 0
      %v3325 = vsel %vm658, %v3286, 0
      %v3328 = vsel %vm658, %v3287, 0
      %v3331 = vsel %vm658, %v3288, 0
      %v3334 = vsel %vm658, %v3289, 0
      %v3337 = vsel %vm658, %v3290, 0
      %v3340 = vsel %vm707, %v3210, 0
      %3342 = vmatprep.subr.bf16.mxu0 0
      %3343 = vmatpush1.bf16.msra.mxu0 %v3340
      %3344 = vmatprep.subr.bf16.mxu0 0
      %3345 = vmatpush1.bf16.msra.mxu0 0
      %3346 = vmatprep.subr.bf16.mxu0 0
      %3347 = vmatpush1.bf16.msra.mxu0 0
      %3348 = vmatprep.subr.bf16.mxu0 0
      %3349 = vmatpush1.bf16.msra.mxu0 0
      %3350 = vmatprep.subr.bf16.mxu0 0
      %3351 = vmatpush1.bf16.msra.mxu0 0
      %3352 = vmatprep.subr.bf16.mxu0 0
      %3353 = vmatpush1.bf16.msra.mxu0 0
      %3354 = vmatprep.subr.bf16.mxu0 0
      %3355 = vmatpush1.bf16.msra.mxu0 0
      %3356 = vmatprep.subr.bf16.mxu0 0
      %3357 = vmatpush1.bf16.msra.mxu0 0
      %3358 = vmatprep.subr.bf16.mxu0 0
      %3359 = vmatpush1.bf16.msra.mxu0 0
      %3360 = vmatprep.subr.bf16.mxu0 0
      %3361 = vmatpush1.bf16.msra.mxu0 0
      %3362 = vmatprep.subr.bf16.mxu0 0
      %3363 = vmatpush1.bf16.msra.mxu0 0
      %3364 = vmatprep.subr.bf16.mxu0 0
      %3365 = vmatpush1.bf16.msra.mxu0 0
      %3366 = vmatprep.subr.bf16.mxu0 0
      %3367 = vmatpush1.bf16.msra.mxu0 0
      %3368 = vmatprep.subr.bf16.mxu0 0
      %3369 = vmatpush1.bf16.msra.mxu0 0
      %3370 = vmatprep.subr.bf16.mxu0 0
      %3371 = vmatpush1.bf16.msra.mxu0 0
      %3372 = vmatprep.subr.bf16.mxu0 0
      %3373 = vmatpush1.bf16.msra.mxu0 0
      %3374 = vmatprep.mubr.bf16.mxu0 0
      %3375 = vmatmul.mubr.bf16.gmra.mrb[0].mxu0 %v3292
      %v3376 = vpop.f32.mrb[0].mxu0
      %v3377 = vadd.f32 0.0, %v3376
      %v3378 = vpop.f32.mrb[0].mxu0
      %v3379 = vpop.f32.mrb[0].mxu0
      %v3380 = vadd.f32 0.0, %v3379
      %v3381 = vpop.f32.mrb[0].mxu0
      %3382 = vmatprep.mubr.bf16.mxu0 0
      %3383 = vmatmul.mubr.bf16.gmra.mrb[0].mxu0 %v3295
      %v3384 = vpop.f32.mrb[0].mxu0
      %v3385 = vadd.f32 0.0, %v3384
      %v3386 = vpop.f32.mrb[0].mxu0
      %v3387 = vpop.f32.mrb[0].mxu0
      %v3388 = vadd.f32 0.0, %v3387
      %v3389 = vpop.f32.mrb[0].mxu0
      %3390 = vmatprep.mubr.bf16.mxu0 0
      %3391 = vmatmul.mubr.bf16.gmra.mrb[0].mxu0 %v3298
      %v3392 = vpop.f32.mrb[0].mxu0
      %v3393 = vadd.f32 0.0, %v3392
      %v3394 = vpop.f32.mrb[0].mxu0
      %v3395 = vpop.f32.mrb[0].mxu0
      %v3396 = vadd.f32 0.0, %v3395
      %v3397 = vpop.f32.mrb[0].mxu0
      %3398 = vmatprep.mubr.bf16.mxu0 0
      %3399 = vmatmul.mubr.bf16.gmra.mrb[0].mxu0 %v3301
      %v3400 = vpop.f32.mrb[0].mxu0
      %v3401 = vadd.f32 0.0, %v3400
      %v3402 = vpop.f32.mrb[0].mxu0
      %v3403 = vpop.f32.mrb[0].mxu0
      %v3404 = vadd.f32 0.0, %v3403
      %v3405 = vpop.f32.mrb[0].mxu0
      %3406 = vmatprep.mubr.bf16.mxu0 0
      %3407 = vmatmul.mubr.bf16.gmra.mrb[0].mxu0 %v3304
      %v3408 = vpop.f32.mrb[0].mxu0
      %v3409 = vadd.f32 0.0, %v3408
      %v3410 = vpop.f32.mrb[0].mxu0
      %v3411 = vpop.f32.mrb[0].mxu0
      %v3412 = vadd.f32 0.0, %v3411
      %v3413 = vpop.f32.mrb[0].mxu0
      %3414 = vmatprep.mubr.bf16.mxu0 0
      %3415 = vmatmul.mubr.bf16.gmra.mrb[0].mxu0 %v3307
      %v3416 = vpop.f32.mrb[0].mxu0
      %v3417 = vadd.f32 0.0, %v3416
      %v3418 = vpop.f32.mrb[0].mxu0
      %v3419 = vpop.f32.mrb[0].mxu0
      %v3420 = vadd.f32 0.0, %v3419
      %v3421 = vpop.f32.mrb[0].mxu0
      %3422 = vmatprep.mubr.bf16.mxu0 0
      %3423 = vmatmul.mubr.bf16.gmra.mrb[0].mxu0 %v3310
      %v3424 = vpop.f32.mrb[0].mxu0
      %v3425 = vadd.f32 0.0, %v3424
      %v3426 = vpop.f32.mrb[0].mxu0
      %v3427 = vpop.f32.mrb[0].mxu0
      %v3428 = vadd.f32 0.0, %v3427
      %v3429 = vpop.f32.mrb[0].mxu0
      %3430 = vmatprep.mubr.bf16.mxu0 0
      %3431 = vmatmul.mubr.bf16.gmra.mrb[0].mxu0 %v3313
      %v3432 = vpop.f32.mrb[0].mxu0
      %v3433 = vadd.f32 0.0, %v3432
      %v3434 = vpop.f32.mrb[0].mxu0
      %v3435 = vpop.f32.mrb[0].mxu0
      %v3436 = vadd.f32 0.0, %v3435
      %v3437 = vpop.f32.mrb[0].mxu0
      %3438 = vmatprep.mubr.bf16.mxu0 0
      %3439 = vmatmul.mubr.bf16.gmra.mrb[0].mxu0 %v3316
      %v3440 = vpop.f32.mrb[0].mxu0
      %v3441 = vadd.f32 0.0, %v3440
      %v3442 = vpop.f32.mrb[0].mxu0
      %v3443 = vpop.f32.mrb[0].mxu0
      %v3444 = vadd.f32 0.0, %v3443
      %v3445 = vpop.f32.mrb[0].mxu0
      %3446 = vmatprep.mubr.bf16.mxu0 0
      %3447 = vmatmul.mubr.bf16.gmra.mrb[0].mxu0 %v3319
      %v3448 = vpop.f32.mrb[0].mxu0
      %v3449 = vadd.f32 0.0, %v3448
      %v3450 = vpop.f32.mrb[0].mxu0
      %v3451 = vpop.f32.mrb[0].mxu0
      %v3452 = vadd.f32 0.0, %v3451
      %v3453 = vpop.f32.mrb[0].mxu0
      %3454 = vmatprep.mubr.bf16.mxu0 0
      %3455 = vmatmul.mubr.bf16.gmra.mrb[0].mxu0 %v3322
      %v3456 = vpop.f32.mrb[0].mxu0
      %v3457 = vadd.f32 0.0, %v3456
      %v3458 = vpop.f32.mrb[0].mxu0
      %v3459 = vpop.f32.mrb[0].mxu0
      %v3460 = vadd.f32 0.0, %v3459
      %v3461 = vpop.f32.mrb[0].mxu0
      %3462 = vmatprep.mubr.bf16.mxu0 0
      %3463 = vmatmul.mubr.bf16.gmra.mrb[0].mxu0 %v3325
      %v3464 = vpop.f32.mrb[0].mxu0
      %v3465 = vadd.f32 0.0, %v3464
      %v3466 = vpop.f32.mrb[0].mxu0
      %v3467 = vpop.f32.mrb[0].mxu0
      %v3468 = vadd.f32 0.0, %v3467
      %v3469 = vpop.f32.mrb[0].mxu0
      %3470 = vmatprep.mubr.bf16.mxu0 0
      %3471 = vmatmul.mubr.bf16.gmra.mrb[0].mxu0 %v3328
      %v3472 = vpop.f32.mrb[0].mxu0
      %v3473 = vadd.f32 0.0, %v3472
      %v3474 = vpop.f32.mrb[0].mxu0
      %v3475 = vpop.f32.mrb[0].mxu0
      %v3476 = vadd.f32 0.0, %v3475
      %v3477 = vpop.f32.mrb[0].mxu0
      %3478 = vmatprep.mubr.bf16.mxu0 0
      %3479 = vmatmul.mubr.bf16.gmra.mrb[0].mxu0 %v3331
      %v3480 = vpop.f32.mrb[0].mxu0
      %v3481 = vadd.f32 0.0, %v3480
      %v3482 = vpop.f32.mrb[0].mxu0
      %v3483 = vpop.f32.mrb[0].mxu0
      %v3484 = vadd.f32 0.0, %v3483
      %v3485 = vpop.f32.mrb[0].mxu0
      %3486 = vmatprep.mubr.bf16.mxu0 0
      %3487 = vmatmul.mubr.bf16.gmra.mrb[0].mxu0 %v3334
      %v3488 = vpop.f32.mrb[0].mxu0
      %v3489 = vadd.f32 0.0, %v3488
      %v3490 = vpop.f32.mrb[0].mxu0
      %v3491 = vpop.f32.mrb[0].mxu0
      %v3492 = vadd.f32 0.0, %v3491
      %v3493 = vpop.f32.mrb[0].mxu0
      %3494 = vmatprep.mubr.bf16.mxu0 0
      %3495 = vmatmul.mubr.bf16.gmra.mrb[0].mxu0 %v3337
      %v3496 = vpop.f32.mrb[0].mxu0
      %v3497 = vadd.f32 0.0, %v3496
      %v3498 = vpop.f32.mrb[0].mxu0
      %v3499 = vpop.f32.mrb[0].mxu0
      %v3500 = vadd.f32 0.0, %v3499
      %v3501 = vpop.f32.mrb[0].mxu0
      %3502 = vdwg.mxu0
      %v3503 = vadd.f32 %v3144, %v3377
      %v3504 = vadd.f32 %v3145, %v3380
      %v3505 = vadd.f32 %v3146, %v3385
      %v3506 = vadd.f32 %v3147, %v3388
      %v3507 = vadd.f32 %v3148, %v3393
      %v3508 = vadd.f32 %v3149, %v3396
      %v3509 = vadd.f32 %v3150, %v3401
      %v3510 = vadd.f32 %v3151, %v3404
      %v3511 = vadd.f32 %v3152, %v3409
      %v3512 = vadd.f32 %v3153, %v3412
      %v3513 = vadd.f32 %v3154, %v3417
      %v3514 = vadd.f32 %v3155, %v3420
      %v3515 = vadd.f32 %v3156, %v3425
      %v3516 = vadd.f32 %v3157, %v3428
      %v3517 = vadd.f32 %v3158, %v3433
      %v3518 = vadd.f32 %v3159, %v3436
      %v3519 = vadd.f32 %v3160, %v3441
      %v3520 = vadd.f32 %v3161, %v3444
      %v3521 = vadd.f32 %v3162, %v3449
      %v3522 = vadd.f32 %v3163, %v3452
      %v3523 = vadd.f32 %v3164, %v3457
      %v3524 = vadd.f32 %v3165, %v3460
      %v3525 = vadd.f32 %v3166, %v3465
      %v3526 = vadd.f32 %v3167, %v3468
      %v3527 = vadd.f32 %v3168, %v3473
      %v3528 = vadd.f32 %v3169, %v3476
      %v3529 = vadd.f32 %v3170, %v3481
      %v3530 = vadd.f32 %v3171, %v3484
      %v3531 = vadd.f32 %v3172, %v3489
      %v3532 = vadd.f32 %v3173, %v3492
      %v3533 = vadd.f32 %v3174, %v3497
      %v3534 = vadd.f32 %v3175, %v3500
      %v3535 = vld [vmem:[%s3176] sm:$0xf]
      %v3536 = vld [vmem:[%s3176 + $0x4] sm:$0xf]
      %v3537 = vld [vmem:[%s3176 + $0x8] sm:$0x1]
      %v3538 = vld [vmem:[%s3176 + $0xc] sm:$0xf]
      %v3539 = vld [vmem:[%s3176 + $0x10] sm:$0xf]
      %v3540 = vld [vmem:[%s3176 + $0x14] sm:$0x1]
      %v3541 = vld [vmem:[%s3176 + $0x18] sm:$0xf]
      %v3542 = vld [vmem:[%s3176 + $0x1c] sm:$0xf]
      %v3543 = vld [vmem:[%s3176 + $0x20] sm:$0x1]
      %v3544 = vld [vmem:[%s3176 + $0x24] sm:$0xf]
      %v3545 = vld [vmem:[%s3176 + $0x28] sm:$0xf]
      %v3546 = vld [vmem:[%s3176 + $0x2c] sm:$0x1]
      %v3547 = vld [vmem:[%s3176 + $0x30] sm:$0xf]
      %v3548 = vld [vmem:[%s3176 + $0x34] sm:$0xf]
      %v3549 = vld [vmem:[%s3176 + $0x38] sm:$0x1]
      %v3550 = vld [vmem:[%s3176 + $0x3c] sm:$0xf]
      %v3551 = vld [vmem:[%s3176 + $0x40] sm:$0xf]
      %v3552 = vld [vmem:[%s3176 + $0x44] sm:$0x1]
      %v3553 = vld [vmem:[%s3176 + $0x48] sm:$0xf]
      %v3554 = vld [vmem:[%s3176 + $0x4c] sm:$0xf]
      %v3555 = vld [vmem:[%s3176 + $0x50] sm:$0x1]
      %v3556 = vld [vmem:[%s3176 + $0x54] sm:$0xf]
      %v3557 = vld [vmem:[%s3176 + $0x58] sm:$0xf]
      %v3558 = vld [vmem:[%s3176 + $0x5c] sm:$0x1]
      %v3559 = vld [vmem:[%s3176 + $0x60] sm:$0xf]
      %v3560 = vld [vmem:[%s3176 + $0x64] sm:$0xf]
      %v3561 = vld [vmem:[%s3176 + $0x68] sm:$0x1]
      %v3562 = vld [vmem:[%s3176 + $0x6c] sm:$0xf]
      %v3563 = vld [vmem:[%s3176 + $0x70] sm:$0xf]
      %v3564 = vld [vmem:[%s3176 + $0x74] sm:$0x1]
      %v3565 = vld [vmem:[%s3176 + $0x78] sm:$0xf]
      %v3566 = vld [vmem:[%s3176 + $0x7c] sm:$0xf]
      %v3567 = vld [vmem:[%s3176 + $0x80] sm:$0x1]
      %v3568 = vld [vmem:[%s3176 + $0x84] sm:$0xf]
      %v3569 = vld [vmem:[%s3176 + $0x88] sm:$0xf]
      %v3570 = vld [vmem:[%s3176 + $0x8c] sm:$0x1]
      %v3571 = vld [vmem:[%s3176 + $0x90] sm:$0xf]
      %v3572 = vld [vmem:[%s3176 + $0x94] sm:$0xf]
      %v3573 = vld [vmem:[%s3176 + $0x98] sm:$0x1]
      %v3574 = vld [vmem:[%s3176 + $0x9c] sm:$0xf]
      %v3575 = vld [vmem:[%s3176 + $0xa0] sm:$0xf]
      %v3576 = vld [vmem:[%s3176 + $0xa4] sm:$0x1]
      %v3577 = vld [vmem:[%s3176 + $0xa8] sm:$0xf]
      %v3578 = vld [vmem:[%s3176 + $0xac] sm:$0xf]
      %v3579 = vld [vmem:[%s3176 + $0xb0] sm:$0x1]
      %v3580 = vld [vmem:[%s3176 + $0xb4] sm:$0xf]
      %v3581 = vld [vmem:[%s3176 + $0xb8] sm:$0xf]
      %v3582 = vld [vmem:[%s3176 + $0xbc] sm:$0x1]
      %v3584 = vshrl.u32 %v3535, 16
      %v3586 = vrot.slane %v3584, 4
      %v3587 = vshll.u32 %v3535, 16
      %v3589 = vrot.slane %v3587, 5
      %v3590 = vor.u32 %v3586, %v3589
      %v3591 = vrot.slane %v3590, 4
      %v3593 = vshll.u32 %v3536, 16
      %v3595 = vrot.slane %v3593, 5
      %v3596 = vsel %vm223, %v3591, %v3595
      %v3597 = vshrl.u32 %v3536, 16
      %v3599 = vrot.slane %v3597, 4
      %v3600 = vor.u32 %v3599, %v3595
      %v3601 = vrot.slane %v3600, 4
      %v3603 = vshll.u32 %v3537, 16
      %v3605 = vrot.slane %v3603, 5
      %v3606 = vsel %vm223, %v3601, %v3605
      %v3608 = vshrl.u32 %v3538, 16
      %v3610 = vrot.slane %v3608, 4
      %v3611 = vshll.u32 %v3538, 16
      %v3613 = vrot.slane %v3611, 5
      %v3614 = vor.u32 %v3610, %v3613
      %v3615 = vrot.slane %v3614, 4
      %v3617 = vshll.u32 %v3539, 16
      %v3619 = vrot.slane %v3617, 5
      %v3620 = vsel %vm223, %v3615, %v3619
      %v3621 = vshrl.u32 %v3539, 16
      %v3623 = vrot.slane %v3621, 4
      %v3624 = vor.u32 %v3623, %v3619
      %v3625 = vrot.slane %v3624, 4
      %v3627 = vshll.u32 %v3540, 16
      %v3629 = vrot.slane %v3627, 5
      %v3630 = vsel %vm223, %v3625, %v3629
      %v3632 = vshrl.u32 %v3541, 16
      %v3634 = vrot.slane %v3632, 4
      %v3635 = vshll.u32 %v3541, 16
      %v3637 = vrot.slane %v3635, 5
      %v3638 = vor.u32 %v3634, %v3637
      %v3639 = vrot.slane %v3638, 4
      %v3641 = vshll.u32 %v3542, 16
      %v3643 = vrot.slane %v3641, 5
      %v3644 = vsel %vm223, %v3639, %v3643
      %v3645 = vshrl.u32 %v3542, 16
      %v3647 = vrot.slane %v3645, 4
      %v3648 = vor.u32 %v3647, %v3643
      %v3649 = vrot.slane %v3648, 4
      %v3651 = vshll.u32 %v3543, 16
      %v3653 = vrot.slane %v3651, 5
      %v3654 = vsel %vm223, %v3649, %v3653
      %v3656 = vshrl.u32 %v3544, 16
      %v3658 = vrot.slane %v3656, 4
      %v3659 = vshll.u32 %v3544, 16
      %v3661 = vrot.slane %v3659, 5
      %v3662 = vor.u32 %v3658, %v3661
      %v3663 = vrot.slane %v3662, 4
      %v3665 = vshll.u32 %v3545, 16
      %v3667 = vrot.slane %v3665, 5
      %v3668 = vsel %vm223, %v3663, %v3667
      %v3669 = vshrl.u32 %v3545, 16
      %v3671 = vrot.slane %v3669, 4
      %v3672 = vor.u32 %v3671, %v3667
      %v3673 = vrot.slane %v3672, 4
      %v3675 = vshll.u32 %v3546, 16
      %v3677 = vrot.slane %v3675, 5
      %v3678 = vsel %vm223, %v3673, %v3677
      %v3680 = vshrl.u32 %v3547, 16
      %v3682 = vrot.slane %v3680, 4
      %v3683 = vshll.u32 %v3547, 16
      %v3685 = vrot.slane %v3683, 5
      %v3686 = vor.u32 %v3682, %v3685
      %v3687 = vrot.slane %v3686, 4
      %v3689 = vshll.u32 %v3548, 16
      %v3691 = vrot.slane %v3689, 5
      %v3692 = vsel %vm223, %v3687, %v3691
      %v3693 = vshrl.u32 %v3548, 16
      %v3695 = vrot.slane %v3693, 4
      %v3696 = vor.u32 %v3695, %v3691
      %v3697 = vrot.slane %v3696, 4
      %v3699 = vshll.u32 %v3549, 16
      %v3701 = vrot.slane %v3699, 5
      %v3702 = vsel %vm223, %v3697, %v3701
      %v3704 = vshrl.u32 %v3550, 16
      %v3706 = vrot.slane %v3704, 4
      %v3707 = vshll.u32 %v3550, 16
      %v3709 = vrot.slane %v3707, 5
      %v3710 = vor.u32 %v3706, %v3709
      %v3711 = vrot.slane %v3710, 4
      %v3713 = vshll.u32 %v3551, 16
      %v3715 = vrot.slane %v3713, 5
      %v3716 = vsel %vm223, %v3711, %v3715
      %v3717 = vshrl.u32 %v3551, 16
      %v3719 = vrot.slane %v3717, 4
      %v3720 = vor.u32 %v3719, %v3715
      %v3721 = vrot.slane %v3720, 4
      %v3723 = vshll.u32 %v3552, 16
      %v3725 = vrot.slane %v3723, 5
      %v3726 = vsel %vm223, %v3721, %v3725
      %v3728 = vshrl.u32 %v3553, 16
      %v3730 = vrot.slane %v3728, 4
      %v3731 = vshll.u32 %v3553, 16
      %v3733 = vrot.slane %v3731, 5
      %v3734 = vor.u32 %v3730, %v3733
      %v3735 = vrot.slane %v3734, 4
      %v3737 = vshll.u32 %v3554, 16
      %v3739 = vrot.slane %v3737, 5
      %v3740 = vsel %vm223, %v3735, %v3739
      %v3741 = vshrl.u32 %v3554, 16
      %v3743 = vrot.slane %v3741, 4
      %v3744 = vor.u32 %v3743, %v3739
      %v3745 = vrot.slane %v3744, 4
      %v3747 = vshll.u32 %v3555, 16
      %v3749 = vrot.slane %v3747, 5
      %v3750 = vsel %vm223, %v3745, %v3749
      %v3752 = vshrl.u32 %v3556, 16
      %v3754 = vrot.slane %v3752, 4
      %v3755 = vshll.u32 %v3556, 16
      %v3757 = vrot.slane %v3755, 5
      %v3758 = vor.u32 %v3754, %v3757
      %v3759 = vrot.slane %v3758, 4
      %v3761 = vshll.u32 %v3557, 16
      %v3763 = vrot.slane %v3761, 5
      %v3764 = vsel %vm223, %v3759, %v3763
      %v3765 = vshrl.u32 %v3557, 16
      %v3767 = vrot.slane %v3765, 4
      %v3768 = vor.u32 %v3767, %v3763
      %v3769 = vrot.slane %v3768, 4
      %v3771 = vshll.u32 %v3558, 16
      %v3773 = vrot.slane %v3771, 5
      %v3774 = vsel %vm223, %v3769, %v3773
      %v3776 = vshrl.u32 %v3559, 16
      %v3778 = vrot.slane %v3776, 4
      %v3779 = vshll.u32 %v3559, 16
      %v3781 = vrot.slane %v3779, 5
      %v3782 = vor.u32 %v3778, %v3781
      %v3783 = vrot.slane %v3782, 4
      %v3785 = vshll.u32 %v3560, 16
      %v3787 = vrot.slane %v3785, 5
      %v3788 = vsel %vm223, %v3783, %v3787
      %v3789 = vshrl.u32 %v3560, 16
      %v3791 = vrot.slane %v3789, 4
      %v3792 = vor.u32 %v3791, %v3787
      %v3793 = vrot.slane %v3792, 4
      %v3795 = vshll.u32 %v3561, 16
      %v3797 = vrot.slane %v3795, 5
      %v3798 = vsel %vm223, %v3793, %v3797
      %v3800 = vshrl.u32 %v3562, 16
      %v3802 = vrot.slane %v3800, 4
      %v3803 = vshll.u32 %v3562, 16
      %v3805 = vrot.slane %v3803, 5
      %v3806 = vor.u32 %v3802, %v3805
      %v3807 = vrot.slane %v3806, 4
      %v3809 = vshll.u32 %v3563, 16
      %v3811 = vrot.slane %v3809, 5
      %v3812 = vsel %vm223, %v3807, %v3811
      %v3813 = vshrl.u32 %v3563, 16
      %v3815 = vrot.slane %v3813, 4
      %v3816 = vor.u32 %v3815, %v3811
      %v3817 = vrot.slane %v3816, 4
      %v3819 = vshll.u32 %v3564, 16
      %v3821 = vrot.slane %v3819, 5
      %v3822 = vsel %vm223, %v3817, %v3821
      %v3824 = vshrl.u32 %v3565, 16
      %v3826 = vrot.slane %v3824, 4
      %v3827 = vshll.u32 %v3565, 16
      %v3829 = vrot.slane %v3827, 5
      %v3830 = vor.u32 %v3826, %v3829
      %v3831 = vrot.slane %v3830, 4
      %v3833 = vshll.u32 %v3566, 16
      %v3835 = vrot.slane %v3833, 5
      %v3836 = vsel %vm223, %v3831, %v3835
      %v3837 = vshrl.u32 %v3566, 16
      %v3839 = vrot.slane %v3837, 4
      %v3840 = vor.u32 %v3839, %v3835
      %v3841 = vrot.slane %v3840, 4
      %v3843 = vshll.u32 %v3567, 16
      %v3845 = vrot.slane %v3843, 5
      %v3846 = vsel %vm223, %v3841, %v3845
      %v3848 = vshrl.u32 %v3568, 16
      %v3850 = vrot.slane %v3848, 4
      %v3851 = vshll.u32 %v3568, 16
      %v3853 = vrot.slane %v3851, 5
      %v3854 = vor.u32 %v3850, %v3853
      %v3855 = vrot.slane %v3854, 4
      %v3857 = vshll.u32 %v3569, 16
      %v3859 = vrot.slane %v3857, 5
      %v3860 = vsel %vm223, %v3855, %v3859
      %v3861 = vshrl.u32 %v3569, 16
      %v3863 = vrot.slane %v3861, 4
      %v3864 = vor.u32 %v3863, %v3859
      %v3865 = vrot.slane %v3864, 4
      %v3867 = vshll.u32 %v3570, 16
      %v3869 = vrot.slane %v3867, 5
      %v3870 = vsel %vm223, %v3865, %v3869
      %v3872 = vshrl.u32 %v3571, 16
      %v3874 = vrot.slane %v3872, 4
      %v3875 = vshll.u32 %v3571, 16
      %v3877 = vrot.slane %v3875, 5
      %v3878 = vor.u32 %v3874, %v3877
      %v3879 = vrot.slane %v3878, 4
      %v3881 = vshll.u32 %v3572, 16
      %v3883 = vrot.slane %v3881, 5
      %v3884 = vsel %vm223, %v3879, %v3883
      %v3885 = vshrl.u32 %v3572, 16
      %v3887 = vrot.slane %v3885, 4
      %v3888 = vor.u32 %v3887, %v3883
      %v3889 = vrot.slane %v3888, 4
      %v3891 = vshll.u32 %v3573, 16
      %v3893 = vrot.slane %v3891, 5
      %v3894 = vsel %vm223, %v3889, %v3893
      %v3896 = vshrl.u32 %v3574, 16
      %v3898 = vrot.slane %v3896, 4
      %v3899 = vshll.u32 %v3574, 16
      %v3901 = vrot.slane %v3899, 5
      %v3902 = vor.u32 %v3898, %v3901
      %v3903 = vrot.slane %v3902, 4
      %v3905 = vshll.u32 %v3575, 16
      %v3907 = vrot.slane %v3905, 5
      %v3908 = vsel %vm223, %v3903, %v3907
      %v3909 = vshrl.u32 %v3575, 16
      %v3911 = vrot.slane %v3909, 4
      %v3912 = vor.u32 %v3911, %v3907
      %v3913 = vrot.slane %v3912, 4
      %v3915 = vshll.u32 %v3576, 16
      %v3917 = vrot.slane %v3915, 5
      %v3918 = vsel %vm223, %v3913, %v3917
      %v3920 = vshrl.u32 %v3577, 16
      %v3922 = vrot.slane %v3920, 4
      %v3923 = vshll.u32 %v3577, 16
      %v3925 = vrot.slane %v3923, 5
      %v3926 = vor.u32 %v3922, %v3925
      %v3927 = vrot.slane %v3926, 4
      %v3929 = vshll.u32 %v3578, 16
      %v3931 = vrot.slane %v3929, 5
      %v3932 = vsel %vm223, %v3927, %v3931
      %v3933 = vshrl.u32 %v3578, 16
      %v3935 = vrot.slane %v3933, 4
      %v3936 = vor.u32 %v3935, %v3931
      %v3937 = vrot.slane %v3936, 4
      %v3939 = vshll.u32 %v3579, 16
      %v3941 = vrot.slane %v3939, 5
      %v3942 = vsel %vm223, %v3937, %v3941
      %v3944 = vshrl.u32 %v3580, 16
      %v3946 = vrot.slane %v3944, 4
      %v3947 = vshll.u32 %v3580, 16
      %v3949 = vrot.slane %v3947, 5
      %v3950 = vor.u32 %v3946, %v3949
      %v3951 = vrot.slane %v3950, 4
      %v3953 = vshll.u32 %v3581, 16
      %v3955 = vrot.slane %v3953, 5
      %v3956 = vsel %vm223, %v3951, %v3955
      %v3957 = vshrl.u32 %v3581, 16
      %v3959 = vrot.slane %v3957, 4
      %v3960 = vor.u32 %v3959, %v3955
      %v3961 = vrot.slane %v3960, 4
      %v3963 = vshll.u32 %v3582, 16
      %v3965 = vrot.slane %v3963, 5
      %v3966 = vsel %vm223, %v3961, %v3965
      %s3967 = scalar_lea.vmem %s1, 28
      %v3968 = vld [vmem:[%s3967] sm:$0x7]
      %v3969 = vunpack.c.l.b16 %v3596
      %v3970 = vunpack.c.l.b16 %v3606
      %v3971 = vunpack.c.l.b16 %v3620
      %v3972 = vunpack.c.l.b16 %v3630
      %v3973 = vunpack.c.l.b16 %v3644
      %v3974 = vunpack.c.l.b16 %v3654
      %v3975 = vunpack.c.l.b16 %v3668
      %v3976 = vunpack.c.l.b16 %v3678
      %v3977 = vunpack.c.l.b16 %v3692
      %v3978 = vunpack.c.l.b16 %v3702
      %v3979 = vunpack.c.l.b16 %v3716
      %v3980 = vunpack.c.l.b16 %v3726
      %v3981 = vunpack.c.l.b16 %v3740
      %v3982 = vunpack.c.l.b16 %v3750
      %v3983 = vunpack.c.l.b16 %v3764
      %v3984 = vunpack.c.l.b16 %v3774
      %v3985 = vunpack.c.l.b16 %v3788
      %v3986 = vunpack.c.l.b16 %v3798
      %v3987 = vunpack.c.l.b16 %v3812
      %v3988 = vunpack.c.l.b16 %v3822
      %v3989 = vunpack.c.l.b16 %v3836
      %v3990 = vunpack.c.l.b16 %v3846
      %v3991 = vunpack.c.l.b16 %v3860
      %v3992 = vunpack.c.l.b16 %v3870
      %v3993 = vunpack.c.l.b16 %v3884
      %v3994 = vunpack.c.l.b16 %v3894
      %v3995 = vunpack.c.l.b16 %v3908
      %v3996 = vunpack.c.l.b16 %v3918
      %v3997 = vunpack.c.l.b16 %v3932
      %v3998 = vunpack.c.l.b16 %v3942
      %v3999 = vunpack.c.l.b16 %v3956
      %v4000 = vunpack.c.l.b16 %v3966
      %v4001 = vpack.c.b16 %v3970, %v3969
      %v4002 = vpack.c.b16 %v3972, %v3971
      %v4003 = vpack.c.b16 %v3974, %v3973
      %v4004 = vpack.c.b16 %v3976, %v3975
      %v4005 = vpack.c.b16 %v3978, %v3977
      %v4006 = vpack.c.b16 %v3980, %v3979
      %v4007 = vpack.c.b16 %v3982, %v3981
      %v4008 = vpack.c.b16 %v3984, %v3983
      %v4009 = vpack.c.b16 %v3986, %v3985
      %v4010 = vpack.c.b16 %v3988, %v3987
      %v4011 = vpack.c.b16 %v3990, %v3989
      %v4012 = vpack.c.b16 %v3992, %v3991
      %v4013 = vpack.c.b16 %v3994, %v3993
      %v4014 = vpack.c.b16 %v3996, %v3995
      %v4015 = vpack.c.b16 %v3998, %v3997
      %v4016 = vpack.c.b16 %v4000, %v3999
      %v4018 = vsel %vm658, %v4001, 0
      %v4021 = vsel %vm658, %v4002, 0
      %v4024 = vsel %vm658, %v4003, 0
      %v4027 = vsel %vm658, %v4004, 0
      %v4030 = vsel %vm658, %v4005, 0
      %v4033 = vsel %vm658, %v4006, 0
      %v4036 = vsel %vm658, %v4007, 0
      %v4039 = vsel %vm658, %v4008, 0
      %v4042 = vsel %vm658, %v4009, 0
      %v4045 = vsel %vm658, %v4010, 0
      %v4048 = vsel %vm658, %v4011, 0
      %v4051 = vsel %vm658, %v4012, 0
      %v4054 = vsel %vm658, %v4013, 0
      %v4057 = vsel %vm658, %v4014, 0
      %v4060 = vsel %vm658, %v4015, 0
      %v4063 = vsel %vm658, %v4016, 0
      %v4066 = vsel %vm707, %v3968, 0
      %4068 = vmatprep.subr.bf16.mxu0 0
      %4069 = vmatpush1.bf16.msra.mxu0 %v4066
      %4070 = vmatprep.subr.bf16.mxu0 0
      %4071 = vmatpush1.bf16.msra.mxu0 0
      %4072 = vmatprep.subr.bf16.mxu0 0
      %4073 = vmatpush1.bf16.msra.mxu0 0
      %4074 = vmatprep.subr.bf16.mxu0 0
      %4075 = vmatpush1.bf16.msra.mxu0 0
      %4076 = vmatprep.subr.bf16.mxu0 0
      %4077 = vmatpush1.bf16.msra.mxu0 0
      %4078 = vmatprep.subr.bf16.mxu0 0
      %4079 = vmatpush1.bf16.msra.mxu0 0
      %4080 = vmatprep.subr.bf16.mxu0 0
      %4081 = vmatpush1.bf16.msra.mxu0 0
      %4082 = vmatprep.subr.bf16.mxu0 0
      %4083 = vmatpush1.bf16.msra.mxu0 0
      %4084 = vmatprep.subr.bf16.mxu0 0
      %4085 = vmatpush1.bf16.msra.mxu0 0
      %4086 = vmatprep.subr.bf16.mxu0 0
      %4087 = vmatpush1.bf16.msra.mxu0 0
      %4088 = vmatprep.subr.bf16.mxu0 0
      %4089 = vmatpush1.bf16.msra.mxu0 0
      %4090 = vmatprep.subr.bf16.mxu0 0
      %4091 = vmatpush1.bf16.msra.mxu0 0
      %4092 = vmatprep.subr.bf16.mxu0 0
      %4093 = vmatpush1.bf16.msra.mxu0 0
      %4094 = vmatprep.subr.bf16.mxu0 0
      %4095 = vmatpush1.bf16.msra.mxu0 0
      %4096 = vmatprep.subr.bf16.mxu0 0
      %4097 = vmatpush1.bf16.msra.mxu0 0
      %4098 = vmatprep.subr.bf16.mxu0 0
      %4099 = vmatpush1.bf16.msra.mxu0 0
      %4100 = vmatprep.mubr.bf16.mxu0 0
      %4101 = vmatmul.mubr.bf16.gmra.mrb[0].mxu0 %v4018
      %v4102 = vpop.f32.mrb[0].mxu0
      %v4103 = vadd.f32 0.0, %v4102
      %v4104 = vpop.f32.mrb[0].mxu0
      %v4105 = vpop.f32.mrb[0].mxu0
      %v4106 = vadd.f32 0.0, %v4105
      %v4107 = vpop.f32.mrb[0].mxu0
      %4108 = vmatprep.mubr.bf16.mxu0 0
      %4109 = vmatmul.mubr.bf16.gmra.mrb[0].mxu0 %v4021
      %v4110 = vpop.f32.mrb[0].mxu0
      %v4111 = vadd.f32 0.0, %v4110
      %v4112 = vpop.f32.mrb[0].mxu0
      %v4113 = vpop.f32.mrb[0].mxu0
      %v4114 = vadd.f32 0.0, %v4113
      %v4115 = vpop.f32.mrb[0].mxu0
      %4116 = vmatprep.mubr.bf16.mxu0 0
      %4117 = vmatmul.mubr.bf16.gmra.mrb[0].mxu0 %v4024
      %v4118 = vpop.f32.mrb[0].mxu0
      %v4119 = vadd.f32 0.0, %v4118
      %v4120 = vpop.f32.mrb[0].mxu0
      %v4121 = vpop.f32.mrb[0].mxu0
      %v4122 = vadd.f32 0.0, %v4121
      %v4123 = vpop.f32.mrb[0].mxu0
      %4124 = vmatprep.mubr.bf16.mxu0 0
      %4125 = vmatmul.mubr.bf16.gmra.mrb[0].mxu0 %v4027
      %v4126 = vpop.f32.mrb[0].mxu0
      %v4127 = vadd.f32 0.0, %v4126
      %v4128 = vpop.f32.mrb[0].mxu0
      %v4129 = vpop.f32.mrb[0].mxu0
      %v4130 = vadd.f32 0.0, %v4129
      %v4131 = vpop.f32.mrb[0].mxu0
      %4132 = vmatprep.mubr.bf16.mxu0 0
      %4133 = vmatmul.mubr.bf16.gmra.mrb[0].mxu0 %v4030
      %v4134 = vpop.f32.mrb[0].mxu0
      %v4135 = vadd.f32 0.0, %v4134
      %v4136 = vpop.f32.mrb[0].mxu0
      %v4137 = vpop.f32.mrb[0].mxu0
      %v4138 = vadd.f32 0.0, %v4137
      %v4139 = vpop.f32.mrb[0].mxu0
      %4140 = vmatprep.mubr.bf16.mxu0 0
      %4141 = vmatmul.mubr.bf16.gmra.mrb[0].mxu0 %v4033
      %v4142 = vpop.f32.mrb[0].mxu0
      %v4143 = vadd.f32 0.0, %v4142
      %v4144 = vpop.f32.mrb[0].mxu0
      %v4145 = vpop.f32.mrb[0].mxu0
      %v4146 = vadd.f32 0.0, %v4145
      %v4147 = vpop.f32.mrb[0].mxu0
      %4148 = vmatprep.mubr.bf16.mxu0 0
      %4149 = vmatmul.mubr.bf16.gmra.mrb[0].mxu0 %v4036
      %v4150 = vpop.f32.mrb[0].mxu0
      %v4151 = vadd.f32 0.0, %v4150
      %v4152 = vpop.f32.mrb[0].mxu0
      %v4153 = vpop.f32.mrb[0].mxu0
      %v4154 = vadd.f32 0.0, %v4153
      %v4155 = vpop.f32.mrb[0].mxu0
      %4156 = vmatprep.mubr.bf16.mxu0 0
      %4157 = vmatmul.mubr.bf16.gmra.mrb[0].mxu0 %v4039
      %v4158 = vpop.f32.mrb[0].mxu0
      %v4159 = vadd.f32 0.0, %v4158
      %v4160 = vpop.f32.mrb[0].mxu0
      %v4161 = vpop.f32.mrb[0].mxu0
      %v4162 = vadd.f32 0.0, %v4161
      %v4163 = vpop.f32.mrb[0].mxu0
      %4164 = vmatprep.mubr.bf16.mxu0 0
      %4165 = vmatmul.mubr.bf16.gmra.mrb[0].mxu0 %v4042
      %v4166 = vpop.f32.mrb[0].mxu0
      %v4167 = vadd.f32 0.0, %v4166
      %v4168 = vpop.f32.mrb[0].mxu0
      %v4169 = vpop.f32.mrb[0].mxu0
      %v4170 = vadd.f32 0.0, %v4169
      %v4171 = vpop.f32.mrb[0].mxu0
      %4172 = vmatprep.mubr.bf16.mxu0 0
      %4173 = vmatmul.mubr.bf16.gmra.mrb[0].mxu0 %v4045
      %v4174 = vpop.f32.mrb[0].mxu0
      %v4175 = vadd.f32 0.0, %v4174
      %v4176 = vpop.f32.mrb[0].mxu0
      %v4177 = vpop.f32.mrb[0].mxu0
      %v4178 = vadd.f32 0.0, %v4177
      %v4179 = vpop.f32.mrb[0].mxu0
      %4180 = vmatprep.mubr.bf16.mxu0 0
      %4181 = vmatmul.mubr.bf16.gmra.mrb[0].mxu0 %v4048
      %v4182 = vpop.f32.mrb[0].mxu0
      %v4183 = vadd.f32 0.0, %v4182
      %v4184 = vpop.f32.mrb[0].mxu0
      %v4185 = vpop.f32.mrb[0].mxu0
      %v4186 = vadd.f32 0.0, %v4185
      %v4187 = vpop.f32.mrb[0].mxu0
      %4188 = vmatprep.mubr.bf16.mxu0 0
      %4189 = vmatmul.mubr.bf16.gmra.mrb[0].mxu0 %v4051
      %v4190 = vpop.f32.mrb[0].mxu0
      %v4191 = vadd.f32 0.0, %v4190
      %v4192 = vpop.f32.mrb[0].mxu0
      %v4193 = vpop.f32.mrb[0].mxu0
      %v4194 = vadd.f32 0.0, %v4193
      %v4195 = vpop.f32.mrb[0].mxu0
      %4196 = vmatprep.mubr.bf16.mxu0 0
      %4197 = vmatmul.mubr.bf16.gmra.mrb[0].mxu0 %v4054
      %v4198 = vpop.f32.mrb[0].mxu0
      %v4199 = vadd.f32 0.0, %v4198
      %v4200 = vpop.f32.mrb[0].mxu0
      %v4201 = vpop.f32.mrb[0].mxu0
      %v4202 = vadd.f32 0.0, %v4201
      %v4203 = vpop.f32.mrb[0].mxu0
      %4204 = vmatprep.mubr.bf16.mxu0 0
      %4205 = vmatmul.mubr.bf16.gmra.mrb[0].mxu0 %v4057
      %v4206 = vpop.f32.mrb[0].mxu0
      %v4207 = vadd.f32 0.0, %v4206
      %v4208 = vpop.f32.mrb[0].mxu0
      %v4209 = vpop.f32.mrb[0].mxu0
      %v4210 = vadd.f32 0.0, %v4209
      %v4211 = vpop.f32.mrb[0].mxu0
      %4212 = vmatprep.mubr.bf16.mxu0 0
      %4213 = vmatmul.mubr.bf16.gmra.mrb[0].mxu0 %v4060
      %v4214 = vpop.f32.mrb[0].mxu0
      %v4215 = vadd.f32 0.0, %v4214
      %v4216 = vpop.f32.mrb[0].mxu0
      %v4217 = vpop.f32.mrb[0].mxu0
      %v4218 = vadd.f32 0.0, %v4217
      %v4219 = vpop.f32.mrb[0].mxu0
      %4220 = vmatprep.mubr.bf16.mxu0 0
      %4221 = vmatmul.mubr.bf16.gmra.mrb[0].mxu0 %v4063
      %v4222 = vpop.f32.mrb[0].mxu0
      %v4223 = vadd.f32 0.0, %v4222
      %v4224 = vpop.f32.mrb[0].mxu0
      %v4225 = vpop.f32.mrb[0].mxu0
      %v4226 = vadd.f32 0.0, %v4225
      %v4227 = vpop.f32.mrb[0].mxu0
      %4228 = vdwg.mxu0
      %v4229 = vadd.f32 %v3503, %v4103
      %v4230 = vadd.f32 %v3504, %v4106
      %v4231 = vadd.f32 %v3505, %v4111
      %v4232 = vadd.f32 %v3506, %v4114
      %v4233 = vadd.f32 %v3507, %v4119
      %v4234 = vadd.f32 %v3508, %v4122
      %v4235 = vadd.f32 %v3509, %v4127
      %v4236 = vadd.f32 %v3510, %v4130
      %v4237 = vadd.f32 %v3511, %v4135
      %v4238 = vadd.f32 %v3512, %v4138
      %v4239 = vadd.f32 %v3513, %v4143
      %v4240 = vadd.f32 %v3514, %v4146
      %v4241 = vadd.f32 %v3515, %v4151
      %v4242 = vadd.f32 %v3516, %v4154
      %v4243 = vadd.f32 %v3517, %v4159
      %v4244 = vadd.f32 %v3518, %v4162
      %v4245 = vadd.f32 %v3519, %v4167
      %v4246 = vadd.f32 %v3520, %v4170
      %v4247 = vadd.f32 %v3521, %v4175
      %v4248 = vadd.f32 %v3522, %v4178
      %v4249 = vadd.f32 %v3523, %v4183
      %v4250 = vadd.f32 %v3524, %v4186
      %v4251 = vadd.f32 %v3525, %v4191
      %v4252 = vadd.f32 %v3526, %v4194
      %v4253 = vadd.f32 %v3527, %v4199
      %v4254 = vadd.f32 %v3528, %v4202
      %v4255 = vadd.f32 %v3529, %v4207
      %v4256 = vadd.f32 %v3530, %v4210
      %v4257 = vadd.f32 %v3531, %v4215
      %v4258 = vadd.f32 %v3532, %v4218
      %v4259 = vadd.f32 %v3533, %v4223
      %v4260 = vadd.f32 %v3534, %v4226
      %v4261 = vld [vmem:[%s3176] sm:$0xe]
      %v4262 = vld [vmem:[%s3176 + $0xc] sm:$0xe]
      %v4263 = vld [vmem:[%s3176 + $0x18] sm:$0xe]
      %v4264 = vld [vmem:[%s3176 + $0x24] sm:$0xe]
      %v4265 = vld [vmem:[%s3176 + $0x30] sm:$0xe]
      %v4266 = vld [vmem:[%s3176 + $0x3c] sm:$0xe]
      %v4267 = vld [vmem:[%s3176 + $0x48] sm:$0xe]
      %v4268 = vld [vmem:[%s3176 + $0x54] sm:$0xe]
      %v4269 = vld [vmem:[%s3176 + $0x60] sm:$0xe]
      %v4270 = vld [vmem:[%s3176 + $0x6c] sm:$0xe]
      %v4271 = vld [vmem:[%s3176 + $0x78] sm:$0xe]
      %v4272 = vld [vmem:[%s3176 + $0x84] sm:$0xe]
      %v4273 = vld [vmem:[%s3176 + $0x90] sm:$0xe]
      %v4274 = vld [vmem:[%s3176 + $0x9c] sm:$0xe]
      %v4275 = vld [vmem:[%s3176 + $0xa8] sm:$0xe]
      %v4276 = vld [vmem:[%s3176 + $0xb4] sm:$0xe]
      %v4325 = vrot.slane %v4261, 5
      %v4326 = vrot.slane %v4325, 4
      %v4327 = vrot.slane %v3536, 5
      %v4328 = vsel %vm1214, %v4326, %v4327
      %v4329 = vrot.slane %v4327, 4
      %v4330 = vrot.slane %v3537, 5
      %v4331 = vsel %vm1214, %v4329, %v4330
      %v4332 = vrot.slane %v4262, 5
      %v4333 = vrot.slane %v4332, 4
      %v4334 = vrot.slane %v3539, 5
      %v4335 = vsel %vm1214, %v4333, %v4334
      %v4336 = vrot.slane %v4334, 4
      %v4337 = vrot.slane %v3540, 5
      %v4338 = vsel %vm1214, %v4336, %v4337
      %v4339 = vrot.slane %v4263, 5
      %v4340 = vrot.slane %v4339, 4
      %v4341 = vrot.slane %v3542, 5
      %v4342 = vsel %vm1214, %v4340, %v4341
      %v4343 = vrot.slane %v4341, 4
      %v4344 = vrot.slane %v3543, 5
      %v4345 = vsel %vm1214, %v4343, %v4344
      %v4346 = vrot.slane %v4264, 5
      %v4347 = vrot.slane %v4346, 4
      %v4348 = vrot.slane %v3545, 5
      %v4349 = vsel %vm1214, %v4347, %v4348
      %v4350 = vrot.slane %v4348, 4
      %v4351 = vrot.slane %v3546, 5
      %v4352 = vsel %vm1214, %v4350, %v4351
      %v4353 = vrot.slane %v4265, 5
      %v4354 = vrot.slane %v4353, 4
      %v4355 = vrot.slane %v3548, 5
      %v4356 = vsel %vm1214, %v4354, %v4355
      %v4357 = vrot.slane %v4355, 4
      %v4358 = vrot.slane %v3549, 5
      %v4359 = vsel %vm1214, %v4357, %v4358
      %v4360 = vrot.slane %v4266, 5
      %v4361 = vrot.slane %v4360, 4
      %v4362 = vrot.slane %v3551, 5
      %v4363 = vsel %vm1214, %v4361, %v4362
      %v4364 = vrot.slane %v4362, 4
      %v4365 = vrot.slane %v3552, 5
      %v4366 = vsel %vm1214, %v4364, %v4365
      %v4367 = vrot.slane %v4267, 5
      %v4368 = vrot.slane %v4367, 4
      %v4369 = vrot.slane %v3554, 5
      %v4370 = vsel %vm1214, %v4368, %v4369
      %v4371 = vrot.slane %v4369, 4
      %v4372 = vrot.slane %v3555, 5
      %v4373 = vsel %vm1214, %v4371, %v4372
      %v4374 = vrot.slane %v4268, 5
      %v4375 = vrot.slane %v4374, 4
      %v4376 = vrot.slane %v3557, 5
      %v4377 = vsel %vm1214, %v4375, %v4376
      %v4378 = vrot.slane %v4376, 4
      %v4379 = vrot.slane %v3558, 5
      %v4380 = vsel %vm1214, %v4378, %v4379
      %v4381 = vrot.slane %v4269, 5
      %v4382 = vrot.slane %v4381, 4
      %v4383 = vrot.slane %v3560, 5
      %v4384 = vsel %vm1214, %v4382, %v4383
      %v4385 = vrot.slane %v4383, 4
      %v4386 = vrot.slane %v3561, 5
      %v4387 = vsel %vm1214, %v4385, %v4386
      %v4388 = vrot.slane %v4270, 5
      %v4389 = vrot.slane %v4388, 4
      %v4390 = vrot.slane %v3563, 5
      %v4391 = vsel %vm1214, %v4389, %v4390
      %v4392 = vrot.slane %v4390, 4
      %v4393 = vrot.slane %v3564, 5
      %v4394 = vsel %vm1214, %v4392, %v4393
      %v4395 = vrot.slane %v4271, 5
      %v4396 = vrot.slane %v4395, 4
      %v4397 = vrot.slane %v3566, 5
      %v4398 = vsel %vm1214, %v4396, %v4397
      %v4399 = vrot.slane %v4397, 4
      %v4400 = vrot.slane %v3567, 5
      %v4401 = vsel %vm1214, %v4399, %v4400
      %v4402 = vrot.slane %v4272, 5
      %v4403 = vrot.slane %v4402, 4
      %v4404 = vrot.slane %v3569, 5
      %v4405 = vsel %vm1214, %v4403, %v4404
      %v4406 = vrot.slane %v4404, 4
      %v4407 = vrot.slane %v3570, 5
      %v4408 = vsel %vm1214, %v4406, %v4407
      %v4409 = vrot.slane %v4273, 5
      %v4410 = vrot.slane %v4409, 4
      %v4411 = vrot.slane %v3572, 5
      %v4412 = vsel %vm1214, %v4410, %v4411
      %v4413 = vrot.slane %v4411, 4
      %v4414 = vrot.slane %v3573, 5
      %v4415 = vsel %vm1214, %v4413, %v4414
      %v4416 = vrot.slane %v4274, 5
      %v4417 = vrot.slane %v4416, 4
      %v4418 = vrot.slane %v3575, 5
      %v4419 = vsel %vm1214, %v4417, %v4418
      %v4420 = vrot.slane %v4418, 4
      %v4421 = vrot.slane %v3576, 5
      %v4422 = vsel %vm1214, %v4420, %v4421
      %v4423 = vrot.slane %v4275, 5
      %v4424 = vrot.slane %v4423, 4
      %v4425 = vrot.slane %v3578, 5
      %v4426 = vsel %vm1214, %v4424, %v4425
      %v4427 = vrot.slane %v4425, 4
      %v4428 = vrot.slane %v3579, 5
      %v4429 = vsel %vm1214, %v4427, %v4428
      %v4430 = vrot.slane %v4276, 5
      %v4431 = vrot.slane %v4430, 4
      %v4432 = vrot.slane %v3581, 5
      %v4433 = vsel %vm1214, %v4431, %v4432
      %v4434 = vrot.slane %v4432, 4
      %v4435 = vrot.slane %v3582, 5
      %v4436 = vsel %vm1214, %v4434, %v4435
      %s4437 = scalar_lea.vmem %s1, 32
      %v4438 = vld [vmem:[%s4437] sm:$0x7]
      %v4439 = vunpack.c.l.b16 %v4328
      %v4440 = vunpack.c.l.b16 %v4331
      %v4441 = vunpack.c.l.b16 %v4335
      %v4442 = vunpack.c.l.b16 %v4338
      %v4443 = vunpack.c.l.b16 %v4342
      %v4444 = vunpack.c.l.b16 %v4345
      %v4445 = vunpack.c.l.b16 %v4349
      %v4446 = vunpack.c.l.b16 %v4352
      %v4447 = vunpack.c.l.b16 %v4356
      %v4448 = vunpack.c.l.b16 %v4359
      %v4449 = vunpack.c.l.b16 %v4363
      %v4450 = vunpack.c.l.b16 %v4366
      %v4451 = vunpack.c.l.b16 %v4370
      %v4452 = vunpack.c.l.b16 %v4373
      %v4453 = vunpack.c.l.b16 %v4377
      %v4454 = vunpack.c.l.b16 %v4380
      %v4455 = vunpack.c.l.b16 %v4384
      %v4456 = vunpack.c.l.b16 %v4387
      %v4457 = vunpack.c.l.b16 %v4391
      %v4458 = vunpack.c.l.b16 %v4394
      %v4459 = vunpack.c.l.b16 %v4398
      %v4460 = vunpack.c.l.b16 %v4401
      %v4461 = vunpack.c.l.b16 %v4405
      %v4462 = vunpack.c.l.b16 %v4408
      %v4463 = vunpack.c.l.b16 %v4412
      %v4464 = vunpack.c.l.b16 %v4415
      %v4465 = vunpack.c.l.b16 %v4419
      %v4466 = vunpack.c.l.b16 %v4422
      %v4467 = vunpack.c.l.b16 %v4426
      %v4468 = vunpack.c.l.b16 %v4429
      %v4469 = vunpack.c.l.b16 %v4433
      %v4470 = vunpack.c.l.b16 %v4436
      %v4471 = vpack.c.b16 %v4440, %v4439
      %v4472 = vpack.c.b16 %v4442, %v4441
      %v4473 = vpack.c.b16 %v4444, %v4443
      %v4474 = vpack.c.b16 %v4446, %v4445
      %v4475 = vpack.c.b16 %v4448, %v4447
      %v4476 = vpack.c.b16 %v4450, %v4449
      %v4477 = vpack.c.b16 %v4452, %v4451
      %v4478 = vpack.c.b16 %v4454, %v4453
      %v4479 = vpack.c.b16 %v4456, %v4455
      %v4480 = vpack.c.b16 %v4458, %v4457
      %v4481 = vpack.c.b16 %v4460, %v4459
      %v4482 = vpack.c.b16 %v4462, %v4461
      %v4483 = vpack.c.b16 %v4464, %v4463
      %v4484 = vpack.c.b16 %v4466, %v4465
      %v4485 = vpack.c.b16 %v4468, %v4467
      %v4486 = vpack.c.b16 %v4470, %v4469
      %v4488 = vsel %vm658, %v4471, 0
      %v4491 = vsel %vm658, %v4472, 0
      %v4494 = vsel %vm658, %v4473, 0
      %v4497 = vsel %vm658, %v4474, 0
      %v4500 = vsel %vm658, %v4475, 0
      %v4503 = vsel %vm658, %v4476, 0
      %v4506 = vsel %vm658, %v4477, 0
      %v4509 = vsel %vm658, %v4478, 0
      %v4512 = vsel %vm658, %v4479, 0
      %v4515 = vsel %vm658, %v4480, 0
      %v4518 = vsel %vm658, %v4481, 0
      %v4521 = vsel %vm658, %v4482, 0
      %v4524 = vsel %vm658, %v4483, 0
      %v4527 = vsel %vm658, %v4484, 0
      %v4530 = vsel %vm658, %v4485, 0
      %v4533 = vsel %vm658, %v4486, 0
      %v4536 = vsel %vm707, %v4438, 0
      %4538 = vmatprep.subr.bf16.mxu0 0
      %4539 = vmatpush1.bf16.msra.mxu0 %v4536
      %4540 = vmatprep.subr.bf16.mxu0 0
      %4541 = vmatpush1.bf16.msra.mxu0 0
      %4542 = vmatprep.subr.bf16.mxu0 0
      %4543 = vmatpush1.bf16.msra.mxu0 0
      %4544 = vmatprep.subr.bf16.mxu0 0
      %4545 = vmatpush1.bf16.msra.mxu0 0
      %4546 = vmatprep.subr.bf16.mxu0 0
      %4547 = vmatpush1.bf16.msra.mxu0 0
      %4548 = vmatprep.subr.bf16.mxu0 0
      %4549 = vmatpush1.bf16.msra.mxu0 0
      %4550 = vmatprep.subr.bf16.mxu0 0
      %4551 = vmatpush1.bf16.msra.mxu0 0
      %4552 = vmatprep.subr.bf16.mxu0 0
      %4553 = vmatpush1.bf16.msra.mxu0 0
      %4554 = vmatprep.subr.bf16.mxu0 0
      %4555 = vmatpush1.bf16.msra.mxu0 0
      %4556 = vmatprep.subr.bf16.mxu0 0
      %4557 = vmatpush1.bf16.msra.mxu0 0
      %4558 = vmatprep.subr.bf16.mxu0 0
      %4559 = vmatpush1.bf16.msra.mxu0 0
      %4560 = vmatprep.subr.bf16.mxu0 0
      %4561 = vmatpush1.bf16.msra.mxu0 0
      %4562 = vmatprep.subr.bf16.mxu0 0
      %4563 = vmatpush1.bf16.msra.mxu0 0
      %4564 = vmatprep.subr.bf16.mxu0 0
      %4565 = vmatpush1.bf16.msra.mxu0 0
      %4566 = vmatprep.subr.bf16.mxu0 0
      %4567 = vmatpush1.bf16.msra.mxu0 0
      %4568 = vmatprep.subr.bf16.mxu0 0
      %4569 = vmatpush1.bf16.msra.mxu0 0
      %4570 = vmatprep.mubr.bf16.mxu0 0
      %4571 = vmatmul.mubr.bf16.gmra.mrb[0].mxu0 %v4488
      %v4572 = vpop.f32.mrb[0].mxu0
      %v4573 = vadd.f32 0.0, %v4572
      %v4574 = vpop.f32.mrb[0].mxu0
      %v4575 = vpop.f32.mrb[0].mxu0
      %v4576 = vadd.f32 0.0, %v4575
      %v4577 = vpop.f32.mrb[0].mxu0
      %4578 = vmatprep.mubr.bf16.mxu0 0
      %4579 = vmatmul.mubr.bf16.gmra.mrb[0].mxu0 %v4491
      %v4580 = vpop.f32.mrb[0].mxu0
      %v4581 = vadd.f32 0.0, %v4580
      %v4582 = vpop.f32.mrb[0].mxu0
      %v4583 = vpop.f32.mrb[0].mxu0
      %v4584 = vadd.f32 0.0, %v4583
      %v4585 = vpop.f32.mrb[0].mxu0
      %4586 = vmatprep.mubr.bf16.mxu0 0
      %4587 = vmatmul.mubr.bf16.gmra.mrb[0].mxu0 %v4494
      %v4588 = vpop.f32.mrb[0].mxu0
      %v4589 = vadd.f32 0.0, %v4588
      %v4590 = vpop.f32.mrb[0].mxu0
      %v4591 = vpop.f32.mrb[0].mxu0
      %v4592 = vadd.f32 0.0, %v4591
      %v4593 = vpop.f32.mrb[0].mxu0
      %4594 = vmatprep.mubr.bf16.mxu0 0
      %4595 = vmatmul.mubr.bf16.gmra.mrb[0].mxu0 %v4497
      %v4596 = vpop.f32.mrb[0].mxu0
      %v4597 = vadd.f32 0.0, %v4596
      %v4598 = vpop.f32.mrb[0].mxu0
      %v4599 = vpop.f32.mrb[0].mxu0
      %v4600 = vadd.f32 0.0, %v4599
      %v4601 = vpop.f32.mrb[0].mxu0
      %4602 = vmatprep.mubr.bf16.mxu0 0
      %4603 = vmatmul.mubr.bf16.gmra.mrb[0].mxu0 %v4500
      %v4604 = vpop.f32.mrb[0].mxu0
      %v4605 = vadd.f32 0.0, %v4604
      %v4606 = vpop.f32.mrb[0].mxu0
      %v4607 = vpop.f32.mrb[0].mxu0
      %v4608 = vadd.f32 0.0, %v4607
      %v4609 = vpop.f32.mrb[0].mxu0
      %4610 = vmatprep.mubr.bf16.mxu0 0
      %4611 = vmatmul.mubr.bf16.gmra.mrb[0].mxu0 %v4503
      %v4612 = vpop.f32.mrb[0].mxu0
      %v4613 = vadd.f32 0.0, %v4612
      %v4614 = vpop.f32.mrb[0].mxu0
      %v4615 = vpop.f32.mrb[0].mxu0
      %v4616 = vadd.f32 0.0, %v4615
      %v4617 = vpop.f32.mrb[0].mxu0
      %4618 = vmatprep.mubr.bf16.mxu0 0
      %4619 = vmatmul.mubr.bf16.gmra.mrb[0].mxu0 %v4506
      %v4620 = vpop.f32.mrb[0].mxu0
      %v4621 = vadd.f32 0.0, %v4620
      %v4622 = vpop.f32.mrb[0].mxu0
      %v4623 = vpop.f32.mrb[0].mxu0
      %v4624 = vadd.f32 0.0, %v4623
      %v4625 = vpop.f32.mrb[0].mxu0
      %4626 = vmatprep.mubr.bf16.mxu0 0
      %4627 = vmatmul.mubr.bf16.gmra.mrb[0].mxu0 %v4509
      %v4628 = vpop.f32.mrb[0].mxu0
      %v4629 = vadd.f32 0.0, %v4628
      %v4630 = vpop.f32.mrb[0].mxu0
      %v4631 = vpop.f32.mrb[0].mxu0
      %v4632 = vadd.f32 0.0, %v4631
      %v4633 = vpop.f32.mrb[0].mxu0
      %4634 = vmatprep.mubr.bf16.mxu0 0
      %4635 = vmatmul.mubr.bf16.gmra.mrb[0].mxu0 %v4512
      %v4636 = vpop.f32.mrb[0].mxu0
      %v4637 = vadd.f32 0.0, %v4636
      %v4638 = vpop.f32.mrb[0].mxu0
      %v4639 = vpop.f32.mrb[0].mxu0
      %v4640 = vadd.f32 0.0, %v4639
      %v4641 = vpop.f32.mrb[0].mxu0
      %4642 = vmatprep.mubr.bf16.mxu0 0
      %4643 = vmatmul.mubr.bf16.gmra.mrb[0].mxu0 %v4515
      %v4644 = vpop.f32.mrb[0].mxu0
      %v4645 = vadd.f32 0.0, %v4644
      %v4646 = vpop.f32.mrb[0].mxu0
      %v4647 = vpop.f32.mrb[0].mxu0
      %v4648 = vadd.f32 0.0, %v4647
      %v4649 = vpop.f32.mrb[0].mxu0
      %4650 = vmatprep.mubr.bf16.mxu0 0
      %4651 = vmatmul.mubr.bf16.gmra.mrb[0].mxu0 %v4518
      %v4652 = vpop.f32.mrb[0].mxu0
      %v4653 = vadd.f32 0.0, %v4652
      %v4654 = vpop.f32.mrb[0].mxu0
      %v4655 = vpop.f32.mrb[0].mxu0
      %v4656 = vadd.f32 0.0, %v4655
      %v4657 = vpop.f32.mrb[0].mxu0
      %4658 = vmatprep.mubr.bf16.mxu0 0
      %4659 = vmatmul.mubr.bf16.gmra.mrb[0].mxu0 %v4521
      %v4660 = vpop.f32.mrb[0].mxu0
      %v4661 = vadd.f32 0.0, %v4660
      %v4662 = vpop.f32.mrb[0].mxu0
      %v4663 = vpop.f32.mrb[0].mxu0
      %v4664 = vadd.f32 0.0, %v4663
      %v4665 = vpop.f32.mrb[0].mxu0
      %4666 = vmatprep.mubr.bf16.mxu0 0
      %4667 = vmatmul.mubr.bf16.gmra.mrb[0].mxu0 %v4524
      %v4668 = vpop.f32.mrb[0].mxu0
      %v4669 = vadd.f32 0.0, %v4668
      %v4670 = vpop.f32.mrb[0].mxu0
      %v4671 = vpop.f32.mrb[0].mxu0
      %v4672 = vadd.f32 0.0, %v4671
      %v4673 = vpop.f32.mrb[0].mxu0
      %4674 = vmatprep.mubr.bf16.mxu0 0
      %4675 = vmatmul.mubr.bf16.gmra.mrb[0].mxu0 %v4527
      %v4676 = vpop.f32.mrb[0].mxu0
      %v4677 = vadd.f32 0.0, %v4676
      %v4678 = vpop.f32.mrb[0].mxu0
      %v4679 = vpop.f32.mrb[0].mxu0
      %v4680 = vadd.f32 0.0, %v4679
      %v4681 = vpop.f32.mrb[0].mxu0
      %4682 = vmatprep.mubr.bf16.mxu0 0
      %4683 = vmatmul.mubr.bf16.gmra.mrb[0].mxu0 %v4530
      %v4684 = vpop.f32.mrb[0].mxu0
      %v4685 = vadd.f32 0.0, %v4684
      %v4686 = vpop.f32.mrb[0].mxu0
      %v4687 = vpop.f32.mrb[0].mxu0
      %v4688 = vadd.f32 0.0, %v4687
      %v4689 = vpop.f32.mrb[0].mxu0
      %4690 = vmatprep.mubr.bf16.mxu0 0
      %4691 = vmatmul.mubr.bf16.gmra.mrb[0].mxu0 %v4533
      %v4692 = vpop.f32.mrb[0].mxu0
      %v4693 = vadd.f32 0.0, %v4692
      %v4694 = vpop.f32.mrb[0].mxu0
      %v4695 = vpop.f32.mrb[0].mxu0
      %v4696 = vadd.f32 0.0, %v4695
      %v4697 = vpop.f32.mrb[0].mxu0
      %4698 = vdwg.mxu0
      %v4699 = vadd.f32 %v4229, %v4573
      %v4700 = vadd.f32 %v4230, %v4576
      %v4701 = vadd.f32 %v4231, %v4581
      %v4702 = vadd.f32 %v4232, %v4584
      %v4703 = vadd.f32 %v4233, %v4589
      %v4704 = vadd.f32 %v4234, %v4592
      %v4705 = vadd.f32 %v4235, %v4597
      %v4706 = vadd.f32 %v4236, %v4600
      %v4707 = vadd.f32 %v4237, %v4605
      %v4708 = vadd.f32 %v4238, %v4608
      %v4709 = vadd.f32 %v4239, %v4613
      %v4710 = vadd.f32 %v4240, %v4616
      %v4711 = vadd.f32 %v4241, %v4621
      %v4712 = vadd.f32 %v4242, %v4624
      %v4713 = vadd.f32 %v4243, %v4629
      %v4714 = vadd.f32 %v4244, %v4632
      %v4715 = vadd.f32 %v4245, %v4637
      %v4716 = vadd.f32 %v4246, %v4640
      %v4717 = vadd.f32 %v4247, %v4645
      %v4718 = vadd.f32 %v4248, %v4648
      %v4719 = vadd.f32 %v4249, %v4653
      %v4720 = vadd.f32 %v4250, %v4656
      %v4721 = vadd.f32 %v4251, %v4661
      %v4722 = vadd.f32 %v4252, %v4664
      %v4723 = vadd.f32 %v4253, %v4669
      %v4724 = vadd.f32 %v4254, %v4672
      %v4725 = vadd.f32 %v4255, %v4677
      %v4726 = vadd.f32 %v4256, %v4680
      %v4727 = vadd.f32 %v4257, %v4685
      %v4728 = vadd.f32 %v4258, %v4688
      %v4729 = vadd.f32 %v4259, %v4693
      %v4730 = vadd.f32 %v4260, %v4696
      %v4731 = vld [vmem:[%s2] sm:$0x1]
      %v4733 = vlaneseq
      %v4734 = vshrl.u32 %v4733, 7
      %v4735 = vsub.s32 0, %v4734
      %v4736 = vrot.slane %v4731, %v4735
      %v4738 = vadd.f32 %v4699, %v4736
      %v4739 = vadd.f32 %v4700, %v4736
      %v4740 = vadd.f32 %v4701, %v4736
      %v4741 = vadd.f32 %v4702, %v4736
      %v4742 = vadd.f32 %v4703, %v4736
      %v4743 = vadd.f32 %v4704, %v4736
      %v4744 = vadd.f32 %v4705, %v4736
      %v4745 = vadd.f32 %v4706, %v4736
      %v4746 = vadd.f32 %v4707, %v4736
      %v4747 = vadd.f32 %v4708, %v4736
      %v4748 = vadd.f32 %v4709, %v4736
      %v4749 = vadd.f32 %v4710, %v4736
      %v4750 = vadd.f32 %v4711, %v4736
      %v4751 = vadd.f32 %v4712, %v4736
      %v4752 = vadd.f32 %v4713, %v4736
      %v4753 = vadd.f32 %v4714, %v4736
      %v4754 = vadd.f32 %v4715, %v4736
      %v4755 = vadd.f32 %v4716, %v4736
      %v4756 = vadd.f32 %v4717, %v4736
      %v4757 = vadd.f32 %v4718, %v4736
      %v4758 = vadd.f32 %v4719, %v4736
      %v4759 = vadd.f32 %v4720, %v4736
      %v4760 = vadd.f32 %v4721, %v4736
      %v4761 = vadd.f32 %v4722, %v4736
      %v4762 = vadd.f32 %v4723, %v4736
      %v4763 = vadd.f32 %v4724, %v4736
      %v4764 = vadd.f32 %v4725, %v4736
      %v4765 = vadd.f32 %v4726, %v4736
      %v4766 = vadd.f32 %v4727, %v4736
      %v4767 = vadd.f32 %v4728, %v4736
      %v4768 = vadd.f32 %v4729, %v4736
      %v4769 = vadd.f32 %v4730, %v4736
      %vm4770 = vcmask 261120
      %4771 = vst.msk [vmem:[%s170] sm:$0xff] %vm4770, %v4738
      %4772 = vst.msk [vmem:[%s170 + $0x8] sm:$0xff] %vm4770, %v4739
      %4773 = vst.msk [vmem:[%s170 + $0x10] sm:$0xff] %vm4770, %v4740
      %4774 = vst.msk [vmem:[%s170 + $0x18] sm:$0xff] %vm4770, %v4741
      %4775 = vst.msk [vmem:[%s170 + $0x20] sm:$0xff] %vm4770, %v4742
      %4776 = vst.msk [vmem:[%s170 + $0x28] sm:$0xff] %vm4770, %v4743
      %4777 = vst.msk [vmem:[%s170 + $0x30] sm:$0xff] %vm4770, %v4744
      %4778 = vst.msk [vmem:[%s170 + $0x38] sm:$0xff] %vm4770, %v4745
      %4779 = vst.msk [vmem:[%s170 + $0x40] sm:$0xff] %vm4770, %v4746
      %4780 = vst.msk [vmem:[%s170 + $0x48] sm:$0xff] %vm4770, %v4747
      %4781 = vst.msk [vmem:[%s170 + $0x50] sm:$0xff] %vm4770, %v4748
      %4782 = vst.msk [vmem:[%s170 + $0x58] sm:$0xff] %vm4770, %v4749
      %4783 = vst.msk [vmem:[%s170 + $0x60] sm:$0xff] %vm4770, %v4750
      %4784 = vst.msk [vmem:[%s170 + $0x68] sm:$0xff] %vm4770, %v4751
      %4785 = vst.msk [vmem:[%s170 + $0x70] sm:$0xff] %vm4770, %v4752
      %4786 = vst.msk [vmem:[%s170 + $0x78] sm:$0xff] %vm4770, %v4753
      %4787 = vst.msk [vmem:[%s170 + $0x80] sm:$0xff] %vm4770, %v4754
      %4788 = vst.msk [vmem:[%s170 + $0x88] sm:$0xff] %vm4770, %v4755
      %4789 = vst.msk [vmem:[%s170 + $0x90] sm:$0xff] %vm4770, %v4756
      %4790 = vst.msk [vmem:[%s170 + $0x98] sm:$0xff] %vm4770, %v4757
      %4791 = vst.msk [vmem:[%s170 + $0xa0] sm:$0xff] %vm4770, %v4758
      %4792 = vst.msk [vmem:[%s170 + $0xa8] sm:$0xff] %vm4770, %v4759
      %4793 = vst.msk [vmem:[%s170 + $0xb0] sm:$0xff] %vm4770, %v4760
      %4794 = vst.msk [vmem:[%s170 + $0xb8] sm:$0xff] %vm4770, %v4761
      %4795 = vst.msk [vmem:[%s170 + $0xc0] sm:$0xff] %vm4770, %v4762
      %4796 = vst.msk [vmem:[%s170 + $0xc8] sm:$0xff] %vm4770, %v4763
      %4797 = vst.msk [vmem:[%s170 + $0xd0] sm:$0xff] %vm4770, %v4764
      %4798 = vst.msk [vmem:[%s170 + $0xd8] sm:$0xff] %vm4770, %v4765
      %4799 = vst.msk [vmem:[%s170 + $0xe0] sm:$0xff] %vm4770, %v4766
      %4800 = vst.msk [vmem:[%s170 + $0xe8] sm:$0xff] %vm4770, %v4767
      %4801 = vst.msk [vmem:[%s170 + $0xf0] sm:$0xff] %vm4770, %v4768
      %4802 = vst.msk [vmem:[%s170 + $0xf8] sm:$0xff] %vm4770, %v4769
      %4835 = vrot.lane.b32.xlu0 %v4738, 96
      %v4836 = vpop.permute.xlu0 %4835
      %4837 = vrot.lane.b32.xlu0 %v4739, 96
      %v4838 = vpop.permute.xlu0 %4837
      %4839 = vrot.lane.b32.xlu0 %v4740, 96
      %v4840 = vpop.permute.xlu0 %4839
      %4841 = vrot.lane.b32.xlu0 %v4741, 96
      %v4842 = vpop.permute.xlu0 %4841
      %4843 = vrot.lane.b32.xlu0 %v4742, 96
      %v4844 = vpop.permute.xlu0 %4843
      %4845 = vrot.lane.b32.xlu0 %v4743, 96
      %v4846 = vpop.permute.xlu0 %4845
      %4847 = vrot.lane.b32.xlu0 %v4744, 96
      %v4848 = vpop.permute.xlu0 %4847
      %4849 = vrot.lane.b32.xlu0 %v4745, 96
      %v4850 = vpop.permute.xlu0 %4849
      %4851 = vrot.lane.b32.xlu0 %v4746, 96
      %v4852 = vpop.permute.xlu0 %4851
      %4853 = vrot.lane.b32.xlu0 %v4747, 96
      %v4854 = vpop.permute.xlu0 %4853
      %4855 = vrot.lane.b32.xlu0 %v4748, 96
      %v4856 = vpop.permute.xlu0 %4855
      %4857 = vrot.lane.b32.xlu0 %v4749, 96
      %v4858 = vpop.permute.xlu0 %4857
      %4859 = vrot.lane.b32.xlu0 %v4750, 96
      %v4860 = vpop.permute.xlu0 %4859
      %4861 = vrot.lane.b32.xlu0 %v4751, 96
      %v4862 = vpop.permute.xlu0 %4861
      %4863 = vrot.lane.b32.xlu0 %v4752, 96
      %v4864 = vpop.permute.xlu0 %4863
      %4865 = vrot.lane.b32.xlu0 %v4753, 96
      %v4866 = vpop.permute.xlu0 %4865
      %4867 = vrot.lane.b32.xlu0 %v4754, 96
      %v4868 = vpop.permute.xlu0 %4867
      %4869 = vrot.lane.b32.xlu0 %v4755, 96
      %v4870 = vpop.permute.xlu0 %4869
      %4871 = vrot.lane.b32.xlu0 %v4756, 96
      %v4872 = vpop.permute.xlu0 %4871
      %4873 = vrot.lane.b32.xlu0 %v4757, 96
      %v4874 = vpop.permute.xlu0 %4873
      %4875 = vrot.lane.b32.xlu0 %v4758, 96
      %v4876 = vpop.permute.xlu0 %4875
      %4877 = vrot.lane.b32.xlu0 %v4759, 96
      %v4878 = vpop.permute.xlu0 %4877
      %4879 = vrot.lane.b32.xlu0 %v4760, 96
      %v4880 = vpop.permute.xlu0 %4879
      %4881 = vrot.lane.b32.xlu0 %v4761, 96
      %v4882 = vpop.permute.xlu0 %4881
      %4883 = vrot.lane.b32.xlu0 %v4762, 96
      %v4884 = vpop.permute.xlu0 %4883
      %4885 = vrot.lane.b32.xlu0 %v4763, 96
      %v4886 = vpop.permute.xlu0 %4885
      %4887 = vrot.lane.b32.xlu0 %v4764, 96
      %v4888 = vpop.permute.xlu0 %4887
      %4889 = vrot.lane.b32.xlu0 %v4765, 96
      %v4890 = vpop.permute.xlu0 %4889
      %4891 = vrot.lane.b32.xlu0 %v4766, 96
      %v4892 = vpop.permute.xlu0 %4891
      %4893 = vrot.lane.b32.xlu0 %v4767, 96
      %v4894 = vpop.permute.xlu0 %4893
      %4895 = vrot.lane.b32.xlu0 %v4768, 96
      %v4896 = vpop.permute.xlu0 %4895
      %4897 = vrot.lane.b32.xlu0 %v4769, 96
      %v4898 = vpop.permute.xlu0 %4897
      %s4931 = scalar_lea.vmem %s170, 256
      %4932 = vst.msk [vmem:[%s4931] sm:$0xff] %vm4770, %v4836
      %4933 = vst.msk [vmem:[%s4931 + $0x8] sm:$0xff] %vm4770, %v4838
      %4934 = vst.msk [vmem:[%s4931 + $0x10] sm:$0xff] %vm4770, %v4840
      %4935 = vst.msk [vmem:[%s4931 + $0x18] sm:$0xff] %vm4770, %v4842
      %4936 = vst.msk [vmem:[%s4931 + $0x20] sm:$0xff] %vm4770, %v4844
      %4937 = vst.msk [vmem:[%s4931 + $0x28] sm:$0xff] %vm4770, %v4846
      %4938 = vst.msk [vmem:[%s4931 + $0x30] sm:$0xff] %vm4770, %v4848
      %4939 = vst.msk [vmem:[%s4931 + $0x38] sm:$0xff] %vm4770, %v4850
      %4940 = vst.msk [vmem:[%s4931 + $0x40] sm:$0xff] %vm4770, %v4852
      %4941 = vst.msk [vmem:[%s4931 + $0x48] sm:$0xff] %vm4770, %v4854
      %4942 = vst.msk [vmem:[%s4931 + $0x50] sm:$0xff] %vm4770, %v4856
      %4943 = vst.msk [vmem:[%s4931 + $0x58] sm:$0xff] %vm4770, %v4858
      %4944 = vst.msk [vmem:[%s4931 + $0x60] sm:$0xff] %vm4770, %v4860
      %4945 = vst.msk [vmem:[%s4931 + $0x68] sm:$0xff] %vm4770, %v4862
      %4946 = vst.msk [vmem:[%s4931 + $0x70] sm:$0xff] %vm4770, %v4864
      %4947 = vst.msk [vmem:[%s4931 + $0x78] sm:$0xff] %vm4770, %v4866
      %4948 = vst.msk [vmem:[%s4931 + $0x80] sm:$0xff] %vm4770, %v4868
      %4949 = vst.msk [vmem:[%s4931 + $0x88] sm:$0xff] %vm4770, %v4870
      %4950 = vst.msk [vmem:[%s4931 + $0x90] sm:$0xff] %vm4770, %v4872
      %4951 = vst.msk [vmem:[%s4931 + $0x98] sm:$0xff] %vm4770, %v4874
      %4952 = vst.msk [vmem:[%s4931 + $0xa0] sm:$0xff] %vm4770, %v4876
      %4953 = vst.msk [vmem:[%s4931 + $0xa8] sm:$0xff] %vm4770, %v4878
      %4954 = vst.msk [vmem:[%s4931 + $0xb0] sm:$0xff] %vm4770, %v4880
      %4955 = vst.msk [vmem:[%s4931 + $0xb8] sm:$0xff] %vm4770, %v4882
      %4956 = vst.msk [vmem:[%s4931 + $0xc0] sm:$0xff] %vm4770, %v4884
      %4957 = vst.msk [vmem:[%s4931 + $0xc8] sm:$0xff] %vm4770, %v4886
      %4958 = vst.msk [vmem:[%s4931 + $0xd0] sm:$0xff] %vm4770, %v4888
      %4959 = vst.msk [vmem:[%s4931 + $0xd8] sm:$0xff] %vm4770, %v4890
      %4960 = vst.msk [vmem:[%s4931 + $0xe0] sm:$0xff] %vm4770, %v4892
      %4961 = vst.msk [vmem:[%s4931 + $0xe8] sm:$0xff] %vm4770, %v4894
      %4962 = vst.msk [vmem:[%s4931 + $0xf0] sm:$0xff] %vm4770, %v4896
      %4963 = vst.msk [vmem:[%s4931 + $0xf8] sm:$0xff] %vm4770, %v4898
      %4964 = vrot.lane.b32.xlu0 %v4738, 64
      %v4965 = vpop.permute.xlu0 %4964
      %4966 = vrot.lane.b32.xlu0 %v4739, 64
      %v4967 = vpop.permute.xlu0 %4966
      %4968 = vrot.lane.b32.xlu0 %v4740, 64
      %v4969 = vpop.permute.xlu0 %4968
      %4970 = vrot.lane.b32.xlu0 %v4741, 64
      %v4971 = vpop.permute.xlu0 %4970
      %4972 = vrot.lane.b32.xlu0 %v4742, 64
      %v4973 = vpop.permute.xlu0 %4972
      %4974 = vrot.lane.b32.xlu0 %v4743, 64
      %v4975 = vpop.permute.xlu0 %4974
      %4976 = vrot.lane.b32.xlu0 %v4744, 64
      %v4977 = vpop.permute.xlu0 %4976
      %4978 = vrot.lane.b32.xlu0 %v4745, 64
      %v4979 = vpop.permute.xlu0 %4978
      %4980 = vrot.lane.b32.xlu0 %v4746, 64
      %v4981 = vpop.permute.xlu0 %4980
      %4982 = vrot.lane.b32.xlu0 %v4747, 64
      %v4983 = vpop.permute.xlu0 %4982
      %4984 = vrot.lane.b32.xlu0 %v4748, 64
      %v4985 = vpop.permute.xlu0 %4984
      %4986 = vrot.lane.b32.xlu0 %v4749, 64
      %v4987 = vpop.permute.xlu0 %4986
      %4988 = vrot.lane.b32.xlu0 %v4750, 64
      %v4989 = vpop.permute.xlu0 %4988
      %4990 = vrot.lane.b32.xlu0 %v4751, 64
      %v4991 = vpop.permute.xlu0 %4990
      %4992 = vrot.lane.b32.xlu0 %v4752, 64
      %v4993 = vpop.permute.xlu0 %4992
      %4994 = vrot.lane.b32.xlu0 %v4753, 64
      %v4995 = vpop.permute.xlu0 %4994
      %4996 = vrot.lane.b32.xlu0 %v4754, 64
      %v4997 = vpop.permute.xlu0 %4996
      %4998 = vrot.lane.b32.xlu0 %v4755, 64
      %v4999 = vpop.permute.xlu0 %4998
      %5000 = vrot.lane.b32.xlu0 %v4756, 64
      %v5001 = vpop.permute.xlu0 %5000
      %5002 = vrot.lane.b32.xlu0 %v4757, 64
      %v5003 = vpop.permute.xlu0 %5002
      %5004 = vrot.lane.b32.xlu0 %v4758, 64
      %v5005 = vpop.permute.xlu0 %5004
      %5006 = vrot.lane.b32.xlu0 %v4759, 64
      %v5007 = vpop.permute.xlu0 %5006
      %5008 = vrot.lane.b32.xlu0 %v4760, 64
      %v5009 = vpop.permute.xlu0 %5008
      %5010 = vrot.lane.b32.xlu0 %v4761, 64
      %v5011 = vpop.permute.xlu0 %5010
      %5012 = vrot.lane.b32.xlu0 %v4762, 64
      %v5013 = vpop.permute.xlu0 %5012
      %5014 = vrot.lane.b32.xlu0 %v4763, 64
      %v5015 = vpop.permute.xlu0 %5014
      %5016 = vrot.lane.b32.xlu0 %v4764, 64
      %v5017 = vpop.permute.xlu0 %5016
      %5018 = vrot.lane.b32.xlu0 %v4765, 64
      %v5019 = vpop.permute.xlu0 %5018
      %5020 = vrot.lane.b32.xlu0 %v4766, 64
      %v5021 = vpop.permute.xlu0 %5020
      %5022 = vrot.lane.b32.xlu0 %v4767, 64
      %v5023 = vpop.permute.xlu0 %5022
      %5024 = vrot.lane.b32.xlu0 %v4768, 64
      %v5025 = vpop.permute.xlu0 %5024
      %5026 = vrot.lane.b32.xlu0 %v4769, 64
      %v5027 = vpop.permute.xlu0 %5026
      %s5060 = scalar_lea.vmem %s170, 512
      %5061 = vst.msk [vmem:[%s5060] sm:$0xff] %vm4770, %v4965
      %5062 = vst.msk [vmem:[%s5060 + $0x8] sm:$0xff] %vm4770, %v4967
      %5063 = vst.msk [vmem:[%s5060 + $0x10] sm:$0xff] %vm4770, %v4969
      %5064 = vst.msk [vmem:[%s5060 + $0x18] sm:$0xff] %vm4770, %v4971
      %5065 = vst.msk [vmem:[%s5060 + $0x20] sm:$0xff] %vm4770, %v4973
      %5066 = vst.msk [vmem:[%s5060 + $0x28] sm:$0xff] %vm4770, %v4975
      %5067 = vst.msk [vmem:[%s5060 + $0x30] sm:$0xff] %vm4770, %v4977
      %5068 = vst.msk [vmem:[%s5060 + $0x38] sm:$0xff] %vm4770, %v4979
      %5069 = vst.msk [vmem:[%s5060 + $0x40] sm:$0xff] %vm4770, %v4981
      %5070 = vst.msk [vmem:[%s5060 + $0x48] sm:$0xff] %vm4770, %v4983
      %5071 = vst.msk [vmem:[%s5060 + $0x50] sm:$0xff] %vm4770, %v4985
      %5072 = vst.msk [vmem:[%s5060 + $0x58] sm:$0xff] %vm4770, %v4987
      %5073 = vst.msk [vmem:[%s5060 + $0x60] sm:$0xff] %vm4770, %v4989
      %5074 = vst.msk [vmem:[%s5060 + $0x68] sm:$0xff] %vm4770, %v4991
      %5075 = vst.msk [vmem:[%s5060 + $0x70] sm:$0xff] %vm4770, %v4993
      %5076 = vst.msk [vmem:[%s5060 + $0x78] sm:$0xff] %vm4770, %v4995
      %5077 = vst.msk [vmem:[%s5060 + $0x80] sm:$0xff] %vm4770, %v4997
      %5078 = vst.msk [vmem:[%s5060 + $0x88] sm:$0xff] %vm4770, %v4999
      %5079 = vst.msk [vmem:[%s5060 + $0x90] sm:$0xff] %vm4770, %v5001
      %5080 = vst.msk [vmem:[%s5060 + $0x98] sm:$0xff] %vm4770, %v5003
      %5081 = vst.msk [vmem:[%s5060 + $0xa0] sm:$0xff] %vm4770, %v5005
      %5082 = vst.msk [vmem:[%s5060 + $0xa8] sm:$0xff] %vm4770, %v5007
      %5083 = vst.msk [vmem:[%s5060 + $0xb0] sm:$0xff] %vm4770, %v5009
      %5084 = vst.msk [vmem:[%s5060 + $0xb8] sm:$0xff] %vm4770, %v5011
      %5085 = vst.msk [vmem:[%s5060 + $0xc0] sm:$0xff] %vm4770, %v5013
      %5086 = vst.msk [vmem:[%s5060 + $0xc8] sm:$0xff] %vm4770, %v5015
      %5087 = vst.msk [vmem:[%s5060 + $0xd0] sm:$0xff] %vm4770, %v5017
      %5088 = vst.msk [vmem:[%s5060 + $0xd8] sm:$0xff] %vm4770, %v5019
      %5089 = vst.msk [vmem:[%s5060 + $0xe0] sm:$0xff] %vm4770, %v5021
      %5090 = vst.msk [vmem:[%s5060 + $0xe8] sm:$0xff] %vm4770, %v5023
      %5091 = vst.msk [vmem:[%s5060 + $0xf0] sm:$0xff] %vm4770, %v5025
      %5092 = vst.msk [vmem:[%s5060 + $0xf8] sm:$0xff] %vm4770, %v5027
      %p5093 = scmp.lt.s32.totalorder %s14, 1
      %s5094 = scalar_select %p5093, %s14, 1
      %s5095 = smul.addr %s5094, 96
      %s5096 = smul.addr %s5095, 8
      %s5097 = scalar_lea.vmem %s3, %s5096
      // Predicated region
      $region33: #{patch_embed_triplane_forward.1} parent=31 // pred_check
        %p5098 = pneg %p100
      $region34: #{patch_embed_triplane_forward.1} parent=31 // pred_check_branch
        %5100 = sbr.rel (%p5098) target = $region36
      $region35: #{patch_embed_triplane_forward.1} parent=31 // pred_region
        _
      $region36: #{patch_embed_triplane_forward.1} parent=31 // pred_fallthru
        _
    $region32: #{patch_embed_triplane_forward.1} parent=5 // pred_fallthru
      _
    %p5101 = scmp.le.s32.totalorder 2, %s9
    // Predicated region
    $region37: #{patch_embed_triplane_forward.1} parent=5 // pred_check
      %p5102 = pneg %p5101
    $region38: #{patch_embed_triplane_forward.1} parent=5 // pred_check_branch
      %5104 = sbr.rel (%p5102) target = $region40
    $region39: #{patch_embed_triplane_forward.1} parent=5 // pred_region
      %s5105 = ssub.s32 %s9, 2
      // Predicated region
      $region41: #{patch_embed_triplane_forward.1} parent=39 // pred_check
        %p5106 = pneg %p106
      $region42: #{patch_embed_triplane_forward.1} parent=39 // pred_check_branch
        %5108 = sbr.rel (%p5106) target = $region44
      $region43: #{patch_embed_triplane_forward.1} parent=39 // pred_region
        %p5109 = scmp.lt.s32.totalorder %s15, 1
        %s5110 = scalar_select %p5109, %s15, 1
        %s5111 = smul.addr %s5110, 96
        %s5112 = smul.addr %s5111, 8
        %s5113 = scalar_lea.vmem %s3, %s5112
      $region44: #{patch_embed_triplane_forward.1} parent=39 // pred_fallthru
        _
    $region40: #{patch_embed_triplane_forward.1} parent=5 // pred_fallthru
      _
  $region6: #{patch_embed_triplane_forward.1} parent=0 // loop_footer
    %s13 = sadd.s32 1, %s9
  $region7: #{patch_embed_triplane_forward.1} parent=0 // loop_footer_branch
    %8 = sbr.rel target = $region3
  $region8: #{patch_embed_triplane_forward.1} parent=0 // loop_exit
    _

</llo_original>
